<compile_context>
chip_gen: v7x
topology: tpu7x:2x2x1
jax: 0.10.0
libtpu: 0.0.40
codegen_flags: <defaults>
</compile_context>

<pallas_src>
import jax
import jax.numpy as jnp
from jax.experimental import pallas as pl
from jax.experimental.pallas import tpu as pltpu


def _round_up(n, m):
    return ((n + m - 1) // m) * m


def _pad_to(a, shape):
    return jnp.pad(a, [(0, s - d) for d, s in zip(a.shape, shape)])


def _toeplitz(w, W):
    """Per-channel block-Toeplitz matrix of a 1-D valid conv.

    w: (O, C, K) conv weight.  Returns T of shape (C, W, O*Wout) such that
      y[b, o*Wout + t] = sum_c sum_p x[b, c, p] * T[c, p, o*Wout + t]
                       = sum_{c,k} x[b, c, t + k] * w[o, c, k].
    """
    O, C, K = w.shape
    Wout = W - K + 1
    p = jnp.arange(W)[:, None]            # input position
    t = jnp.arange(Wout)[None, :]         # output position
    k = p - t                             # tap index (W, Wout)
    valid = (k >= 0) & (k < K)
    g = w[:, :, jnp.clip(k, 0, K - 1)]    # (O, C, W, Wout)
    g = jnp.where(valid[None, None], g, 0.0)
    return jnp.transpose(g, (1, 2, 0, 3)).reshape(C, W, O * Wout)


def encoder_kernel(x_ref, t1_ref, b1_ref, t2_ref, b2_ref, t3_ref, b3_ref, o_ref):
    # x_ref: (Cin, TH, W) f32 ; t1_ref: (Cin, W, D1) bf16
    cin = x_ref.shape[0]
    # conv1: sum of per-channel MXU matmuls, f32 accumulation.  Casting x to
    # bf16 here (instead of in an XLA prep pass) rides in idle VPU slots.
    h1 = jnp.dot(x_ref[0].astype(jnp.bfloat16), t1_ref[0],
                 preferred_element_type=jnp.float32)
    for c in range(1, cin):
        h1 = h1 + jnp.dot(x_ref[c].astype(jnp.bfloat16), t1_ref[c],
                          preferred_element_type=jnp.float32)
    h1 = jnp.maximum(h1 + b1_ref[...], 0.0).astype(jnp.bfloat16)        # (TH, D1)
    h2 = jnp.dot(h1, t2_ref[...], preferred_element_type=jnp.float32)
    h2 = jnp.maximum(h2 + b2_ref[...], 0.0).astype(jnp.bfloat16)        # (TH, D2)
    h3 = jnp.dot(h2, t3_ref[...], preferred_element_type=jnp.float32)
    o_ref[...] = h3 + b3_ref[...]                                       # no ReLU


def _pick_tile_h(H, N):
    """Tile height: multiple of 8 dividing H; aim for >=4 grid steps (v7x has
    2 TensorCores and we want >=2 steps/core for DMA/compute overlap)."""
    if H % 8 != 0:
        return H                       # full-H blocks are always legal
    cands = [t for t in range(8, min(H, 256) + 1, 8) if H % t == 0]
    if not cands:
        return H
    for t in sorted(cands, reverse=True):
        if N * (H // t) >= 4:
            return t
    return cands[0]


def encoder_forward(x_nchw, params):
    """x_nchw: (N, Cin, H, W) float32 -> (N, 1, H, W - 101) float32."""
    w1, b1, w2, b2, w3, b3 = params
    N, Cin, H, W = x_nchw.shape
    O1, O2, O3 = w1.shape[0], w2.shape[0], w3.shape[0]
    K1, K2, K3 = w1.shape[-1], w2.shape[-1], w3.shape[-1]
    W1 = W - K1 + 1
    W2 = W1 - K2 + 1
    W3 = W2 - K3 + 1
    assert W3 > 0, "input width too small for the three valid convolutions"

    # Lane-padded feature widths.  128 is enough: pass-neutral on v6e/v7x,
    # saves ~12% MXU passes / DMA on v5e compared with 256-padding.
    D1 = _round_up(O1 * W1, 128)
    D2 = _round_up(O2 * W2, 128)
    D3 = _round_up(O3 * W3, 128)

    # Static block-Toeplitz weights (bf16) and repeated biases (f32), padded
    # with zeros so the padded activation columns stay exactly zero.
    t1 = _pad_to(_toeplitz(w1[:, :, 0, :], W), (Cin, W, D1)).astype(jnp.bfloat16)
    t2 = _pad_to(_toeplitz(w2[:, :, 0, :], W1).reshape(O1 * W1, O2 * W2),
                 (D1, D2)).astype(jnp.bfloat16)
    t3 = _pad_to(_toeplitz(w3[:, :, 0, :], W2).reshape(O2 * W2, O3 * W3),
                 (D2, D3)).astype(jnp.bfloat16)
    bb1 = _pad_to(jnp.repeat(b1, W1)[None, :], (1, D1)).astype(jnp.float32)
    bb2 = _pad_to(jnp.repeat(b2, W2)[None, :], (1, D2)).astype(jnp.float32)
    bb3 = _pad_to(jnp.repeat(b3, W3)[None, :], (1, D3)).astype(jnp.float32)

    TH = _pick_tile_h(H, N)
    grid = (N, H // TH)

    # Grid-invariant operands: single VMEM copy, no double-buffering.
    const = pl.Buffered(1)
    in_specs = [
        pl.BlockSpec((None, Cin, TH, W), lambda n, h: (n, 0, h, 0)),       # x tile
        pl.BlockSpec((Cin, W, D1), lambda n, h: (0, 0, 0), pipeline_mode=const),
        pl.BlockSpec((1, D1), lambda n, h: (0, 0), pipeline_mode=const),
        pl.BlockSpec((D1, D2), lambda n, h: (0, 0), pipeline_mode=const),
        pl.BlockSpec((1, D2), lambda n, h: (0, 0), pipeline_mode=const),
        pl.BlockSpec((D2, D3), lambda n, h: (0, 0), pipeline_mode=const),
        pl.BlockSpec((1, D3), lambda n, h: (0, 0), pipeline_mode=const),
    ]

    # Derive the VMEM limit from actual buffer sizes (with generous margin),
    # clamped to 48 MiB so the same value ports to v7x's 64 MiB VMEM.
    weight_bytes = 2 * (Cin * W * D1 + D1 * D2 + D2 * D3) + 4 * (D1 + D2 + D3)
    x_bytes = Cin * TH * W * 4
    out_bytes = TH * D3 * 4
    tmp_bytes = TH * (D1 + D2 + D3) * 6          # f32 + bf16 copies of h1/h2/h3
    est = 2 * weight_bytes + 2 * x_bytes + 2 * out_bytes + 2 * tmp_bytes + (8 << 20)
    vmem_limit = int(min(48 << 20, est))

    out = pl.pallas_call(
        encoder_kernel,
        out_shape=jax.ShapeDtypeStruct((N, H, D3), jnp.float32),
        grid_spec=pltpu.PrefetchScalarGridSpec(
            num_scalar_prefetch=0,
            grid=grid,
            in_specs=in_specs,
            out_specs=pl.BlockSpec((None, TH, D3), lambda n, h: (n, h, 0)),
        ),
        compiler_params=pltpu.CompilerParams(
            dimension_semantics=("parallel", "parallel"),
            vmem_limit_bytes=vmem_limit,
        ),
    )(x_nchw, t1, bb1, t2, bb2, t3, bb3)

    # Strip lane padding and restore NCHW: (N, O3, H, W3).  The output is
    # kept f32 to match the PyTorch module (bf16 writeback would halve
    # writeback bytes if a downstream consumer tolerates it).
    out = out[:, :, :O3 * W3].reshape(N, H, O3, W3)
    return jnp.transpose(out, (0, 2, 1, 3))


def encoder_reference(x_nchw, params):
    """Pure-JAX f32 NCHW reference (mirrors the PyTorch module exactly)."""
    w1, b1, w2, b2, w3, b3 = params

    def conv(x, w, b):
        y = jax.lax.conv_general_dilated(
            x, w, window_strides=(1, 1), padding="VALID",
            dimension_numbers=("NCHW", "OIHW", "NCHW"))
        return y + b[None, :, None, None]

    h = jax.nn.relu(conv(x_nchw, w1, b1))
    h = jax.nn.relu(conv(h, w2, b2))
    return conv(h, w3, b3)


def make_params(key, in_channels):
    ks = jax.random.split(key, 6)
    w1 = jax.random.normal(ks[0], (8, in_channels, 1, 32), jnp.float32) * 0.05
    b1 = jax.random.normal(ks[1], (8,), jnp.float32) * 0.05
    w2 = jax.random.normal(ks[2], (4, 8, 1, 64), jnp.float32) * 0.05
    b2 = jax.random.normal(ks[3], (4,), jnp.float32) * 0.05
    w3 = jax.random.normal(ks[4], (1, 4, 1, 8), jnp.float32) * 0.05
    b3 = jax.random.normal(ks[5], (1,), jnp.float32) * 0.05
    return (w1, b1, w2, b2, w3, b3)


if __name__ == "__main__":
    key = jax.random.PRNGKey(0)
    k_x, k_p = jax.random.split(key)

    # Small but valid shapes: W must be >= 32 + 64 + 8 - 2 = 102 for the three
    # "valid" convolutions to produce a non-empty output.
    N, Cin, H, W = 2, 4, 4, 128
    x = jax.random.normal(k_x, (N, Cin, H, W), jnp.float32)
    params = make_params(k_p, Cin)

    out = jax.block_until_ready(encoder_forward(x, params))
    ref = jax.block_until_ready(encoder_reference(x, params))

    assert out.shape == (N, 1, H, W - 32 - 64 - 8 + 3), out.shape
    # bf16 inputs/weights on the MXU (f32 accumulation) -> slightly looser tol.
    assert jnp.allclose(out, ref, atol=3e-2, rtol=3e-2), (
        float(jnp.max(jnp.abs(out - ref))))

    print("KERNEL_OK")
</pallas_src>

<mosaic_0001>
module attributes {stable_mosaic.version = 11 : i64} {
  func.func @encoder_kernel(%arg0: i32, %arg1: i32, %arg2: memref<1x4x4x128xf32, #tpu.memory_space<vmem>>, %arg3: memref<4x128x896xbf16, #tpu.memory_space<vmem>>, %arg4: memref<1x896xf32, #tpu.memory_space<vmem>>, %arg5: memref<896x256xbf16, #tpu.memory_space<vmem>>, %arg6: memref<1x256xf32, #tpu.memory_space<vmem>>, %arg7: memref<256x128xbf16, #tpu.memory_space<vmem>>, %arg8: memref<1x128xf32, #tpu.memory_space<vmem>>, %arg9: memref<1x4x128xf32, #tpu.memory_space<vmem>>) attributes {dimension_semantics = [#tpu.dimension_semantics<parallel>, #tpu.dimension_semantics<parallel>], iteration_bounds = array<i64: 2, 1>, scalar_prefetch = 0 : i64, scratch_operands = 0 : i64, tpu.core_type = #tpu.core_type<tc>, window_params = [{transform_indices = @transform_0, window_bounds = array<i64: 1, 4, 4, 128>}, {pipeline_mode = #tpu.pipeline_mode<synchronous>, transform_indices = @transform_1, window_bounds = array<i64: 4, 128, 896>}, {pipeline_mode = #tpu.pipeline_mode<synchronous>, transform_indices = @transform_2, window_bounds = array<i64: 1, 896>}, {pipeline_mode = #tpu.pipeline_mode<synchronous>, transform_indices = @transform_3, window_bounds = array<i64: 896, 256>}, {pipeline_mode = #tpu.pipeline_mode<synchronous>, transform_indices = @transform_4, window_bounds = array<i64: 1, 256>}, {pipeline_mode = #tpu.pipeline_mode<synchronous>, transform_indices = @transform_5, window_bounds = array<i64: 256, 128>}, {pipeline_mode = #tpu.pipeline_mode<synchronous>, transform_indices = @transform_6, window_bounds = array<i64: 1, 128>}, {transform_indices = @transform_7, window_bounds = array<i64: 1, 4, 128>}]} {
    %c0 = arith.constant 0 : index
    %c0_0 = arith.constant 0 : index
    %c0_1 = arith.constant 0 : index
    %c0_2 = arith.constant 0 : index
    %0 = vector.load %arg2[%c0, %c0_0, %c0_1, %c0_2] : memref<1x4x4x128xf32, #tpu.memory_space<vmem>>, vector<1x1x4x128xf32>
    %1 = vector.shape_cast %0 : vector<1x1x4x128xf32> to vector<4x128xf32>
    %2 = arith.truncf %1 : vector<4x128xf32> to vector<4x128xbf16>
    %c0_3 = arith.constant 0 : index
    %c0_4 = arith.constant 0 : index
    %c0_5 = arith.constant 0 : index
    %3 = vector.load %arg3[%c0_3, %c0_4, %c0_5] : memref<4x128x896xbf16, #tpu.memory_space<vmem>>, vector<1x128x896xbf16>
    %4 = vector.shape_cast %3 : vector<1x128x896xbf16> to vector<128x896xbf16>
    %cst = arith.constant dense<0.000000e+00> : vector<4x896xf32>
    %5 = tpu.matmul %2, %4, %cst {dimension_numbers = #tpu.dot_dimension_numbers<[1], [0], [0], [1], [0, 0, 1, 1], [], []>} : vector<4x128xbf16>, vector<128x896xbf16>, vector<4x896xf32> -> vector<4x896xf32>
    %c0_6 = arith.constant 0 : index
    %c1 = arith.constant 1 : index
    %c0_7 = arith.constant 0 : index
    %c0_8 = arith.constant 0 : index
    %6 = vector.load %arg2[%c0_6, %c1, %c0_7, %c0_8] : memref<1x4x4x128xf32, #tpu.memory_space<vmem>>, vector<1x1x4x128xf32>
    %7 = vector.shape_cast %6 : vector<1x1x4x128xf32> to vector<4x128xf32>
    %8 = arith.truncf %7 : vector<4x128xf32> to vector<4x128xbf16>
    %c1_9 = arith.constant 1 : index
    %c0_10 = arith.constant 0 : index
    %c0_11 = arith.constant 0 : index
    %9 = vector.load %arg3[%c1_9, %c0_10, %c0_11] : memref<4x128x896xbf16, #tpu.memory_space<vmem>>, vector<1x128x896xbf16>
    %10 = vector.shape_cast %9 : vector<1x128x896xbf16> to vector<128x896xbf16>
    %cst_12 = arith.constant dense<0.000000e+00> : vector<4x896xf32>
    %11 = tpu.matmul %8, %10, %cst_12 {dimension_numbers = #tpu.dot_dimension_numbers<[1], [0], [0], [1], [0, 0, 1, 1], [], []>} : vector<4x128xbf16>, vector<128x896xbf16>, vector<4x896xf32> -> vector<4x896xf32>
    %12 = arith.addf %5, %11 : vector<4x896xf32>
    %c0_13 = arith.constant 0 : index
    %c2 = arith.constant 2 : index
    %c0_14 = arith.constant 0 : index
    %c0_15 = arith.constant 0 : index
    %13 = vector.load %arg2[%c0_13, %c2, %c0_14, %c0_15] : memref<1x4x4x128xf32, #tpu.memory_space<vmem>>, vector<1x1x4x128xf32>
    %14 = vector.shape_cast %13 : vector<1x1x4x128xf32> to vector<4x128xf32>
    %15 = arith.truncf %14 : vector<4x128xf32> to vector<4x128xbf16>
    %c2_16 = arith.constant 2 : index
    %c0_17 = arith.constant 0 : index
    %c0_18 = arith.constant 0 : index
    %16 = vector.load %arg3[%c2_16, %c0_17, %c0_18] : memref<4x128x896xbf16, #tpu.memory_space<vmem>>, vector<1x128x896xbf16>
    %17 = vector.shape_cast %16 : vector<1x128x896xbf16> to vector<128x896xbf16>
    %cst_19 = arith.constant dense<0.000000e+00> : vector<4x896xf32>
    %18 = tpu.matmul %15, %17, %cst_19 {dimension_numbers = #tpu.dot_dimension_numbers<[1], [0], [0], [1], [0, 0, 1, 1], [], []>} : vector<4x128xbf16>, vector<128x896xbf16>, vector<4x896xf32> -> vector<4x896xf32>
    %19 = arith.addf %12, %18 : vector<4x896xf32>
    %c0_20 = arith.constant 0 : index
    %c3 = arith.constant 3 : index
    %c0_21 = arith.constant 0 : index
    %c0_22 = arith.constant 0 : index
    %20 = vector.load %arg2[%c0_20, %c3, %c0_21, %c0_22] : memref<1x4x4x128xf32, #tpu.memory_space<vmem>>, vector<1x1x4x128xf32>
    %21 = vector.shape_cast %20 : vector<1x1x4x128xf32> to vector<4x128xf32>
    %22 = arith.truncf %21 : vector<4x128xf32> to vector<4x128xbf16>
    %c3_23 = arith.constant 3 : index
    %c0_24 = arith.constant 0 : index
    %c0_25 = arith.constant 0 : index
    %23 = vector.load %arg3[%c3_23, %c0_24, %c0_25] : memref<4x128x896xbf16, #tpu.memory_space<vmem>>, vector<1x128x896xbf16>
    %24 = vector.shape_cast %23 : vector<1x128x896xbf16> to vector<128x896xbf16>
    %cst_26 = arith.constant dense<0.000000e+00> : vector<4x896xf32>
    %25 = tpu.matmul %22, %24, %cst_26 {dimension_numbers = #tpu.dot_dimension_numbers<[1], [0], [0], [1], [0, 0, 1, 1], [], []>} : vector<4x128xbf16>, vector<128x896xbf16>, vector<4x896xf32> -> vector<4x896xf32>
    %26 = arith.addf %19, %25 : vector<4x896xf32>
    %c0_27 = arith.constant 0 : index
    %c0_28 = arith.constant 0 : index
    %27 = vector.load %arg4[%c0_27, %c0_28] : memref<1x896xf32, #tpu.memory_space<vmem>>, vector<1x896xf32>
    %28 = vector.broadcast %27 : vector<1x896xf32> to vector<4x896xf32>
    %29 = arith.addf %26, %28 : vector<4x896xf32>
    %cst_29 = arith.constant 0.000000e+00 : f32
    %30 = vector.broadcast %cst_29 : f32 to vector<4x896xf32>
    %31 = arith.maximumf %29, %30 : vector<4x896xf32>
    %32 = arith.truncf %31 : vector<4x896xf32> to vector<4x896xbf16>
    %c0_30 = arith.constant 0 : index
    %c0_31 = arith.constant 0 : index
    %33 = vector.load %arg5[%c0_30, %c0_31] : memref<896x256xbf16, #tpu.memory_space<vmem>>, vector<896x256xbf16>
    %cst_32 = arith.constant dense<0.000000e+00> : vector<4x256xf32>
    %34 = tpu.matmul %32, %33, %cst_32 {dimension_numbers = #tpu.dot_dimension_numbers<[1], [0], [0], [1], [0, 0, 1, 1], [], []>} : vector<4x896xbf16>, vector<896x256xbf16>, vector<4x256xf32> -> vector<4x256xf32>
    %c0_33 = arith.constant 0 : index
    %c0_34 = arith.constant 0 : index
    %35 = vector.load %arg6[%c0_33, %c0_34] : memref<1x256xf32, #tpu.memory_space<vmem>>, vector<1x256xf32>
    %36 = vector.broadcast %35 : vector<1x256xf32> to vector<4x256xf32>
    %37 = arith.addf %34, %36 : vector<4x256xf32>
    %cst_35 = arith.constant 0.000000e+00 : f32
    %38 = vector.broadcast %cst_35 : f32 to vector<4x256xf32>
    %39 = arith.maximumf %37, %38 : vector<4x256xf32>
    %40 = arith.truncf %39 : vector<4x256xf32> to vector<4x256xbf16>
    %c0_36 = arith.constant 0 : index
    %c0_37 = arith.constant 0 : index
    %41 = vector.load %arg7[%c0_36, %c0_37] : memref<256x128xbf16, #tpu.memory_space<vmem>>, vector<256x128xbf16>
    %cst_38 = arith.constant dense<0.000000e+00> : vector<4x128xf32>
    %42 = tpu.matmul %40, %41, %cst_38 {dimension_numbers = #tpu.dot_dimension_numbers<[1], [0], [0], [1], [0, 0, 1, 1], [], []>} : vector<4x256xbf16>, vector<256x128xbf16>, vector<4x128xf32> -> vector<4x128xf32>
    %c0_39 = arith.constant 0 : index
    %c0_40 = arith.constant 0 : index
    %43 = vector.load %arg8[%c0_39, %c0_40] : memref<1x128xf32, #tpu.memory_space<vmem>>, vector<1x128xf32>
    %44 = vector.broadcast %43 : vector<1x128xf32> to vector<4x128xf32>
    %45 = arith.addf %42, %44 : vector<4x128xf32>
    %c0_41 = arith.constant 0 : index
    %c0_42 = arith.constant 0 : index
    %c0_43 = arith.constant 0 : index
    %46 = vector.load %arg9[%c0_41, %c0_42, %c0_43] : memref<1x4x128xf32, #tpu.memory_space<vmem>>, vector<1x4x128xf32>
    %47 = vector.shape_cast %46 : vector<1x4x128xf32> to vector<4x128xf32>
    %48 = vector.shape_cast %45 : vector<4x128xf32> to vector<1x4x128xf32>
    tpu.vector_store %arg9[%c0_41, %c0_42, %c0_43], %48 {strides = array<i32>} : memref<1x4x128xf32, #tpu.memory_space<vmem>>, vector<1x4x128xf32>,
    return
  }
  func.func @transform_0(%arg0: i32, %arg1: i32) -> (i32, i32, i32, i32) {
    %c0_i32 = arith.constant 0 : i32
    %c0_i32_0 = arith.constant 0 : i32
    %c0_i32_1 = arith.constant 0 : i32
    return %arg0, %c0_i32, %arg1, %c0_i32_0 : i32, i32, i32, i32
  }
  func.func @transform_1(%arg0: i32, %arg1: i32) -> (i32, i32, i32) {
    %c0_i32 = arith.constant 0 : i32
    %c0_i32_0 = arith.constant 0 : i32
    %c0_i32_1 = arith.constant 0 : i32
    %c0_i32_2 = arith.constant 0 : i32
    return %c0_i32, %c0_i32_0, %c0_i32_1 : i32, i32, i32
  }
  func.func @transform_2(%arg0: i32, %arg1: i32) -> (i32, i32) {
    %c0_i32 = arith.constant 0 : i32
    %c0_i32_0 = arith.constant 0 : i32
    %c0_i32_1 = arith.constant 0 : i32
    return %c0_i32, %c0_i32_0 : i32, i32
  }
  func.func @transform_3(%arg0: i32, %arg1: i32) -> (i32, i32) {
    %c0_i32 = arith.constant 0 : i32
    %c0_i32_0 = arith.constant 0 : i32
    %c0_i32_1 = arith.constant 0 : i32
    return %c0_i32, %c0_i32_0 : i32, i32
  }
  func.func @transform_4(%arg0: i32, %arg1: i32) -> (i32, i32) {
    %c0_i32 = arith.constant 0 : i32
    %c0_i32_0 = arith.constant 0 : i32
    %c0_i32_1 = arith.constant 0 : i32
    return %c0_i32, %c0_i32_0 : i32, i32
  }
  func.func @transform_5(%arg0: i32, %arg1: i32) -> (i32, i32) {
    %c0_i32 = arith.constant 0 : i32
    %c0_i32_0 = arith.constant 0 : i32
    %c0_i32_1 = arith.constant 0 : i32
    return %c0_i32, %c0_i32_0 : i32, i32
  }
  func.func @transform_6(%arg0: i32, %arg1: i32) -> (i32, i32) {
    %c0_i32 = arith.constant 0 : i32
    %c0_i32_0 = arith.constant 0 : i32
    %c0_i32_1 = arith.constant 0 : i32
    return %c0_i32, %c0_i32_0 : i32, i32
  }
  func.func @transform_7(%arg0: i32, %arg1: i32) -> (i32, i32, i32) {
    %c0_i32 = arith.constant 0 : i32
    %c0_i32_0 = arith.constant 0 : i32
    return %arg0, %arg1, %c0_i32 : i32, i32, i32
  }
}

</mosaic_0001>

<llo_original>
// kernel: tpu_custom_call.1
$region0: #{tpu_custom_call.1}
  #allocation0 [shape = 'u32[]', space=smem, size = 0x4, offset = 0x4, fixed_abs, tag = 'smem constant byte address 0x4 - core index']
  #allocation1 [shape = 'u32[144,128]{1,0:T(1,128)}', space=vmem, size = 0x12000, scoped, tag = 'internal scratch']
  %s0 = inlined_call_operand.hbm [shape: f32[2,4,4,128], index: 0, kind: input, shape index: {}]
  %s1 = inlined_call_operand.hbm [shape: bf16[4,128,896], index: 1, kind: input, shape index: {}]
  %s2 = inlined_call_operand.vmem [shape: f32[1,896], index: 2, kind: input, shape index: {}]
  %s3 = inlined_call_operand.hbm [shape: bf16[896,256], index: 3, kind: input, shape index: {}]
  %s4 = inlined_call_operand.vmem [shape: f32[1,256], index: 4, kind: input, shape index: {}]
  %s5 = inlined_call_operand.hbm [shape: bf16[256,128], index: 5, kind: input, shape index: {}]
  %s6 = inlined_call_operand.vmem [shape: f32[1,128], index: 6, kind: input, shape index: {}]
  %s7 = inlined_call_operand.hbm [shape: f32[2,4,128], index: 7, kind: output, shape index: {}]
  %s8 = sld [smem:[#allocation0]]
  $region77: #{tpu_custom_call.1} parent=0
    _
  %s10 = ssub.s32 1, %s8
  %s11 = scalar_select 0, %s10, %s8
  $region1: #{tpu_custom_call.1} parent=0
    #allocation2 [shape = 'u8[16384]{0}', space=vmem, size = 0x4000, scoped, tag = 'input window, operand 0']
    #allocation3 [shape = 's32[2]{0}', space=sflag, size = 0x8, scoped, tag = 'scoped memory for tpu_custom_call.1']
    #allocation4 [shape = 's32[2]{0}', space=sflag, size = 0x8, scoped, tag = 'scoped memory for tpu_custom_call.1']
    #allocation5 [shape = 'u8[917504]{0}', space=vmem, size = 0xe0000, scoped, tag = 'input window, operand 1, single buffered']
    #allocation6 [shape = 's32[1]{0}', space=sflag, size = 0x4, scoped, tag = 'scoped memory for tpu_custom_call.1']
    #allocation7 [shape = 'u8[458752]{0}', space=vmem, size = 0x70000, scoped, tag = 'input window, operand 3, single buffered']
    #allocation8 [shape = 'u8[65536]{0}', space=vmem, size = 0x10000, scoped, tag = 'input window, operand 5, single buffered']
    #allocation9 [shape = 's32[1]{0}', space=sflag, size = 0x4, scoped, tag = 'scoped memory for tpu_custom_call.1']
    #allocation10 [shape = 'u8[4096]{0}', space=vmem, size = 0x1000, scoped, tag = 'output window, operand 0']
    %12 = vsyncpa [#allocation3], 0
    %s13 = scalar_lea.sflag [#allocation3], 1
    %14 = vsyncpa %s13, 0
    %15 = vsyncpa [#allocation6], 0
    %16 = vsyncpa [#allocation9], 0
    %17 = vsyncpa [#allocation4], 0
    %s18 = scalar_lea.sflag [#allocation4], 1
    %19 = vsyncpa %s18, 0
    loop: start=0, step=1, limit=4
    $region2: #{tpu_custom_call.1} parent=1 // loop_pre_header
      _
    $region3: #{tpu_custom_call.1} parent=1 // loop_header
      %s21 = sphi 0, %s25
      %p22 = scmp.ge.s32.totalorder %s21, 4
      %s28 = sphi 0, %s40
      %s29 = sphi 0, %s36
      %s30 = sphi 0, %s28
      %s31 = sphi 0, %s29
      %s32 = sphi 0, %s30
      %s33 = sphi 0, %s31
      %s45 = sphi 0, %s47
      %s48 = sphi 0, %s45
      %s49 = sphi 0, %s48
      %s65 = sphi 0, %s49
      %s69 = sphi 0, %s69
      %s71 = sphi 0, %s69
      %s72 = sphi 0, %s71
      %s86 = sphi 0, %s72
      %s90 = sphi 0, %s90
      %s92 = sphi 0, %s90
      %s93 = sphi 0, %s92
      %s107 = sphi 0, %s93
      %s111 = sphi 0, %s111
      %s113 = sphi 0, %s111
      %s114 = sphi 0, %s113
      %s128 = sphi 0, %s114
      %s132 = sphi 0, %s132
      %s134 = sphi 0, %s132
      %s135 = sphi 0, %s134
      %s149 = sphi 0, %s135
      %s153 = sphi 0, %s153
      %s155 = sphi 0, %s153
      %s156 = sphi 0, %s155
      %s170 = sphi 0, %s156
      %s174 = sphi 0, %s174
      %s176 = sphi 0, %s174
      %s177 = sphi 0, %s176
      %s191 = sphi 0, %s177
      %s199 = sphi 0, %s201
      %s202 = sphi 0, %s199
      %s203 = sphi 0, %s202
      %s219 = sphi 0, %s203
    $region4: #{tpu_custom_call.1} parent=1 // loop_header_branch
      %24 = sbr.rel (%p22) target = $region8
    $region5: #{tpu_custom_call.1} parent=1 // loop_body
      %s26 = ssub.s32 %s21, 1
      %s27 = ssub.s32 %s21, 2
      %s34 = sadd.s32 1, %s29
      %p35 = scmp.ge.s32.totalorder %s34, 1
      %s36 = scalar_select %p35, 0, %s34
      %s37 = sadd.s32 1, %s28
      %s38 = scalar_select %p35, %s37, %s28
      %p39 = scmp.ge.s32.totalorder %s38, 2
      %s40 = scalar_select %p39, 0, %s38
      %s41 = ssub.s32 %s28, %s40
      %s42 = ssub.s32 %s29, %s36
      %s43 = sor.u32 %s41, %s42
      %p44 = scmp.eq.s32.totalorder %s43, 0
      %s46 = sadd.s32 %s45, 1
      %s47 = scalar_select %p44, %s45, %s46
      %p50 = pneg %p44
      %p51 = scmp.eq.s32.totalorder %s21, 1
      %p52 = por %p50, %p51
      %p53 = scmp.ne.s32.totalorder %s45, %s48
      %p54 = scmp.eq.s32.totalorder %s21, 0
      %p55 = por %p53, %p54
      %p56 = scmp.ne.s32.totalorder %s45, %s48
      %p57 = scmp.eq.s32.totalorder %s26, 1
      %p58 = por %p56, %p57
      %p59 = scmp.ne.s32.totalorder %s48, %s49
      %p60 = scmp.eq.s32.totalorder %s26, 0
      %p61 = por %p59, %p60
      %p62 = scmp.ne.s32.totalorder %s48, %s49
      %p63 = scmp.eq.s32.totalorder %s27, 1
      %p64 = por %p62, %p63
      %p66 = scmp.ne.s32.totalorder %s49, %s65
      %p67 = scmp.eq.s32.totalorder %s27, 0
      %p68 = por %p66, %p67
      %s70 = sadd.s32 %s69, 1
      %p73 = scmp.eq.s32.totalorder %s21, 1
      %p74 = scmp.ne.s32.totalorder %s69, %s71
      %p75 = scmp.eq.s32.totalorder %s21, 0
      %p76 = por %p74, %p75
      %p77 = scmp.ne.s32.totalorder %s69, %s71
      %p78 = scmp.eq.s32.totalorder %s26, 1
      %p79 = por %p77, %p78
      %p80 = scmp.ne.s32.totalorder %s71, %s72
      %p81 = scmp.eq.s32.totalorder %s26, 0
      %p82 = por %p80, %p81
      %p83 = scmp.ne.s32.totalorder %s71, %s72
      %p84 = scmp.eq.s32.totalorder %s27, 1
      %p85 = por %p83, %p84
      %p87 = scmp.ne.s32.totalorder %s72, %s86
      %p88 = scmp.eq.s32.totalorder %s27, 0
      %p89 = por %p87, %p88
      %s91 = sadd.s32 %s90, 1
      %p94 = scmp.eq.s32.totalorder %s21, 1
      %p95 = scmp.ne.s32.totalorder %s90, %s92
      %p96 = scmp.eq.s32.totalorder %s21, 0
      %p97 = por %p95, %p96
      %p98 = scmp.ne.s32.totalorder %s90, %s92
      %p99 = scmp.eq.s32.totalorder %s26, 1
      %p100 = por %p98, %p99
      %p101 = scmp.ne.s32.totalorder %s92, %s93
      %p102 = scmp.eq.s32.totalorder %s26, 0
      %p103 = por %p101, %p102
      %p104 = scmp.ne.s32.totalorder %s92, %s93
      %p105 = scmp.eq.s32.totalorder %s27, 1
      %p106 = por %p104, %p105
      %p108 = scmp.ne.s32.totalorder %s93, %s107
      %p109 = scmp.eq.s32.totalorder %s27, 0
      %p110 = por %p108, %p109
      %s112 = sadd.s32 %s111, 1
      %p115 = scmp.eq.s32.totalorder %s21, 1
      %p116 = scmp.ne.s32.totalorder %s111, %s113
      %p117 = scmp.eq.s32.totalorder %s21, 0
      %p118 = por %p116, %p117
      %p119 = scmp.ne.s32.totalorder %s111, %s113
      %p120 = scmp.eq.s32.totalorder %s26, 1
      %p121 = por %p119, %p120
      %p122 = scmp.ne.s32.totalorder %s113, %s114
      %p123 = scmp.eq.s32.totalorder %s26, 0
      %p124 = por %p122, %p123
      %p125 = scmp.ne.s32.totalorder %s113, %s114
      %p126 = scmp.eq.s32.totalorder %s27, 1
      %p127 = por %p125, %p126
      %p129 = scmp.ne.s32.totalorder %s114, %s128
      %p130 = scmp.eq.s32.totalorder %s27, 0
      %p131 = por %p129, %p130
      %s133 = sadd.s32 %s132, 1
      %p136 = scmp.eq.s32.totalorder %s21, 1
      %p137 = scmp.ne.s32.totalorder %s132, %s134
      %p138 = scmp.eq.s32.totalorder %s21, 0
      %p139 = por %p137, %p138
      %p140 = scmp.ne.s32.totalorder %s132, %s134
      %p141 = scmp.eq.s32.totalorder %s26, 1
      %p142 = por %p140, %p141
      %p143 = scmp.ne.s32.totalorder %s134, %s135
      %p144 = scmp.eq.s32.totalorder %s26, 0
      %p145 = por %p143, %p144
      %p146 = scmp.ne.s32.totalorder %s134, %s135
      %p147 = scmp.eq.s32.totalorder %s27, 1
      %p148 = por %p146, %p147
      %p150 = scmp.ne.s32.totalorder %s135, %s149
      %p151 = scmp.eq.s32.totalorder %s27, 0
      %p152 = por %p150, %p151
      %s154 = sadd.s32 %s153, 1
      %p157 = scmp.eq.s32.totalorder %s21, 1
      %p158 = scmp.ne.s32.totalorder %s153, %s155
      %p159 = scmp.eq.s32.totalorder %s21, 0
      %p160 = por %p158, %p159
      %p161 = scmp.ne.s32.totalorder %s153, %s155
      %p162 = scmp.eq.s32.totalorder %s26, 1
      %p163 = por %p161, %p162
      %p164 = scmp.ne.s32.totalorder %s155, %s156
      %p165 = scmp.eq.s32.totalorder %s26, 0
      %p166 = por %p164, %p165
      %p167 = scmp.ne.s32.totalorder %s155, %s156
      %p168 = scmp.eq.s32.totalorder %s27, 1
      %p169 = por %p167, %p168
      %p171 = scmp.ne.s32.totalorder %s156, %s170
      %p172 = scmp.eq.s32.totalorder %s27, 0
      %p173 = por %p171, %p172
      %s175 = sadd.s32 %s174, 1
      %p178 = scmp.eq.s32.totalorder %s21, 1
      %p179 = scmp.ne.s32.totalorder %s174, %s176
      %p180 = scmp.eq.s32.totalorder %s21, 0
      %p181 = por %p179, %p180
      %p182 = scmp.ne.s32.totalorder %s174, %s176
      %p183 = scmp.eq.s32.totalorder %s26, 1
      %p184 = por %p182, %p183
      %p185 = scmp.ne.s32.totalorder %s176, %s177
      %p186 = scmp.eq.s32.totalorder %s26, 0
      %p187 = por %p185, %p186
      %p188 = scmp.ne.s32.totalorder %s176, %s177
      %p189 = scmp.eq.s32.totalorder %s27, 1
      %p190 = por %p188, %p189
      %p192 = scmp.ne.s32.totalorder %s177, %s191
      %p193 = scmp.eq.s32.totalorder %s27, 0
      %p194 = por %p192, %p193
      %s195 = ssub.s32 %s28, %s40
      %s196 = ssub.s32 %s29, %s36
      %s197 = sor.u32 %s195, %s196
      %p198 = scmp.eq.s32.totalorder %s197, 0
      %s200 = sadd.s32 %s199, 1
      %s201 = scalar_select %p198, %s199, %s200
      %p204 = pneg %p198
      %p205 = scmp.eq.s32.totalorder %s21, 1
      %p206 = por %p204, %p205
      %p207 = scmp.ne.s32.totalorder %s199, %s202
      %p208 = scmp.eq.s32.totalorder %s21, 0
      %p209 = por %p207, %p208
      %p210 = scmp.ne.s32.totalorder %s199, %s202
      %p211 = scmp.eq.s32.totalorder %s26, 1
      %p212 = por %p210, %p211
      %p213 = scmp.ne.s32.totalorder %s202, %s203
      %p214 = scmp.eq.s32.totalorder %s26, 0
      %p215 = por %p213, %p214
      %p216 = scmp.ne.s32.totalorder %s202, %s203
      %p217 = scmp.eq.s32.totalorder %s27, 1
      %p218 = por %p216, %p217
      %p220 = scmp.ne.s32.totalorder %s203, %s219
      %p221 = scmp.eq.s32.totalorder %s27, 0
      %p222 = por %p220, %p221
      %p223 = scmp.le.s32.totalorder 1, %s21
      %p224 = scmp.lt.s32.totalorder %s21, 3
      %p225 = pnand %p223, %p224
      %p226 = pneg %p225
      // Predicated region
      $region9: #{tpu_custom_call.1} parent=5 // pred_check
        _
      $region10: #{tpu_custom_call.1} parent=5 // pred_check_branch
        %228 = sbr.rel (%p225) target = $region12
      $region11: #{tpu_custom_call.1} parent=5 // pred_region
        %s229 = ssub.s32 %s21, 1
        // Predicated region
        $region13: #{tpu_custom_call.1} parent=11 // pred_check
          %p230 = pneg %p82
        $region14: #{tpu_custom_call.1} parent=11 // pred_check_branch
          %232 = sbr.rel (%p230) target = $region16
        $region15: #{tpu_custom_call.1} parent=11 // pred_region
          %s234 = ssub.s32 28672, 28672
          %235 = vsyncadd [#allocation6], %s234
          %s236 = sshll.u32 [#allocation5], 4
          %s237 = int_to_ptr.vmem [resolvable:$true] %s236
          %242 = dma.hbm_to_vmem [thread:$0]  %s1, 28672, %s237, [#allocation6], 448, 448, 28
        $region16: #{tpu_custom_call.1} parent=11 // pred_fallthru
          _
        // Predicated region
        $region17: #{tpu_custom_call.1} parent=11 // pred_check
          %p243 = pneg %p103
        $region18: #{tpu_custom_call.1} parent=11 // pred_check_branch
          %245 = sbr.rel (%p243) target = $region20
        $region19: #{tpu_custom_call.1} parent=11 // pred_region
          _
        $region20: #{tpu_custom_call.1} parent=11 // pred_fallthru
          _
        // Predicated region
        $region21: #{tpu_custom_call.1} parent=11 // pred_check
          %p246 = pneg %p124
        $region22: #{tpu_custom_call.1} parent=11 // pred_check_branch
          %248 = sbr.rel (%p246) target = $region24
        $region23: #{tpu_custom_call.1} parent=11 // pred_region
          %s250 = ssub.s32 14336, 14336
          %251 = vsyncadd [#allocation6], %s250
          %s252 = sshll.u32 [#allocation7], 4
          %s253 = int_to_ptr.vmem [resolvable:$true] %s252
          %258 = dma.hbm_to_vmem [thread:$0]  %s3, 14336, %s253, [#allocation6], 128, 128, 8
        $region24: #{tpu_custom_call.1} parent=11 // pred_fallthru
          _
        // Predicated region
        $region25: #{tpu_custom_call.1} parent=11 // pred_check
          %p259 = pneg %p145
        $region26: #{tpu_custom_call.1} parent=11 // pred_check_branch
          %261 = sbr.rel (%p259) target = $region28
        $region27: #{tpu_custom_call.1} parent=11 // pred_region
          _
        $region28: #{tpu_custom_call.1} parent=11 // pred_fallthru
          _
        // Predicated region
        $region29: #{tpu_custom_call.1} parent=11 // pred_check
          %p262 = pneg %p166
        $region30: #{tpu_custom_call.1} parent=11 // pred_check_branch
          %264 = sbr.rel (%p262) target = $region32
        $region31: #{tpu_custom_call.1} parent=11 // pred_region
          %s266 = ssub.s32 2048, 2048
          %267 = vsyncadd [#allocation9], %s266
          %s268 = sshll.u32 [#allocation8], 4
          %s269 = int_to_ptr.vmem [resolvable:$true] %s268
          %274 = dma.hbm_to_vmem [thread:$0]  %s5, 2048, %s269, [#allocation9], 64, 64, 4
        $region32: #{tpu_custom_call.1} parent=11 // pred_fallthru
          _
        // Predicated region
        $region33: #{tpu_custom_call.1} parent=11 // pred_check
          %p275 = pneg %p187
        $region34: #{tpu_custom_call.1} parent=11 // pred_check_branch
          %277 = sbr.rel (%p275) target = $region36
        $region35: #{tpu_custom_call.1} parent=11 // pred_region
          _
        $region36: #{tpu_custom_call.1} parent=11 // pred_fallthru
          _
      $region12: #{tpu_custom_call.1} parent=5 // pred_fallthru
        _
      %p278 = scmp.lt.s32.totalorder %s21, 2
      // Predicated region
      $region37: #{tpu_custom_call.1} parent=5 // pred_check
        %p279 = pneg %p278
      $region38: #{tpu_custom_call.1} parent=5 // pred_check_branch
        %281 = sbr.rel (%p279) target = $region40
      $region39: #{tpu_custom_call.1} parent=5 // pred_region
        // Predicated region
        $region41: #{tpu_custom_call.1} parent=39 // pred_check
          %p282 = pneg %p55
        $region42: #{tpu_custom_call.1} parent=39 // pred_check_branch
          %284 = sbr.rel (%p282) target = $region44
        $region43: #{tpu_custom_call.1} parent=39 // pred_region
          %s285 = sand.u32 %s45, 1
          %s286 = scalar_lea.sflag [#allocation3], %s285
          %s287 = sand.u32 %s45, 1
          %s288 = smul.addr %s287, 16
          %s289 = scalar_lea.vmem [#allocation2], %s288
          %s291 = ssub.s32 256, 256
          %292 = vsyncadd %s286, %s291
          %s293 = smul.addr %s28, 4
          %s294 = sadd.s32 %s29, %s293
          %s295 = smul.addr %s294, 64
          %s296 = scalar_lea.hbm %s0, %s295
          %s297 = sshll.u32 %s289, 4
          %s298 = int_to_ptr.vmem [resolvable:$true] %s297
          %303 = dma.hbm_to_vmem [thread:$0]  %s296, 256, %s298, %s286, 64, 64, 4
        $region44: #{tpu_custom_call.1} parent=39 // pred_fallthru
          _
      $region40: #{tpu_custom_call.1} parent=5 // pred_fallthru
        _
      %p304 = scmp.le.s32.totalorder 1, %s21
      %p305 = scmp.lt.s32.totalorder %s21, 3
      %p306 = pnand %p304, %p305
      %p307 = pneg %p306
      // Predicated region
      $region45: #{tpu_custom_call.1} parent=5 // pred_check
        _
      $region46: #{tpu_custom_call.1} parent=5 // pred_check_branch
        %309 = sbr.rel (%p306) target = $region48
      $region47: #{tpu_custom_call.1} parent=5 // pred_region
        %s310 = ssub.s32 %s21, 1
        %s311 = sand.u32 %s48, 1
        %s312 = scalar_lea.sflag [#allocation3], %s311
        %s313 = sand.u32 %s48, 1
        %s314 = smul.addr %s313, 16
        %s315 = scalar_lea.vmem [#allocation2], %s314
        // Predicated region
        $region49: #{tpu_custom_call.1} parent=47 // pred_check
          %p316 = pneg %p61
        $region50: #{tpu_custom_call.1} parent=47 // pred_check_branch
          %318 = sbr.rel (%p316) target = $region52
        $region51: #{tpu_custom_call.1} parent=47 // pred_region
          %319 = dma.done %s312, 256
        $region52: #{tpu_custom_call.1} parent=47 // pred_fallthru
          _
        // Predicated region
        $region53: #{tpu_custom_call.1} parent=47 // pred_check
          %p320 = pneg %p82
        $region54: #{tpu_custom_call.1} parent=47 // pred_check_branch
          %322 = sbr.rel (%p320) target = $region56
        $region55: #{tpu_custom_call.1} parent=47 // pred_region
          %323 = dma.done [#allocation6], 28672
        $region56: #{tpu_custom_call.1} parent=47 // pred_fallthru
          _
        // Predicated region
        $region57: #{tpu_custom_call.1} parent=47 // pred_check
          %p324 = pneg %p124
        $region58: #{tpu_custom_call.1} parent=47 // pred_check_branch
          %326 = sbr.rel (%p324) target = $region60
        $region59: #{tpu_custom_call.1} parent=47 // pred_region
          %327 = dma.done [#allocation6], 14336
        $region60: #{tpu_custom_call.1} parent=47 // pred_fallthru
          _
        // Predicated region
        $region61: #{tpu_custom_call.1} parent=47 // pred_check
          %p328 = pneg %p166
        $region62: #{tpu_custom_call.1} parent=47 // pred_check_branch
          %330 = sbr.rel (%p328) target = $region64
        $region63: #{tpu_custom_call.1} parent=47 // pred_region
          %331 = dma.done [#allocation9], 2048
        $region64: #{tpu_custom_call.1} parent=47 // pred_fallthru
          _
        %s332 = sand.u32 %s48, 1
        %s333 = scalar_lea.sflag [#allocation3], %s332
        %s334 = sand.u32 %s48, 1
        %s335 = smul.addr %s334, 16
        %s336 = scalar_lea.vmem [#allocation2], %s335
        %p337 = pneg %p61
        %p338 = pneg %p58
        %p339 = pneg %p82
        %p340 = pneg %p79
        %p341 = pneg %p103
        %p342 = pneg %p100
        %p343 = pneg %p124
        %p344 = pneg %p121
        %p345 = pneg %p145
        %p346 = pneg %p142
        %p347 = pneg %p166
        %p348 = pneg %p163
        %p349 = pneg %p187
        %p350 = pneg %p184
        %p351 = pneg %p215
        %p352 = pneg %p212
        %s353 = sand.u32 %s202, 1
        %s354 = scalar_lea.sflag [#allocation4], %s353
        %s355 = sand.u32 %s202, 1
        %s356 = smul.addr %s355, 4
        %s357 = scalar_lea.vmem [#allocation10], %s356
        %v359 = vld [vmem:[%s315] sm:$0xf]
        %v360 = vpack.c.bf16 %v359, %v359
        %v361 = vld [vmem:[#allocation5] sm:$0xff]
        %v362 = vld [vmem:[#allocation5 + $0x8] sm:$0xff]
        %v363 = vld [vmem:[#allocation5 + $0x10] sm:$0xff]
        %v364 = vld [vmem:[#allocation5 + $0x18] sm:$0xf]
        %v365 = vld [vmem:[#allocation5 + $0x1c] sm:$0xff]
        %v366 = vld [vmem:[#allocation5 + $0x24] sm:$0xff]
        %v367 = vld [vmem:[#allocation5 + $0x2c] sm:$0xff]
        %v368 = vld [vmem:[#allocation5 + $0x34] sm:$0xf]
        %v369 = vld [vmem:[#allocation5 + $0x38] sm:$0xff]
        %v370 = vld [vmem:[#allocation5 + $0x40] sm:$0xff]
        %v371 = vld [vmem:[#allocation5 + $0x48] sm:$0xff]
        %v372 = vld [vmem:[#allocation5 + $0x50] sm:$0xf]
        %v373 = vld [vmem:[#allocation5 + $0x54] sm:$0xff]
        %v374 = vld [vmem:[#allocation5 + $0x5c] sm:$0xff]
        %v375 = vld [vmem:[#allocation5 + $0x64] sm:$0xff]
        %v376 = vld [vmem:[#allocation5 + $0x6c] sm:$0xf]
        %v377 = vld [vmem:[#allocation5 + $0x70] sm:$0xff]
        %v378 = vld [vmem:[#allocation5 + $0x78] sm:$0xff]
        %v379 = vld [vmem:[#allocation5 + $0x80] sm:$0xff]
        %v380 = vld [vmem:[#allocation5 + $0x88] sm:$0xf]
        %v381 = vld [vmem:[#allocation5 + $0x8c] sm:$0xff]
        %v382 = vld [vmem:[#allocation5 + $0x94] sm:$0xff]
        %v383 = vld [vmem:[#allocation5 + $0x9c] sm:$0xff]
        %v384 = vld [vmem:[#allocation5 + $0xa4] sm:$0xf]
        %v385 = vld [vmem:[#allocation5 + $0xa8] sm:$0xff]
        %v386 = vld [vmem:[#allocation5 + $0xb0] sm:$0xff]
        %v387 = vld [vmem:[#allocation5 + $0xb8] sm:$0xff]
        %v388 = vld [vmem:[#allocation5 + $0xc0] sm:$0xf]
        %v389 = vld [vmem:[#allocation5 + $0xc4] sm:$0xff]
        %v390 = vld [vmem:[#allocation5 + $0xcc] sm:$0xff]
        %v391 = vld [vmem:[#allocation5 + $0xd4] sm:$0xff]
        %v392 = vld [vmem:[#allocation5 + $0xdc] sm:$0xf]
        %v393 = vld [vmem:[#allocation5 + $0xe0] sm:$0xff]
        %v394 = vld [vmem:[#allocation5 + $0xe8] sm:$0xff]
        %v395 = vld [vmem:[#allocation5 + $0xf0] sm:$0xff]
        %v396 = vld [vmem:[#allocation5 + $0xf8] sm:$0xf]
        %v397 = vld [vmem:[#allocation5 + $0xfc] sm:$0xff]
        %v398 = vld [vmem:[#allocation5 + $0x104] sm:$0xff]
        %v399 = vld [vmem:[#allocation5 + $0x10c] sm:$0xff]
        %v400 = vld [vmem:[#allocation5 + $0x114] sm:$0xf]
        %v401 = vld [vmem:[#allocation5 + $0x118] sm:$0xff]
        %v402 = vld [vmem:[#allocation5 + $0x120] sm:$0xff]
        %v403 = vld [vmem:[#allocation5 + $0x128] sm:$0xff]
        %v404 = vld [vmem:[#allocation5 + $0x130] sm:$0xf]
        %v405 = vld [vmem:[#allocation5 + $0x134] sm:$0xff]
        %v406 = vld [vmem:[#allocation5 + $0x13c] sm:$0xff]
        %v407 = vld [vmem:[#allocation5 + $0x144] sm:$0xff]
        %v408 = vld [vmem:[#allocation5 + $0x14c] sm:$0xf]
        %v409 = vld [vmem:[#allocation5 + $0x150] sm:$0xff]
        %v410 = vld [vmem:[#allocation5 + $0x158] sm:$0xff]
        %v411 = vld [vmem:[#allocation5 + $0x160] sm:$0xff]
        %v412 = vld [vmem:[#allocation5 + $0x168] sm:$0xf]
        %v413 = vld [vmem:[#allocation5 + $0x16c] sm:$0xff]
        %v414 = vld [vmem:[#allocation5 + $0x174] sm:$0xff]
        %v415 = vld [vmem:[#allocation5 + $0x17c] sm:$0xff]
        %v416 = vld [vmem:[#allocation5 + $0x184] sm:$0xf]
        %v417 = vld [vmem:[#allocation5 + $0x188] sm:$0xff]
        %v418 = vld [vmem:[#allocation5 + $0x190] sm:$0xff]
        %v419 = vld [vmem:[#allocation5 + $0x198] sm:$0xff]
        %v420 = vld [vmem:[#allocation5 + $0x1a0] sm:$0xf]
        %v421 = vld [vmem:[#allocation5 + $0x1a4] sm:$0xff]
        %v422 = vld [vmem:[#allocation5 + $0x1ac] sm:$0xff]
        %v423 = vld [vmem:[#allocation5 + $0x1b4] sm:$0xff]
        %v424 = vld [vmem:[#allocation5 + $0x1bc] sm:$0xf]
        %s425 = scalar_lea.vmem %s315, 4 [#allocation2]
        %v426 = vld [vmem:[%s425] sm:$0xf]
        %v427 = vpack.c.bf16 %v426, %v426
        %s428 = scalar_lea.vmem [#allocation5], 448
        %v429 = vld [vmem:[%s428] sm:$0xff]
        %v430 = vld [vmem:[%s428 + $0x8] sm:$0xff]
        %v431 = vld [vmem:[%s428 + $0x10] sm:$0xff]
        %v432 = vld [vmem:[%s428 + $0x18] sm:$0xf]
        %v433 = vld [vmem:[%s428 + $0x1c] sm:$0xff]
        %v434 = vld [vmem:[%s428 + $0x24] sm:$0xff]
        %v435 = vld [vmem:[%s428 + $0x2c] sm:$0xff]
        %v436 = vld [vmem:[%s428 + $0x34] sm:$0xf]
        %v437 = vld [vmem:[%s428 + $0x38] sm:$0xff]
        %v438 = vld [vmem:[%s428 + $0x40] sm:$0xff]
        %v439 = vld [vmem:[%s428 + $0x48] sm:$0xff]
        %v440 = vld [vmem:[%s428 + $0x50] sm:$0xf]
        %v441 = vld [vmem:[%s428 + $0x54] sm:$0xff]
        %v442 = vld [vmem:[%s428 + $0x5c] sm:$0xff]
        %v443 = vld [vmem:[%s428 + $0x64] sm:$0xff]
        %v444 = vld [vmem:[%s428 + $0x6c] sm:$0xf]
        %v445 = vld [vmem:[%s428 + $0x70] sm:$0xff]
        %v446 = vld [vmem:[%s428 + $0x78] sm:$0xff]
        %v447 = vld [vmem:[%s428 + $0x80] sm:$0xff]
        %v448 = vld [vmem:[%s428 + $0x88] sm:$0xf]
        %v449 = vld [vmem:[%s428 + $0x8c] sm:$0xff]
        %v450 = vld [vmem:[%s428 + $0x94] sm:$0xff]
        %v451 = vld [vmem:[%s428 + $0x9c] sm:$0xff]
        %v452 = vld [vmem:[%s428 + $0xa4] sm:$0xf]
        %v453 = vld [vmem:[%s428 + $0xa8] sm:$0xff]
        %v454 = vld [vmem:[%s428 + $0xb0] sm:$0xff]
        %v455 = vld [vmem:[%s428 + $0xb8] sm:$0xff]
        %v456 = vld [vmem:[%s428 + $0xc0] sm:$0xf]
        %v457 = vld [vmem:[%s428 + $0xc4] sm:$0xff]
        %v458 = vld [vmem:[%s428 + $0xcc] sm:$0xff]
        %v459 = vld [vmem:[%s428 + $0xd4] sm:$0xff]
        %v460 = vld [vmem:[%s428 + $0xdc] sm:$0xf]
        %v461 = vld [vmem:[%s428 + $0xe0] sm:$0xff]
        %v462 = vld [vmem:[%s428 + $0xe8] sm:$0xff]
        %v463 = vld [vmem:[%s428 + $0xf0] sm:$0xff]
        %v464 = vld [vmem:[%s428 + $0xf8] sm:$0xf]
        %v465 = vld [vmem:[%s428 + $0xfc] sm:$0xff]
        %v466 = vld [vmem:[%s428 + $0x104] sm:$0xff]
        %v467 = vld [vmem:[%s428 + $0x10c] sm:$0xff]
        %v468 = vld [vmem:[%s428 + $0x114] sm:$0xf]
        %v469 = vld [vmem:[%s428 + $0x118] sm:$0xff]
        %v470 = vld [vmem:[%s428 + $0x120] sm:$0xff]
        %v471 = vld [vmem:[%s428 + $0x128] sm:$0xff]
        %v472 = vld [vmem:[%s428 + $0x130] sm:$0xf]
        %v473 = vld [vmem:[%s428 + $0x134] sm:$0xff]
        %v474 = vld [vmem:[%s428 + $0x13c] sm:$0xff]
        %v475 = vld [vmem:[%s428 + $0x144] sm:$0xff]
        %v476 = vld [vmem:[%s428 + $0x14c] sm:$0xf]
        %v477 = vld [vmem:[%s428 + $0x150] sm:$0xff]
        %v478 = vld [vmem:[%s428 + $0x158] sm:$0xff]
        %v479 = vld [vmem:[%s428 + $0x160] sm:$0xff]
        %v480 = vld [vmem:[%s428 + $0x168] sm:$0xf]
        %v481 = vld [vmem:[%s428 + $0x16c] sm:$0xff]
        %v482 = vld [vmem:[%s428 + $0x174] sm:$0xff]
        %v483 = vld [vmem:[%s428 + $0x17c] sm:$0xff]
        %v484 = vld [vmem:[%s428 + $0x184] sm:$0xf]
        %v485 = vld [vmem:[%s428 + $0x188] sm:$0xff]
        %v486 = vld [vmem:[%s428 + $0x190] sm:$0xff]
        %v487 = vld [vmem:[%s428 + $0x198] sm:$0xff]
        %v488 = vld [vmem:[%s428 + $0x1a0] sm:$0xf]
        %v489 = vld [vmem:[%s428 + $0x1a4] sm:$0xff]
        %v490 = vld [vmem:[%s428 + $0x1ac] sm:$0xff]
        %v491 = vld [vmem:[%s428 + $0x1b4] sm:$0xff]
        %v492 = vld [vmem:[%s428 + $0x1bc] sm:$0xf]
        %v557 = vunpack.c.l.b16 %v429
        %v558 = vunpack.c.h.b16 %v429
        %v559 = vunpack.c.l.b16 %v430
        %v560 = vunpack.c.h.b16 %v430
        %v561 = vunpack.c.l.b16 %v431
        %v562 = vunpack.c.h.b16 %v431
        %v563 = vunpack.c.l.b16 %v432
        %v564 = vunpack.c.l.b16 %v433
        %v565 = vunpack.c.h.b16 %v433
        %v566 = vunpack.c.l.b16 %v434
        %v567 = vunpack.c.h.b16 %v434
        %v568 = vunpack.c.l.b16 %v435
        %v569 = vunpack.c.h.b16 %v435
        %v570 = vunpack.c.l.b16 %v436
        %v571 = vunpack.c.l.b16 %v437
        %v572 = vunpack.c.h.b16 %v437
        %v573 = vunpack.c.l.b16 %v438
        %v574 = vunpack.c.h.b16 %v438
        %v575 = vunpack.c.l.b16 %v439
        %v576 = vunpack.c.h.b16 %v439
        %v577 = vunpack.c.l.b16 %v440
        %v578 = vunpack.c.l.b16 %v441
        %v579 = vunpack.c.h.b16 %v441
        %v580 = vunpack.c.l.b16 %v442
        %v581 = vunpack.c.h.b16 %v442
        %v582 = vunpack.c.l.b16 %v443
        %v583 = vunpack.c.h.b16 %v443
        %v584 = vunpack.c.l.b16 %v444
        %v585 = vunpack.c.l.b16 %v445
        %v586 = vunpack.c.h.b16 %v445
        %v587 = vunpack.c.l.b16 %v446
        %v588 = vunpack.c.h.b16 %v446
        %v589 = vunpack.c.l.b16 %v447
        %v590 = vunpack.c.h.b16 %v447
        %v591 = vunpack.c.l.b16 %v448
        %v592 = vunpack.c.l.b16 %v449
        %v593 = vunpack.c.h.b16 %v449
        %v594 = vunpack.c.l.b16 %v450
        %v595 = vunpack.c.h.b16 %v450
        %v596 = vunpack.c.l.b16 %v451
        %v597 = vunpack.c.h.b16 %v451
        %v598 = vunpack.c.l.b16 %v452
        %v599 = vunpack.c.l.b16 %v453
        %v600 = vunpack.c.h.b16 %v453
        %v601 = vunpack.c.l.b16 %v454
        %v602 = vunpack.c.h.b16 %v454
        %v603 = vunpack.c.l.b16 %v455
        %v604 = vunpack.c.h.b16 %v455
        %v605 = vunpack.c.l.b16 %v456
        %v606 = vunpack.c.l.b16 %v457
        %v607 = vunpack.c.h.b16 %v457
        %v608 = vunpack.c.l.b16 %v458
        %v609 = vunpack.c.h.b16 %v458
        %v610 = vunpack.c.l.b16 %v459
        %v611 = vunpack.c.h.b16 %v459
        %v612 = vunpack.c.l.b16 %v460
        %v613 = vunpack.c.l.b16 %v461
        %v614 = vunpack.c.h.b16 %v461
        %v615 = vunpack.c.l.b16 %v462
        %v616 = vunpack.c.h.b16 %v462
        %v617 = vunpack.c.l.b16 %v463
        %v618 = vunpack.c.h.b16 %v463
        %v619 = vunpack.c.l.b16 %v464
        %v620 = vunpack.c.l.b16 %v465
        %v621 = vunpack.c.h.b16 %v465
        %v622 = vunpack.c.l.b16 %v466
        %v623 = vunpack.c.h.b16 %v466
        %v624 = vunpack.c.l.b16 %v467
        %v625 = vunpack.c.h.b16 %v467
        %v626 = vunpack.c.l.b16 %v468
        %v627 = vunpack.c.l.b16 %v469
        %v628 = vunpack.c.h.b16 %v469
        %v629 = vunpack.c.l.b16 %v470
        %v630 = vunpack.c.h.b16 %v470
        %v631 = vunpack.c.l.b16 %v471
        %v632 = vunpack.c.h.b16 %v471
        %v633 = vunpack.c.l.b16 %v472
        %v634 = vunpack.c.l.b16 %v473
        %v635 = vunpack.c.h.b16 %v473
        %v636 = vunpack.c.l.b16 %v474
        %v637 = vunpack.c.h.b16 %v474
        %v638 = vunpack.c.l.b16 %v475
        %v639 = vunpack.c.h.b16 %v475
        %v640 = vunpack.c.l.b16 %v476
        %v641 = vunpack.c.l.b16 %v477
        %v642 = vunpack.c.h.b16 %v477
        %v643 = vunpack.c.l.b16 %v478
        %v644 = vunpack.c.h.b16 %v478
        %v645 = vunpack.c.l.b16 %v479
        %v646 = vunpack.c.h.b16 %v479
        %v647 = vunpack.c.l.b16 %v480
        %v648 = vunpack.c.l.b16 %v481
        %v649 = vunpack.c.h.b16 %v481
        %v650 = vunpack.c.l.b16 %v482
        %v651 = vunpack.c.h.b16 %v482
        %v652 = vunpack.c.l.b16 %v483
        %v653 = vunpack.c.h.b16 %v483
        %v654 = vunpack.c.l.b16 %v484
        %v655 = vunpack.c.l.b16 %v485
        %v656 = vunpack.c.h.b16 %v485
        %v657 = vunpack.c.l.b16 %v486
        %v658 = vunpack.c.h.b16 %v486
        %v659 = vunpack.c.l.b16 %v487
        %v660 = vunpack.c.h.b16 %v487
        %v661 = vunpack.c.l.b16 %v488
        %v662 = vunpack.c.l.b16 %v489
        %v663 = vunpack.c.h.b16 %v489
        %v664 = vunpack.c.l.b16 %v490
        %v665 = vunpack.c.h.b16 %v490
        %v666 = vunpack.c.l.b16 %v491
        %v667 = vunpack.c.h.b16 %v491
        %v668 = vunpack.c.l.b16 %v492
        %v669 = vpack.c.b16 %v564, %v557
        %v670 = vpack.c.b16 %v565, %v558
        %v671 = vpack.c.b16 %v566, %v559
        %v672 = vpack.c.b16 %v567, %v560
        %v673 = vpack.c.b16 %v568, %v561
        %v674 = vpack.c.b16 %v569, %v562
        %v675 = vpack.c.b16 %v570, %v563
        %v676 = vpack.c.b16 %v578, %v571
        %v677 = vpack.c.b16 %v579, %v572
        %v678 = vpack.c.b16 %v580, %v573
        %v679 = vpack.c.b16 %v581, %v574
        %v680 = vpack.c.b16 %v582, %v575
        %v681 = vpack.c.b16 %v583, %v576
        %v682 = vpack.c.b16 %v584, %v577
        %v683 = vpack.c.b16 %v592, %v585
        %v684 = vpack.c.b16 %v593, %v586
        %v685 = vpack.c.b16 %v594, %v587
        %v686 = vpack.c.b16 %v595, %v588
        %v687 = vpack.c.b16 %v596, %v589
        %v688 = vpack.c.b16 %v597, %v590
        %v689 = vpack.c.b16 %v598, %v591
        %v690 = vpack.c.b16 %v606, %v599
        %v691 = vpack.c.b16 %v607, %v600
        %v692 = vpack.c.b16 %v608, %v601
        %v693 = vpack.c.b16 %v609, %v602
        %v694 = vpack.c.b16 %v610, %v603
        %v695 = vpack.c.b16 %v611, %v604
        %v696 = vpack.c.b16 %v612, %v605
        %v697 = vpack.c.b16 %v620, %v613
        %v698 = vpack.c.b16 %v621, %v614
        %v699 = vpack.c.b16 %v622, %v615
        %v700 = vpack.c.b16 %v623, %v616
        %v701 = vpack.c.b16 %v624, %v617
        %v702 = vpack.c.b16 %v625, %v618
        %v703 = vpack.c.b16 %v626, %v619
        %v704 = vpack.c.b16 %v634, %v627
        %v705 = vpack.c.b16 %v635, %v628
        %v706 = vpack.c.b16 %v636, %v629
        %v707 = vpack.c.b16 %v637, %v630
        %v708 = vpack.c.b16 %v638, %v631
        %v709 = vpack.c.b16 %v639, %v632
        %v710 = vpack.c.b16 %v640, %v633
        %v711 = vpack.c.b16 %v648, %v641
        %v712 = vpack.c.b16 %v649, %v642
        %v713 = vpack.c.b16 %v650, %v643
        %v714 = vpack.c.b16 %v651, %v644
        %v715 = vpack.c.b16 %v652, %v645
        %v716 = vpack.c.b16 %v653, %v646
        %v717 = vpack.c.b16 %v654, %v647
        %v718 = vpack.c.b16 %v662, %v655
        %v719 = vpack.c.b16 %v663, %v656
        %v720 = vpack.c.b16 %v664, %v657
        %v721 = vpack.c.b16 %v665, %v658
        %v722 = vpack.c.b16 %v666, %v659
        %v723 = vpack.c.b16 %v667, %v660
        %v724 = vpack.c.b16 %v668, %v661
        %781 = vmatprep.subr.bf16.mxu0 %v670
        %782 = vmatpush1.bf16.msra.mxu0 %v669
        %783 = vmatprep.subr.bf16.mxu0 %v677
        %784 = vmatpush1.bf16.msra.mxu0 %v676
        %785 = vmatprep.subr.bf16.mxu0 %v684
        %786 = vmatpush1.bf16.msra.mxu0 %v683
        %787 = vmatprep.subr.bf16.mxu0 %v691
        %788 = vmatpush1.bf16.msra.mxu0 %v690
        %789 = vmatprep.subr.bf16.mxu0 %v698
        %790 = vmatpush1.bf16.msra.mxu0 %v697
        %791 = vmatprep.subr.bf16.mxu0 %v705
        %792 = vmatpush1.bf16.msra.mxu0 %v704
        %793 = vmatprep.subr.bf16.mxu0 %v712
        %794 = vmatpush1.bf16.msra.mxu0 %v711
        %795 = vmatprep.subr.bf16.mxu0 %v719
        %796 = vmatpush1.bf16.msra.mxu0 %v718
        %797 = vmatprep.subr.bf16.mxu0 0
        %798 = vmatpush1.bf16.msra.mxu0 0
        %799 = vmatprep.subr.bf16.mxu0 0
        %800 = vmatpush1.bf16.msra.mxu0 0
        %801 = vmatprep.subr.bf16.mxu0 0
        %802 = vmatpush1.bf16.msra.mxu0 0
        %803 = vmatprep.subr.bf16.mxu0 0
        %804 = vmatpush1.bf16.msra.mxu0 0
        %805 = vmatprep.subr.bf16.mxu0 0
        %806 = vmatpush1.bf16.msra.mxu0 0
        %807 = vmatprep.subr.bf16.mxu0 0
        %808 = vmatpush1.bf16.msra.mxu0 0
        %809 = vmatprep.subr.bf16.mxu0 0
        %810 = vmatpush1.bf16.msra.mxu0 0
        %811 = vmatprep.subr.bf16.mxu0 0
        %812 = vmatpush1.bf16.msra.mxu0 0
        %813 = vmatprep.mubr.bf16.mxu0 0
        %814 = vmatmul.mubr.bf16.gmra.mrb[0].mxu0 %v427
        %v815 = vpop.f32.mrb[0].mxu0
        %v816 = vadd.f32 0.0, %v815
        %v817 = vpop.f32.mrb[0].mxu0
        %v818 = vadd.f32 0.0, %v817
        %v819 = vpop.f32.mrb[0].mxu0
        %v820 = vpop.f32.mrb[0].mxu0
        %821 = vdwg.mxu0
        %822 = vmatprep.subr.bf16.mxu0 %v672
        %823 = vmatpush1.bf16.msra.mxu0 %v671
        %824 = vmatprep.subr.bf16.mxu0 %v679
        %825 = vmatpush1.bf16.msra.mxu0 %v678
        %826 = vmatprep.subr.bf16.mxu0 %v686
        %827 = vmatpush1.bf16.msra.mxu0 %v685
        %828 = vmatprep.subr.bf16.mxu0 %v693
        %829 = vmatpush1.bf16.msra.mxu0 %v692
        %830 = vmatprep.subr.bf16.mxu0 %v700
        %831 = vmatpush1.bf16.msra.mxu0 %v699
        %832 = vmatprep.subr.bf16.mxu0 %v707
        %833 = vmatpush1.bf16.msra.mxu0 %v706
        %834 = vmatprep.subr.bf16.mxu0 %v714
        %835 = vmatpush1.bf16.msra.mxu0 %v713
        %836 = vmatprep.subr.bf16.mxu0 %v721
        %837 = vmatpush1.bf16.msra.mxu0 %v720
        %838 = vmatprep.subr.bf16.mxu0 0
        %839 = vmatpush1.bf16.msra.mxu0 0
        %840 = vmatprep.subr.bf16.mxu0 0
        %841 = vmatpush1.bf16.msra.mxu0 0
        %842 = vmatprep.subr.bf16.mxu0 0
        %843 = vmatpush1.bf16.msra.mxu0 0
        %844 = vmatprep.subr.bf16.mxu0 0
        %845 = vmatpush1.bf16.msra.mxu0 0
        %846 = vmatprep.subr.bf16.mxu0 0
        %847 = vmatpush1.bf16.msra.mxu0 0
        %848 = vmatprep.subr.bf16.mxu0 0
        %849 = vmatpush1.bf16.msra.mxu0 0
        %850 = vmatprep.subr.bf16.mxu0 0
        %851 = vmatpush1.bf16.msra.mxu0 0
        %852 = vmatprep.subr.bf16.mxu0 0
        %853 = vmatpush1.bf16.msra.mxu0 0
        %854 = vmatprep.mubr.bf16.mxu0 0
        %855 = vmatmul.mubr.bf16.gmra.mrb[0].mxu0 %v427
        %v856 = vpop.f32.mrb[0].mxu0
        %v857 = vadd.f32 0.0, %v856
        %v858 = vpop.f32.mrb[0].mxu0
        %v859 = vadd.f32 0.0, %v858
        %v860 = vpop.f32.mrb[0].mxu0
        %v861 = vpop.f32.mrb[0].mxu0
        %862 = vdwg.mxu0
        %863 = vmatprep.subr.bf16.mxu0 %v674
        %864 = vmatpush1.bf16.msra.mxu0 %v673
        %865 = vmatprep.subr.bf16.mxu0 %v681
        %866 = vmatpush1.bf16.msra.mxu0 %v680
        %867 = vmatprep.subr.bf16.mxu0 %v688
        %868 = vmatpush1.bf16.msra.mxu0 %v687
        %869 = vmatprep.subr.bf16.mxu0 %v695
        %870 = vmatpush1.bf16.msra.mxu0 %v694
        %871 = vmatprep.subr.bf16.mxu0 %v702
        %872 = vmatpush1.bf16.msra.mxu0 %v701
        %873 = vmatprep.subr.bf16.mxu0 %v709
        %874 = vmatpush1.bf16.msra.mxu0 %v708
        %875 = vmatprep.subr.bf16.mxu0 %v716
        %876 = vmatpush1.bf16.msra.mxu0 %v715
        %877 = vmatprep.subr.bf16.mxu0 %v723
        %878 = vmatpush1.bf16.msra.mxu0 %v722
        %879 = vmatprep.subr.bf16.mxu0 0
        %880 = vmatpush1.bf16.msra.mxu0 0
        %881 = vmatprep.subr.bf16.mxu0 0
        %882 = vmatpush1.bf16.msra.mxu0 0
        %883 = vmatprep.subr.bf16.mxu0 0
        %884 = vmatpush1.bf16.msra.mxu0 0
        %885 = vmatprep.subr.bf16.mxu0 0
        %886 = vmatpush1.bf16.msra.mxu0 0
        %887 = vmatprep.subr.bf16.mxu0 0
        %888 = vmatpush1.bf16.msra.mxu0 0
        %889 = vmatprep.subr.bf16.mxu0 0
        %890 = vmatpush1.bf16.msra.mxu0 0
        %891 = vmatprep.subr.bf16.mxu0 0
        %892 = vmatpush1.bf16.msra.mxu0 0
        %893 = vmatprep.subr.bf16.mxu0 0
        %894 = vmatpush1.bf16.msra.mxu0 0
        %895 = vmatprep.mubr.bf16.mxu0 0
        %896 = vmatmul.mubr.bf16.gmra.mrb[0].mxu0 %v427
        %v897 = vpop.f32.mrb[0].mxu0
        %v898 = vadd.f32 0.0, %v897
        %v899 = vpop.f32.mrb[0].mxu0
        %v900 = vadd.f32 0.0, %v899
        %v901 = vpop.f32.mrb[0].mxu0
        %v902 = vpop.f32.mrb[0].mxu0
        %903 = vdwg.mxu0
        %904 = vmatprep.subr.bf16.mxu0 0
        %905 = vmatpush1.bf16.msra.mxu0 %v675
        %906 = vmatprep.subr.bf16.mxu0 0
        %907 = vmatpush1.bf16.msra.mxu0 %v682
        %908 = vmatprep.subr.bf16.mxu0 0
        %909 = vmatpush1.bf16.msra.mxu0 %v689
        %910 = vmatprep.subr.bf16.mxu0 0
        %911 = vmatpush1.bf16.msra.mxu0 %v696
        %912 = vmatprep.subr.bf16.mxu0 0
        %913 = vmatpush1.bf16.msra.mxu0 %v703
        %914 = vmatprep.subr.bf16.mxu0 0
        %915 = vmatpush1.bf16.msra.mxu0 %v710
        %916 = vmatprep.subr.bf16.mxu0 0
        %917 = vmatpush1.bf16.msra.mxu0 %v717
        %918 = vmatprep.subr.bf16.mxu0 0
        %919 = vmatpush1.bf16.msra.mxu0 %v724
        %920 = vmatprep.subr.bf16.mxu0 0
        %921 = vmatpush1.bf16.msra.mxu0 0
        %922 = vmatprep.subr.bf16.mxu0 0
        %923 = vmatpush1.bf16.msra.mxu0 0
        %924 = vmatprep.subr.bf16.mxu0 0
        %925 = vmatpush1.bf16.msra.mxu0 0
        %926 = vmatprep.subr.bf16.mxu0 0
        %927 = vmatpush1.bf16.msra.mxu0 0
        %928 = vmatprep.subr.bf16.mxu0 0
        %929 = vmatpush1.bf16.msra.mxu0 0
        %930 = vmatprep.subr.bf16.mxu0 0
        %931 = vmatpush1.bf16.msra.mxu0 0
        %932 = vmatprep.subr.bf16.mxu0 0
        %933 = vmatpush1.bf16.msra.mxu0 0
        %934 = vmatprep.subr.bf16.mxu0 0
        %935 = vmatpush1.bf16.msra.mxu0 0
        %936 = vmatprep.mubr.bf16.mxu0 0
        %937 = vmatmul.mubr.bf16.gmra.mrb[0].mxu0 %v427
        %v938 = vpop.f32.mrb[0].mxu0
        %v939 = vadd.f32 0.0, %v938
        %v940 = vpop.f32.mrb[0].mxu0
        %v941 = vpop.f32.mrb[0].mxu0
        %v942 = vpop.f32.mrb[0].mxu0
        %943 = vdwg.mxu0
        %v1008 = vunpack.c.l.b16 %v361
        %v1009 = vunpack.c.h.b16 %v361
        %v1010 = vunpack.c.l.b16 %v362
        %v1011 = vunpack.c.h.b16 %v362
        %v1012 = vunpack.c.l.b16 %v363
        %v1013 = vunpack.c.h.b16 %v363
        %v1014 = vunpack.c.l.b16 %v364
        %v1015 = vunpack.c.l.b16 %v365
        %v1016 = vunpack.c.h.b16 %v365
        %v1017 = vunpack.c.l.b16 %v366
        %v1018 = vunpack.c.h.b16 %v366
        %v1019 = vunpack.c.l.b16 %v367
        %v1020 = vunpack.c.h.b16 %v367
        %v1021 = vunpack.c.l.b16 %v368
        %v1022 = vunpack.c.l.b16 %v369
        %v1023 = vunpack.c.h.b16 %v369
        %v1024 = vunpack.c.l.b16 %v370
        %v1025 = vunpack.c.h.b16 %v370
        %v1026 = vunpack.c.l.b16 %v371
        %v1027 = vunpack.c.h.b16 %v371
        %v1028 = vunpack.c.l.b16 %v372
        %v1029 = vunpack.c.l.b16 %v373
        %v1030 = vunpack.c.h.b16 %v373
        %v1031 = vunpack.c.l.b16 %v374
        %v1032 = vunpack.c.h.b16 %v374
        %v1033 = vunpack.c.l.b16 %v375
        %v1034 = vunpack.c.h.b16 %v375
        %v1035 = vunpack.c.l.b16 %v376
        %v1036 = vunpack.c.l.b16 %v377
        %v1037 = vunpack.c.h.b16 %v377
        %v1038 = vunpack.c.l.b16 %v378
        %v1039 = vunpack.c.h.b16 %v378
        %v1040 = vunpack.c.l.b16 %v379
        %v1041 = vunpack.c.h.b16 %v379
        %v1042 = vunpack.c.l.b16 %v380
        %v1043 = vunpack.c.l.b16 %v381
        %v1044 = vunpack.c.h.b16 %v381
        %v1045 = vunpack.c.l.b16 %v382
        %v1046 = vunpack.c.h.b16 %v382
        %v1047 = vunpack.c.l.b16 %v383
        %v1048 = vunpack.c.h.b16 %v383
        %v1049 = vunpack.c.l.b16 %v384
        %v1050 = vunpack.c.l.b16 %v385
        %v1051 = vunpack.c.h.b16 %v385
        %v1052 = vunpack.c.l.b16 %v386
        %v1053 = vunpack.c.h.b16 %v386
        %v1054 = vunpack.c.l.b16 %v387
        %v1055 = vunpack.c.h.b16 %v387
        %v1056 = vunpack.c.l.b16 %v388
        %v1057 = vunpack.c.l.b16 %v389
        %v1058 = vunpack.c.h.b16 %v389
        %v1059 = vunpack.c.l.b16 %v390
        %v1060 = vunpack.c.h.b16 %v390
        %v1061 = vunpack.c.l.b16 %v391
        %v1062 = vunpack.c.h.b16 %v391
        %v1063 = vunpack.c.l.b16 %v392
        %v1064 = vunpack.c.l.b16 %v393
        %v1065 = vunpack.c.h.b16 %v393
        %v1066 = vunpack.c.l.b16 %v394
        %v1067 = vunpack.c.h.b16 %v394
        %v1068 = vunpack.c.l.b16 %v395
        %v1069 = vunpack.c.h.b16 %v395
        %v1070 = vunpack.c.l.b16 %v396
        %v1071 = vunpack.c.l.b16 %v397
        %v1072 = vunpack.c.h.b16 %v397
        %v1073 = vunpack.c.l.b16 %v398
        %v1074 = vunpack.c.h.b16 %v398
        %v1075 = vunpack.c.l.b16 %v399
        %v1076 = vunpack.c.h.b16 %v399
        %v1077 = vunpack.c.l.b16 %v400
        %v1078 = vunpack.c.l.b16 %v401
        %v1079 = vunpack.c.h.b16 %v401
        %v1080 = vunpack.c.l.b16 %v402
        %v1081 = vunpack.c.h.b16 %v402
        %v1082 = vunpack.c.l.b16 %v403
        %v1083 = vunpack.c.h.b16 %v403
        %v1084 = vunpack.c.l.b16 %v404
        %v1085 = vunpack.c.l.b16 %v405
        %v1086 = vunpack.c.h.b16 %v405
        %v1087 = vunpack.c.l.b16 %v406
        %v1088 = vunpack.c.h.b16 %v406
        %v1089 = vunpack.c.l.b16 %v407
        %v1090 = vunpack.c.h.b16 %v407
        %v1091 = vunpack.c.l.b16 %v408
        %v1092 = vunpack.c.l.b16 %v409
        %v1093 = vunpack.c.h.b16 %v409
        %v1094 = vunpack.c.l.b16 %v410
        %v1095 = vunpack.c.h.b16 %v410
        %v1096 = vunpack.c.l.b16 %v411
        %v1097 = vunpack.c.h.b16 %v411
        %v1098 = vunpack.c.l.b16 %v412
        %v1099 = vunpack.c.l.b16 %v413
        %v1100 = vunpack.c.h.b16 %v413
        %v1101 = vunpack.c.l.b16 %v414
        %v1102 = vunpack.c.h.b16 %v414
        %v1103 = vunpack.c.l.b16 %v415
        %v1104 = vunpack.c.h.b16 %v415
        %v1105 = vunpack.c.l.b16 %v416
        %v1106 = vunpack.c.l.b16 %v417
        %v1107 = vunpack.c.h.b16 %v417
        %v1108 = vunpack.c.l.b16 %v418
        %v1109 = vunpack.c.h.b16 %v418
        %v1110 = vunpack.c.l.b16 %v419
        %v1111 = vunpack.c.h.b16 %v419
        %v1112 = vunpack.c.l.b16 %v420
        %v1113 = vunpack.c.l.b16 %v421
        %v1114 = vunpack.c.h.b16 %v421
        %v1115 = vunpack.c.l.b16 %v422
        %v1116 = vunpack.c.h.b16 %v422
        %v1117 = vunpack.c.l.b16 %v423
        %v1118 = vunpack.c.h.b16 %v423
        %v1119 = vunpack.c.l.b16 %v424
        %v1120 = vpack.c.b16 %v1015, %v1008
        %v1121 = vpack.c.b16 %v1016, %v1009
        %v1122 = vpack.c.b16 %v1017, %v1010
        %v1123 = vpack.c.b16 %v1018, %v1011
        %v1124 = vpack.c.b16 %v1019, %v1012
        %v1125 = vpack.c.b16 %v1020, %v1013
        %v1126 = vpack.c.b16 %v1021, %v1014
        %v1127 = vpack.c.b16 %v1029, %v1022
        %v1128 = vpack.c.b16 %v1030, %v1023
        %v1129 = vpack.c.b16 %v1031, %v1024
        %v1130 = vpack.c.b16 %v1032, %v1025
        %v1131 = vpack.c.b16 %v1033, %v1026
        %v1132 = vpack.c.b16 %v1034, %v1027
        %v1133 = vpack.c.b16 %v1035, %v1028
        %v1134 = vpack.c.b16 %v1043, %v1036
        %v1135 = vpack.c.b16 %v1044, %v1037
        %v1136 = vpack.c.b16 %v1045, %v1038
        %v1137 = vpack.c.b16 %v1046, %v1039
        %v1138 = vpack.c.b16 %v1047, %v1040
        %v1139 = vpack.c.b16 %v1048, %v1041
        %v1140 = vpack.c.b16 %v1049, %v1042
        %v1141 = vpack.c.b16 %v1057, %v1050
        %v1142 = vpack.c.b16 %v1058, %v1051
        %v1143 = vpack.c.b16 %v1059, %v1052
        %v1144 = vpack.c.b16 %v1060, %v1053
        %v1145 = vpack.c.b16 %v1061, %v1054
        %v1146 = vpack.c.b16 %v1062, %v1055
        %v1147 = vpack.c.b16 %v1063, %v1056
        %v1148 = vpack.c.b16 %v1071, %v1064
        %v1149 = vpack.c.b16 %v1072, %v1065
        %v1150 = vpack.c.b16 %v1073, %v1066
        %v1151 = vpack.c.b16 %v1074, %v1067
        %v1152 = vpack.c.b16 %v1075, %v1068
        %v1153 = vpack.c.b16 %v1076, %v1069
        %v1154 = vpack.c.b16 %v1077, %v1070
        %v1155 = vpack.c.b16 %v1085, %v1078
        %v1156 = vpack.c.b16 %v1086, %v1079
        %v1157 = vpack.c.b16 %v1087, %v1080
        %v1158 = vpack.c.b16 %v1088, %v1081
        %v1159 = vpack.c.b16 %v1089, %v1082
        %v1160 = vpack.c.b16 %v1090, %v1083
        %v1161 = vpack.c.b16 %v1091, %v1084
        %v1162 = vpack.c.b16 %v1099, %v1092
        %v1163 = vpack.c.b16 %v1100, %v1093
        %v1164 = vpack.c.b16 %v1101, %v1094
        %v1165 = vpack.c.b16 %v1102, %v1095
        %v1166 = vpack.c.b16 %v1103, %v1096
        %v1167 = vpack.c.b16 %v1104, %v1097
        %v1168 = vpack.c.b16 %v1105, %v1098
        %v1169 = vpack.c.b16 %v1113, %v1106
        %v1170 = vpack.c.b16 %v1114, %v1107
        %v1171 = vpack.c.b16 %v1115, %v1108
        %v1172 = vpack.c.b16 %v1116, %v1109
        %v1173 = vpack.c.b16 %v1117, %v1110
        %v1174 = vpack.c.b16 %v1118, %v1111
        %v1175 = vpack.c.b16 %v1119, %v1112
        %1232 = vmatprep.subr.bf16.mxu0 %v1121
        %1233 = vmatpush1.bf16.msra.mxu0 %v1120
        %1234 = vmatprep.subr.bf16.mxu0 %v1128
        %1235 = vmatpush1.bf16.msra.mxu0 %v1127
        %1236 = vmatprep.subr.bf16.mxu0 %v1135
        %1237 = vmatpush1.bf16.msra.mxu0 %v1134
        %1238 = vmatprep.subr.bf16.mxu0 %v1142
        %1239 = vmatpush1.bf16.msra.mxu0 %v1141
        %1240 = vmatprep.subr.bf16.mxu0 %v1149
        %1241 = vmatpush1.bf16.msra.mxu0 %v1148
        %1242 = vmatprep.subr.bf16.mxu0 %v1156
        %1243 = vmatpush1.bf16.msra.mxu0 %v1155
        %1244 = vmatprep.subr.bf16.mxu0 %v1163
        %1245 = vmatpush1.bf16.msra.mxu0 %v1162
        %1246 = vmatprep.subr.bf16.mxu0 %v1170
        %1247 = vmatpush1.bf16.msra.mxu0 %v1169
        %1248 = vmatprep.subr.bf16.mxu0 0
        %1249 = vmatpush1.bf16.msra.mxu0 0
        %1250 = vmatprep.subr.bf16.mxu0 0
        %1251 = vmatpush1.bf16.msra.mxu0 0
        %1252 = vmatprep.subr.bf16.mxu0 0
        %1253 = vmatpush1.bf16.msra.mxu0 0
        %1254 = vmatprep.subr.bf16.mxu0 0
        %1255 = vmatpush1.bf16.msra.mxu0 0
        %1256 = vmatprep.subr.bf16.mxu0 0
        %1257 = vmatpush1.bf16.msra.mxu0 0
        %1258 = vmatprep.subr.bf16.mxu0 0
        %1259 = vmatpush1.bf16.msra.mxu0 0
        %1260 = vmatprep.subr.bf16.mxu0 0
        %1261 = vmatpush1.bf16.msra.mxu0 0
        %1262 = vmatprep.subr.bf16.mxu0 0
        %1263 = vmatpush1.bf16.msra.mxu0 0
        %1264 = vmatprep.mubr.bf16.mxu0 0
        %1265 = vmatmul.mubr.bf16.gmra.mrb[0].mxu0 %v360
        %v1266 = vpop.f32.mrb[0].mxu0
        %v1267 = vadd.f32 %v816, %v1266
        %v1268 = vpop.f32.mrb[0].mxu0
        %v1269 = vadd.f32 %v818, %v1268
        %v1270 = vpop.f32.mrb[0].mxu0
        %v1271 = vpop.f32.mrb[0].mxu0
        %1272 = vdwg.mxu0
        %1273 = vmatprep.subr.bf16.mxu0 %v1123
        %1274 = vmatpush1.bf16.msra.mxu0 %v1122
        %1275 = vmatprep.subr.bf16.mxu0 %v1130
        %1276 = vmatpush1.bf16.msra.mxu0 %v1129
        %1277 = vmatprep.subr.bf16.mxu0 %v1137
        %1278 = vmatpush1.bf16.msra.mxu0 %v1136
        %1279 = vmatprep.subr.bf16.mxu0 %v1144
        %1280 = vmatpush1.bf16.msra.mxu0 %v1143
        %1281 = vmatprep.subr.bf16.mxu0 %v1151
        %1282 = vmatpush1.bf16.msra.mxu0 %v1150
        %1283 = vmatprep.subr.bf16.mxu0 %v1158
        %1284 = vmatpush1.bf16.msra.mxu0 %v1157
        %1285 = vmatprep.subr.bf16.mxu0 %v1165
        %1286 = vmatpush1.bf16.msra.mxu0 %v1164
        %1287 = vmatprep.subr.bf16.mxu0 %v1172
        %1288 = vmatpush1.bf16.msra.mxu0 %v1171
        %1289 = vmatprep.subr.bf16.mxu0 0
        %1290 = vmatpush1.bf16.msra.mxu0 0
        %1291 = vmatprep.subr.bf16.mxu0 0
        %1292 = vmatpush1.bf16.msra.mxu0 0
        %1293 = vmatprep.subr.bf16.mxu0 0
        %1294 = vmatpush1.bf16.msra.mxu0 0
        %1295 = vmatprep.subr.bf16.mxu0 0
        %1296 = vmatpush1.bf16.msra.mxu0 0
        %1297 = vmatprep.subr.bf16.mxu0 0
        %1298 = vmatpush1.bf16.msra.mxu0 0
        %1299 = vmatprep.subr.bf16.mxu0 0
        %1300 = vmatpush1.bf16.msra.mxu0 0
        %1301 = vmatprep.subr.bf16.mxu0 0
        %1302 = vmatpush1.bf16.msra.mxu0 0
        %1303 = vmatprep.subr.bf16.mxu0 0
        %1304 = vmatpush1.bf16.msra.mxu0 0
        %1305 = vmatprep.mubr.bf16.mxu0 0
        %1306 = vmatmul.mubr.bf16.gmra.mrb[0].mxu0 %v360
        %v1307 = vpop.f32.mrb[0].mxu0
        %v1308 = vadd.f32 %v857, %v1307
        %v1309 = vpop.f32.mrb[0].mxu0
        %v1310 = vadd.f32 %v859, %v1309
        %v1311 = vpop.f32.mrb[0].mxu0
        %v1312 = vpop.f32.mrb[0].mxu0
        %1313 = vdwg.mxu0
        %1314 = vmatprep.subr.bf16.mxu0 %v1125
        %1315 = vmatpush1.bf16.msra.mxu0 %v1124
        %1316 = vmatprep.subr.bf16.mxu0 %v1132
        %1317 = vmatpush1.bf16.msra.mxu0 %v1131
        %1318 = vmatprep.subr.bf16.mxu0 %v1139
        %1319 = vmatpush1.bf16.msra.mxu0 %v1138
        %1320 = vmatprep.subr.bf16.mxu0 %v1146
        %1321 = vmatpush1.bf16.msra.mxu0 %v1145
        %1322 = vmatprep.subr.bf16.mxu0 %v1153
        %1323 = vmatpush1.bf16.msra.mxu0 %v1152
        %1324 = vmatprep.subr.bf16.mxu0 %v1160
        %1325 = vmatpush1.bf16.msra.mxu0 %v1159
        %1326 = vmatprep.subr.bf16.mxu0 %v1167
        %1327 = vmatpush1.bf16.msra.mxu0 %v1166
        %1328 = vmatprep.subr.bf16.mxu0 %v1174
        %1329 = vmatpush1.bf16.msra.mxu0 %v1173
        %1330 = vmatprep.subr.bf16.mxu0 0
        %1331 = vmatpush1.bf16.msra.mxu0 0
        %1332 = vmatprep.subr.bf16.mxu0 0
        %1333 = vmatpush1.bf16.msra.mxu0 0
        %1334 = vmatprep.subr.bf16.mxu0 0
        %1335 = vmatpush1.bf16.msra.mxu0 0
        %1336 = vmatprep.subr.bf16.mxu0 0
        %1337 = vmatpush1.bf16.msra.mxu0 0
        %1338 = vmatprep.subr.bf16.mxu0 0
        %1339 = vmatpush1.bf16.msra.mxu0 0
        %1340 = vmatprep.subr.bf16.mxu0 0
        %1341 = vmatpush1.bf16.msra.mxu0 0
        %1342 = vmatprep.subr.bf16.mxu0 0
        %1343 = vmatpush1.bf16.msra.mxu0 0
        %1344 = vmatprep.subr.bf16.mxu0 0
        %1345 = vmatpush1.bf16.msra.mxu0 0
        %1346 = vmatprep.mubr.bf16.mxu0 0
        %1347 = vmatmul.mubr.bf16.gmra.mrb[0].mxu0 %v360
        %v1348 = vpop.f32.mrb[0].mxu0
        %v1349 = vadd.f32 %v898, %v1348
        %v1350 = vpop.f32.mrb[0].mxu0
        %v1351 = vadd.f32 %v900, %v1350
        %v1352 = vpop.f32.mrb[0].mxu0
        %v1353 = vpop.f32.mrb[0].mxu0
        %1354 = vdwg.mxu0
        %1355 = vmatprep.subr.bf16.mxu0 0
        %1356 = vmatpush1.bf16.msra.mxu0 %v1126
        %1357 = vmatprep.subr.bf16.mxu0 0
        %1358 = vmatpush1.bf16.msra.mxu0 %v1133
        %1359 = vmatprep.subr.bf16.mxu0 0
        %1360 = vmatpush1.bf16.msra.mxu0 %v1140
        %1361 = vmatprep.subr.bf16.mxu0 0
        %1362 = vmatpush1.bf16.msra.mxu0 %v1147
        %1363 = vmatprep.subr.bf16.mxu0 0
        %1364 = vmatpush1.bf16.msra.mxu0 %v1154
        %1365 = vmatprep.subr.bf16.mxu0 0
        %1366 = vmatpush1.bf16.msra.mxu0 %v1161
        %1367 = vmatprep.subr.bf16.mxu0 0
        %1368 = vmatpush1.bf16.msra.mxu0 %v1168
        %1369 = vmatprep.subr.bf16.mxu0 0
        %1370 = vmatpush1.bf16.msra.mxu0 %v1175
        %1371 = vmatprep.subr.bf16.mxu0 0
        %1372 = vmatpush1.bf16.msra.mxu0 0
        %1373 = vmatprep.subr.bf16.mxu0 0
        %1374 = vmatpush1.bf16.msra.mxu0 0
        %1375 = vmatprep.subr.bf16.mxu0 0
        %1376 = vmatpush1.bf16.msra.mxu0 0
        %1377 = vmatprep.subr.bf16.mxu0 0
        %1378 = vmatpush1.bf16.msra.mxu0 0
        %1379 = vmatprep.subr.bf16.mxu0 0
        %1380 = vmatpush1.bf16.msra.mxu0 0
        %1381 = vmatprep.subr.bf16.mxu0 0
        %1382 = vmatpush1.bf16.msra.mxu0 0
        %1383 = vmatprep.subr.bf16.mxu0 0
        %1384 = vmatpush1.bf16.msra.mxu0 0
        %1385 = vmatprep.subr.bf16.mxu0 0
        %1386 = vmatpush1.bf16.msra.mxu0 0
        %1387 = vmatprep.mubr.bf16.mxu0 0
        %1388 = vmatmul.mubr.bf16.gmra.mrb[0].mxu0 %v360
        %v1389 = vpop.f32.mrb[0].mxu0
        %v1390 = vadd.f32 %v939, %v1389
        %v1391 = vpop.f32.mrb[0].mxu0
        %v1392 = vpop.f32.mrb[0].mxu0
        %v1393 = vpop.f32.mrb[0].mxu0
        %1394 = vdwg.mxu0
        %s1395 = scalar_lea.vmem %s315, 8 [#allocation2]
        %v1396 = vld [vmem:[%s1395] sm:$0xf]
        %v1397 = vpack.c.bf16 %v1396, %v1396
        %s1398 = scalar_lea.vmem [#allocation5], 896
        %v1399 = vld [vmem:[%s1398] sm:$0xff]
        %v1400 = vld [vmem:[%s1398 + $0x8] sm:$0xff]
        %v1401 = vld [vmem:[%s1398 + $0x10] sm:$0xff]
        %v1402 = vld [vmem:[%s1398 + $0x18] sm:$0xf]
        %v1403 = vld [vmem:[%s1398 + $0x1c] sm:$0xff]
        %v1404 = vld [vmem:[%s1398 + $0x24] sm:$0xff]
        %v1405 = vld [vmem:[%s1398 + $0x2c] sm:$0xff]
        %v1406 = vld [vmem:[%s1398 + $0x34] sm:$0xf]
        %v1407 = vld [vmem:[%s1398 + $0x38] sm:$0xff]
        %v1408 = vld [vmem:[%s1398 + $0x40] sm:$0xff]
        %v1409 = vld [vmem:[%s1398 + $0x48] sm:$0xff]
        %v1410 = vld [vmem:[%s1398 + $0x50] sm:$0xf]
        %v1411 = vld [vmem:[%s1398 + $0x54] sm:$0xff]
        %v1412 = vld [vmem:[%s1398 + $0x5c] sm:$0xff]
        %v1413 = vld [vmem:[%s1398 + $0x64] sm:$0xff]
        %v1414 = vld [vmem:[%s1398 + $0x6c] sm:$0xf]
        %v1415 = vld [vmem:[%s1398 + $0x70] sm:$0xff]
        %v1416 = vld [vmem:[%s1398 + $0x78] sm:$0xff]
        %v1417 = vld [vmem:[%s1398 + $0x80] sm:$0xff]
        %v1418 = vld [vmem:[%s1398 + $0x88] sm:$0xf]
        %v1419 = vld [vmem:[%s1398 + $0x8c] sm:$0xff]
        %v1420 = vld [vmem:[%s1398 + $0x94] sm:$0xff]
        %v1421 = vld [vmem:[%s1398 + $0x9c] sm:$0xff]
        %v1422 = vld [vmem:[%s1398 + $0xa4] sm:$0xf]
        %v1423 = vld [vmem:[%s1398 + $0xa8] sm:$0xff]
        %v1424 = vld [vmem:[%s1398 + $0xb0] sm:$0xff]
        %v1425 = vld [vmem:[%s1398 + $0xb8] sm:$0xff]
        %v1426 = vld [vmem:[%s1398 + $0xc0] sm:$0xf]
        %v1427 = vld [vmem:[%s1398 + $0xc4] sm:$0xff]
        %v1428 = vld [vmem:[%s1398 + $0xcc] sm:$0xff]
        %v1429 = vld [vmem:[%s1398 + $0xd4] sm:$0xff]
        %v1430 = vld [vmem:[%s1398 + $0xdc] sm:$0xf]
        %v1431 = vld [vmem:[%s1398 + $0xe0] sm:$0xff]
        %v1432 = vld [vmem:[%s1398 + $0xe8] sm:$0xff]
        %v1433 = vld [vmem:[%s1398 + $0xf0] sm:$0xff]
        %v1434 = vld [vmem:[%s1398 + $0xf8] sm:$0xf]
        %v1435 = vld [vmem:[%s1398 + $0xfc] sm:$0xff]
        %v1436 = vld [vmem:[%s1398 + $0x104] sm:$0xff]
        %v1437 = vld [vmem:[%s1398 + $0x10c] sm:$0xff]
        %v1438 = vld [vmem:[%s1398 + $0x114] sm:$0xf]
        %v1439 = vld [vmem:[%s1398 + $0x118] sm:$0xff]
        %v1440 = vld [vmem:[%s1398 + $0x120] sm:$0xff]
        %v1441 = vld [vmem:[%s1398 + $0x128] sm:$0xff]
        %v1442 = vld [vmem:[%s1398 + $0x130] sm:$0xf]
        %v1443 = vld [vmem:[%s1398 + $0x134] sm:$0xff]
        %v1444 = vld [vmem:[%s1398 + $0x13c] sm:$0xff]
        %v1445 = vld [vmem:[%s1398 + $0x144] sm:$0xff]
        %v1446 = vld [vmem:[%s1398 + $0x14c] sm:$0xf]
        %v1447 = vld [vmem:[%s1398 + $0x150] sm:$0xff]
        %v1448 = vld [vmem:[%s1398 + $0x158] sm:$0xff]
        %v1449 = vld [vmem:[%s1398 + $0x160] sm:$0xff]
        %v1450 = vld [vmem:[%s1398 + $0x168] sm:$0xf]
        %v1451 = vld [vmem:[%s1398 + $0x16c] sm:$0xff]
        %v1452 = vld [vmem:[%s1398 + $0x174] sm:$0xff]
        %v1453 = vld [vmem:[%s1398 + $0x17c] sm:$0xff]
        %v1454 = vld [vmem:[%s1398 + $0x184] sm:$0xf]
        %v1455 = vld [vmem:[%s1398 + $0x188] sm:$0xff]
        %v1456 = vld [vmem:[%s1398 + $0x190] sm:$0xff]
        %v1457 = vld [vmem:[%s1398 + $0x198] sm:$0xff]
        %v1458 = vld [vmem:[%s1398 + $0x1a0] sm:$0xf]
        %v1459 = vld [vmem:[%s1398 + $0x1a4] sm:$0xff]
        %v1460 = vld [vmem:[%s1398 + $0x1ac] sm:$0xff]
        %v1461 = vld [vmem:[%s1398 + $0x1b4] sm:$0xff]
        %v1462 = vld [vmem:[%s1398 + $0x1bc] sm:$0xf]
        %v1527 = vunpack.c.l.b16 %v1399
        %v1528 = vunpack.c.h.b16 %v1399
        %v1529 = vunpack.c.l.b16 %v1400
        %v1530 = vunpack.c.h.b16 %v1400
        %v1531 = vunpack.c.l.b16 %v1401
        %v1532 = vunpack.c.h.b16 %v1401
        %v1533 = vunpack.c.l.b16 %v1402
        %v1534 = vunpack.c.l.b16 %v1403
        %v1535 = vunpack.c.h.b16 %v1403
        %v1536 = vunpack.c.l.b16 %v1404
        %v1537 = vunpack.c.h.b16 %v1404
        %v1538 = vunpack.c.l.b16 %v1405
        %v1539 = vunpack.c.h.b16 %v1405
        %v1540 = vunpack.c.l.b16 %v1406
        %v1541 = vunpack.c.l.b16 %v1407
        %v1542 = vunpack.c.h.b16 %v1407
        %v1543 = vunpack.c.l.b16 %v1408
        %v1544 = vunpack.c.h.b16 %v1408
        %v1545 = vunpack.c.l.b16 %v1409
        %v1546 = vunpack.c.h.b16 %v1409
        %v1547 = vunpack.c.l.b16 %v1410
        %v1548 = vunpack.c.l.b16 %v1411
        %v1549 = vunpack.c.h.b16 %v1411
        %v1550 = vunpack.c.l.b16 %v1412
        %v1551 = vunpack.c.h.b16 %v1412
        %v1552 = vunpack.c.l.b16 %v1413
        %v1553 = vunpack.c.h.b16 %v1413
        %v1554 = vunpack.c.l.b16 %v1414
        %v1555 = vunpack.c.l.b16 %v1415
        %v1556 = vunpack.c.h.b16 %v1415
        %v1557 = vunpack.c.l.b16 %v1416
        %v1558 = vunpack.c.h.b16 %v1416
        %v1559 = vunpack.c.l.b16 %v1417
        %v1560 = vunpack.c.h.b16 %v1417
        %v1561 = vunpack.c.l.b16 %v1418
        %v1562 = vunpack.c.l.b16 %v1419
        %v1563 = vunpack.c.h.b16 %v1419
        %v1564 = vunpack.c.l.b16 %v1420
        %v1565 = vunpack.c.h.b16 %v1420
        %v1566 = vunpack.c.l.b16 %v1421
        %v1567 = vunpack.c.h.b16 %v1421
        %v1568 = vunpack.c.l.b16 %v1422
        %v1569 = vunpack.c.l.b16 %v1423
        %v1570 = vunpack.c.h.b16 %v1423
        %v1571 = vunpack.c.l.b16 %v1424
        %v1572 = vunpack.c.h.b16 %v1424
        %v1573 = vunpack.c.l.b16 %v1425
        %v1574 = vunpack.c.h.b16 %v1425
        %v1575 = vunpack.c.l.b16 %v1426
        %v1576 = vunpack.c.l.b16 %v1427
        %v1577 = vunpack.c.h.b16 %v1427
        %v1578 = vunpack.c.l.b16 %v1428
        %v1579 = vunpack.c.h.b16 %v1428
        %v1580 = vunpack.c.l.b16 %v1429
        %v1581 = vunpack.c.h.b16 %v1429
        %v1582 = vunpack.c.l.b16 %v1430
        %v1583 = vunpack.c.l.b16 %v1431
        %v1584 = vunpack.c.h.b16 %v1431
        %v1585 = vunpack.c.l.b16 %v1432
        %v1586 = vunpack.c.h.b16 %v1432
        %v1587 = vunpack.c.l.b16 %v1433
        %v1588 = vunpack.c.h.b16 %v1433
        %v1589 = vunpack.c.l.b16 %v1434
        %v1590 = vunpack.c.l.b16 %v1435
        %v1591 = vunpack.c.h.b16 %v1435
        %v1592 = vunpack.c.l.b16 %v1436
        %v1593 = vunpack.c.h.b16 %v1436
        %v1594 = vunpack.c.l.b16 %v1437
        %v1595 = vunpack.c.h.b16 %v1437
        %v1596 = vunpack.c.l.b16 %v1438
        %v1597 = vunpack.c.l.b16 %v1439
        %v1598 = vunpack.c.h.b16 %v1439
        %v1599 = vunpack.c.l.b16 %v1440
        %v1600 = vunpack.c.h.b16 %v1440
        %v1601 = vunpack.c.l.b16 %v1441
        %v1602 = vunpack.c.h.b16 %v1441
        %v1603 = vunpack.c.l.b16 %v1442
        %v1604 = vunpack.c.l.b16 %v1443
        %v1605 = vunpack.c.h.b16 %v1443
        %v1606 = vunpack.c.l.b16 %v1444
        %v1607 = vunpack.c.h.b16 %v1444
        %v1608 = vunpack.c.l.b16 %v1445
        %v1609 = vunpack.c.h.b16 %v1445
        %v1610 = vunpack.c.l.b16 %v1446
        %v1611 = vunpack.c.l.b16 %v1447
        %v1612 = vunpack.c.h.b16 %v1447
        %v1613 = vunpack.c.l.b16 %v1448
        %v1614 = vunpack.c.h.b16 %v1448
        %v1615 = vunpack.c.l.b16 %v1449
        %v1616 = vunpack.c.h.b16 %v1449
        %v1617 = vunpack.c.l.b16 %v1450
        %v1618 = vunpack.c.l.b16 %v1451
        %v1619 = vunpack.c.h.b16 %v1451
        %v1620 = vunpack.c.l.b16 %v1452
        %v1621 = vunpack.c.h.b16 %v1452
        %v1622 = vunpack.c.l.b16 %v1453
        %v1623 = vunpack.c.h.b16 %v1453
        %v1624 = vunpack.c.l.b16 %v1454
        %v1625 = vunpack.c.l.b16 %v1455
        %v1626 = vunpack.c.h.b16 %v1455
        %v1627 = vunpack.c.l.b16 %v1456
        %v1628 = vunpack.c.h.b16 %v1456
        %v1629 = vunpack.c.l.b16 %v1457
        %v1630 = vunpack.c.h.b16 %v1457
        %v1631 = vunpack.c.l.b16 %v1458
        %v1632 = vunpack.c.l.b16 %v1459
        %v1633 = vunpack.c.h.b16 %v1459
        %v1634 = vunpack.c.l.b16 %v1460
        %v1635 = vunpack.c.h.b16 %v1460
        %v1636 = vunpack.c.l.b16 %v1461
        %v1637 = vunpack.c.h.b16 %v1461
        %v1638 = vunpack.c.l.b16 %v1462
        %v1639 = vpack.c.b16 %v1534, %v1527
        %v1640 = vpack.c.b16 %v1535, %v1528
        %v1641 = vpack.c.b16 %v1536, %v1529
        %v1642 = vpack.c.b16 %v1537, %v1530
        %v1643 = vpack.c.b16 %v1538, %v1531
        %v1644 = vpack.c.b16 %v1539, %v1532
        %v1645 = vpack.c.b16 %v1540, %v1533
        %v1646 = vpack.c.b16 %v1548, %v1541
        %v1647 = vpack.c.b16 %v1549, %v1542
        %v1648 = vpack.c.b16 %v1550, %v1543
        %v1649 = vpack.c.b16 %v1551, %v1544
        %v1650 = vpack.c.b16 %v1552, %v1545
        %v1651 = vpack.c.b16 %v1553, %v1546
        %v1652 = vpack.c.b16 %v1554, %v1547
        %v1653 = vpack.c.b16 %v1562, %v1555
        %v1654 = vpack.c.b16 %v1563, %v1556
        %v1655 = vpack.c.b16 %v1564, %v1557
        %v1656 = vpack.c.b16 %v1565, %v1558
        %v1657 = vpack.c.b16 %v1566, %v1559
        %v1658 = vpack.c.b16 %v1567, %v1560
        %v1659 = vpack.c.b16 %v1568, %v1561
        %v1660 = vpack.c.b16 %v1576, %v1569
        %v1661 = vpack.c.b16 %v1577, %v1570
        %v1662 = vpack.c.b16 %v1578, %v1571
        %v1663 = vpack.c.b16 %v1579, %v1572
        %v1664 = vpack.c.b16 %v1580, %v1573
        %v1665 = vpack.c.b16 %v1581, %v1574
        %v1666 = vpack.c.b16 %v1582, %v1575
        %v1667 = vpack.c.b16 %v1590, %v1583
        %v1668 = vpack.c.b16 %v1591, %v1584
        %v1669 = vpack.c.b16 %v1592, %v1585
        %v1670 = vpack.c.b16 %v1593, %v1586
        %v1671 = vpack.c.b16 %v1594, %v1587
        %v1672 = vpack.c.b16 %v1595, %v1588
        %v1673 = vpack.c.b16 %v1596, %v1589
        %v1674 = vpack.c.b16 %v1604, %v1597
        %v1675 = vpack.c.b16 %v1605, %v1598
        %v1676 = vpack.c.b16 %v1606, %v1599
        %v1677 = vpack.c.b16 %v1607, %v1600
        %v1678 = vpack.c.b16 %v1608, %v1601
        %v1679 = vpack.c.b16 %v1609, %v1602
        %v1680 = vpack.c.b16 %v1610, %v1603
        %v1681 = vpack.c.b16 %v1618, %v1611
        %v1682 = vpack.c.b16 %v1619, %v1612
        %v1683 = vpack.c.b16 %v1620, %v1613
        %v1684 = vpack.c.b16 %v1621, %v1614
        %v1685 = vpack.c.b16 %v1622, %v1615
        %v1686 = vpack.c.b16 %v1623, %v1616
        %v1687 = vpack.c.b16 %v1624, %v1617
        %v1688 = vpack.c.b16 %v1632, %v1625
        %v1689 = vpack.c.b16 %v1633, %v1626
        %v1690 = vpack.c.b16 %v1634, %v1627
        %v1691 = vpack.c.b16 %v1635, %v1628
        %v1692 = vpack.c.b16 %v1636, %v1629
        %v1693 = vpack.c.b16 %v1637, %v1630
        %v1694 = vpack.c.b16 %v1638, %v1631
        %1751 = vmatprep.subr.bf16.mxu0 %v1640
        %1752 = vmatpush1.bf16.msra.mxu0 %v1639
        %1753 = vmatprep.subr.bf16.mxu0 %v1647
        %1754 = vmatpush1.bf16.msra.mxu0 %v1646
        %1755 = vmatprep.subr.bf16.mxu0 %v1654
        %1756 = vmatpush1.bf16.msra.mxu0 %v1653
        %1757 = vmatprep.subr.bf16.mxu0 %v1661
        %1758 = vmatpush1.bf16.msra.mxu0 %v1660
        %1759 = vmatprep.subr.bf16.mxu0 %v1668
        %1760 = vmatpush1.bf16.msra.mxu0 %v1667
        %1761 = vmatprep.subr.bf16.mxu0 %v1675
        %1762 = vmatpush1.bf16.msra.mxu0 %v1674
        %1763 = vmatprep.subr.bf16.mxu0 %v1682
        %1764 = vmatpush1.bf16.msra.mxu0 %v1681
        %1765 = vmatprep.subr.bf16.mxu0 %v1689
        %1766 = vmatpush1.bf16.msra.mxu0 %v1688
        %1767 = vmatprep.subr.bf16.mxu0 0
        %1768 = vmatpush1.bf16.msra.mxu0 0
        %1769 = vmatprep.subr.bf16.mxu0 0
        %1770 = vmatpush1.bf16.msra.mxu0 0
        %1771 = vmatprep.subr.bf16.mxu0 0
        %1772 = vmatpush1.bf16.msra.mxu0 0
        %1773 = vmatprep.subr.bf16.mxu0 0
        %1774 = vmatpush1.bf16.msra.mxu0 0
        %1775 = vmatprep.subr.bf16.mxu0 0
        %1776 = vmatpush1.bf16.msra.mxu0 0
        %1777 = vmatprep.subr.bf16.mxu0 0
        %1778 = vmatpush1.bf16.msra.mxu0 0
        %1779 = vmatprep.subr.bf16.mxu0 0
        %1780 = vmatpush1.bf16.msra.mxu0 0
        %1781 = vmatprep.subr.bf16.mxu0 0
        %1782 = vmatpush1.bf16.msra.mxu0 0
        %1783 = vmatprep.mubr.bf16.mxu0 0
        %1784 = vmatmul.mubr.bf16.gmra.mrb[0].mxu0 %v1397
        %v1785 = vpop.f32.mrb[0].mxu0
        %v1786 = vadd.f32 0.0, %v1785
        %v1787 = vpop.f32.mrb[0].mxu0
        %v1788 = vadd.f32 0.0, %v1787
        %v1789 = vpop.f32.mrb[0].mxu0
        %v1790 = vpop.f32.mrb[0].mxu0
        %1791 = vdwg.mxu0
        %1792 = vmatprep.subr.bf16.mxu0 %v1642
        %1793 = vmatpush1.bf16.msra.mxu0 %v1641
        %1794 = vmatprep.subr.bf16.mxu0 %v1649
        %1795 = vmatpush1.bf16.msra.mxu0 %v1648
        %1796 = vmatprep.subr.bf16.mxu0 %v1656
        %1797 = vmatpush1.bf16.msra.mxu0 %v1655
        %1798 = vmatprep.subr.bf16.mxu0 %v1663
        %1799 = vmatpush1.bf16.msra.mxu0 %v1662
        %1800 = vmatprep.subr.bf16.mxu0 %v1670
        %1801 = vmatpush1.bf16.msra.mxu0 %v1669
        %1802 = vmatprep.subr.bf16.mxu0 %v1677
        %1803 = vmatpush1.bf16.msra.mxu0 %v1676
        %1804 = vmatprep.subr.bf16.mxu0 %v1684
        %1805 = vmatpush1.bf16.msra.mxu0 %v1683
        %1806 = vmatprep.subr.bf16.mxu0 %v1691
        %1807 = vmatpush1.bf16.msra.mxu0 %v1690
        %1808 = vmatprep.subr.bf16.mxu0 0
        %1809 = vmatpush1.bf16.msra.mxu0 0
        %1810 = vmatprep.subr.bf16.mxu0 0
        %1811 = vmatpush1.bf16.msra.mxu0 0
        %1812 = vmatprep.subr.bf16.mxu0 0
        %1813 = vmatpush1.bf16.msra.mxu0 0
        %1814 = vmatprep.subr.bf16.mxu0 0
        %1815 = vmatpush1.bf16.msra.mxu0 0
        %1816 = vmatprep.subr.bf16.mxu0 0
        %1817 = vmatpush1.bf16.msra.mxu0 0
        %1818 = vmatprep.subr.bf16.mxu0 0
        %1819 = vmatpush1.bf16.msra.mxu0 0
        %1820 = vmatprep.subr.bf16.mxu0 0
        %1821 = vmatpush1.bf16.msra.mxu0 0
        %1822 = vmatprep.subr.bf16.mxu0 0
        %1823 = vmatpush1.bf16.msra.mxu0 0
        %1824 = vmatprep.mubr.bf16.mxu0 0
        %1825 = vmatmul.mubr.bf16.gmra.mrb[0].mxu0 %v1397
        %v1826 = vpop.f32.mrb[0].mxu0
        %v1827 = vadd.f32 0.0, %v1826
        %v1828 = vpop.f32.mrb[0].mxu0
        %v1829 = vadd.f32 0.0, %v1828
        %v1830 = vpop.f32.mrb[0].mxu0
        %v1831 = vpop.f32.mrb[0].mxu0
        %1832 = vdwg.mxu0
        %1833 = vmatprep.subr.bf16.mxu0 %v1644
        %1834 = vmatpush1.bf16.msra.mxu0 %v1643
        %1835 = vmatprep.subr.bf16.mxu0 %v1651
        %1836 = vmatpush1.bf16.msra.mxu0 %v1650
        %1837 = vmatprep.subr.bf16.mxu0 %v1658
        %1838 = vmatpush1.bf16.msra.mxu0 %v1657
        %1839 = vmatprep.subr.bf16.mxu0 %v1665
        %1840 = vmatpush1.bf16.msra.mxu0 %v1664
        %1841 = vmatprep.subr.bf16.mxu0 %v1672
        %1842 = vmatpush1.bf16.msra.mxu0 %v1671
        %1843 = vmatprep.subr.bf16.mxu0 %v1679
        %1844 = vmatpush1.bf16.msra.mxu0 %v1678
        %1845 = vmatprep.subr.bf16.mxu0 %v1686
        %1846 = vmatpush1.bf16.msra.mxu0 %v1685
        %1847 = vmatprep.subr.bf16.mxu0 %v1693
        %1848 = vmatpush1.bf16.msra.mxu0 %v1692
        %1849 = vmatprep.subr.bf16.mxu0 0
        %1850 = vmatpush1.bf16.msra.mxu0 0
        %1851 = vmatprep.subr.bf16.mxu0 0
        %1852 = vmatpush1.bf16.msra.mxu0 0
        %1853 = vmatprep.subr.bf16.mxu0 0
        %1854 = vmatpush1.bf16.msra.mxu0 0
        %1855 = vmatprep.subr.bf16.mxu0 0
        %1856 = vmatpush1.bf16.msra.mxu0 0
        %1857 = vmatprep.subr.bf16.mxu0 0
        %1858 = vmatpush1.bf16.msra.mxu0 0
        %1859 = vmatprep.subr.bf16.mxu0 0
        %1860 = vmatpush1.bf16.msra.mxu0 0
        %1861 = vmatprep.subr.bf16.mxu0 0
        %1862 = vmatpush1.bf16.msra.mxu0 0
        %1863 = vmatprep.subr.bf16.mxu0 0
        %1864 = vmatpush1.bf16.msra.mxu0 0
        %1865 = vmatprep.mubr.bf16.mxu0 0
        %1866 = vmatmul.mubr.bf16.gmra.mrb[0].mxu0 %v1397
        %v1867 = vpop.f32.mrb[0].mxu0
        %v1868 = vadd.f32 0.0, %v1867
        %v1869 = vpop.f32.mrb[0].mxu0
        %v1870 = vadd.f32 0.0, %v1869
        %v1871 = vpop.f32.mrb[0].mxu0
        %v1872 = vpop.f32.mrb[0].mxu0
        %1873 = vdwg.mxu0
        %1874 = vmatprep.subr.bf16.mxu0 0
        %1875 = vmatpush1.bf16.msra.mxu0 %v1645
        %1876 = vmatprep.subr.bf16.mxu0 0
        %1877 = vmatpush1.bf16.msra.mxu0 %v1652
        %1878 = vmatprep.subr.bf16.mxu0 0
        %1879 = vmatpush1.bf16.msra.mxu0 %v1659
        %1880 = vmatprep.subr.bf16.mxu0 0
        %1881 = vmatpush1.bf16.msra.mxu0 %v1666
        %1882 = vmatprep.subr.bf16.mxu0 0
        %1883 = vmatpush1.bf16.msra.mxu0 %v1673
        %1884 = vmatprep.subr.bf16.mxu0 0
        %1885 = vmatpush1.bf16.msra.mxu0 %v1680
        %1886 = vmatprep.subr.bf16.mxu0 0
        %1887 = vmatpush1.bf16.msra.mxu0 %v1687
        %1888 = vmatprep.subr.bf16.mxu0 0
        %1889 = vmatpush1.bf16.msra.mxu0 %v1694
        %1890 = vmatprep.subr.bf16.mxu0 0
        %1891 = vmatpush1.bf16.msra.mxu0 0
        %1892 = vmatprep.subr.bf16.mxu0 0
        %1893 = vmatpush1.bf16.msra.mxu0 0
        %1894 = vmatprep.subr.bf16.mxu0 0
        %1895 = vmatpush1.bf16.msra.mxu0 0
        %1896 = vmatprep.subr.bf16.mxu0 0
        %1897 = vmatpush1.bf16.msra.mxu0 0
        %1898 = vmatprep.subr.bf16.mxu0 0
        %1899 = vmatpush1.bf16.msra.mxu0 0
        %1900 = vmatprep.subr.bf16.mxu0 0
        %1901 = vmatpush1.bf16.msra.mxu0 0
        %1902 = vmatprep.subr.bf16.mxu0 0
        %1903 = vmatpush1.bf16.msra.mxu0 0
        %1904 = vmatprep.subr.bf16.mxu0 0
        %1905 = vmatpush1.bf16.msra.mxu0 0
        %1906 = vmatprep.mubr.bf16.mxu0 0
        %1907 = vmatmul.mubr.bf16.gmra.mrb[0].mxu0 %v1397
        %v1908 = vpop.f32.mrb[0].mxu0
        %v1909 = vadd.f32 0.0, %v1908
        %v1910 = vpop.f32.mrb[0].mxu0
        %v1911 = vpop.f32.mrb[0].mxu0
        %v1912 = vpop.f32.mrb[0].mxu0
        %1913 = vdwg.mxu0
        %v1914 = vadd.f32 %v1267, %v1786
        %v1915 = vadd.f32 %v1269, %v1788
        %v1916 = vadd.f32 %v1308, %v1827
        %v1917 = vadd.f32 %v1310, %v1829
        %v1918 = vadd.f32 %v1349, %v1868
        %v1919 = vadd.f32 %v1351, %v1870
        %v1920 = vadd.f32 %v1390, %v1909
        %s1921 = scalar_lea.vmem %s315, 12 [#allocation2]
        %v1922 = vld [vmem:[%s1921] sm:$0xf]
        %v1923 = vpack.c.bf16 %v1922, %v1922
        %s1924 = scalar_lea.vmem [#allocation5], 1344
        %v1925 = vld [vmem:[%s1924] sm:$0xff]
        %v1926 = vld [vmem:[%s1924 + $0x8] sm:$0xff]
        %v1927 = vld [vmem:[%s1924 + $0x10] sm:$0xff]
        %v1928 = vld [vmem:[%s1924 + $0x18] sm:$0xf]
        %v1929 = vld [vmem:[%s1924 + $0x1c] sm:$0xff]
        %v1930 = vld [vmem:[%s1924 + $0x24] sm:$0xff]
        %v1931 = vld [vmem:[%s1924 + $0x2c] sm:$0xff]
        %v1932 = vld [vmem:[%s1924 + $0x34] sm:$0xf]
        %v1933 = vld [vmem:[%s1924 + $0x38] sm:$0xff]
        %v1934 = vld [vmem:[%s1924 + $0x40] sm:$0xff]
        %v1935 = vld [vmem:[%s1924 + $0x48] sm:$0xff]
        %v1936 = vld [vmem:[%s1924 + $0x50] sm:$0xf]
        %v1937 = vld [vmem:[%s1924 + $0x54] sm:$0xff]
        %v1938 = vld [vmem:[%s1924 + $0x5c] sm:$0xff]
        %v1939 = vld [vmem:[%s1924 + $0x64] sm:$0xff]
        %v1940 = vld [vmem:[%s1924 + $0x6c] sm:$0xf]
        %v1941 = vld [vmem:[%s1924 + $0x70] sm:$0xff]
        %v1942 = vld [vmem:[%s1924 + $0x78] sm:$0xff]
        %v1943 = vld [vmem:[%s1924 + $0x80] sm:$0xff]
        %v1944 = vld [vmem:[%s1924 + $0x88] sm:$0xf]
        %v1945 = vld [vmem:[%s1924 + $0x8c] sm:$0xff]
        %v1946 = vld [vmem:[%s1924 + $0x94] sm:$0xff]
        %v1947 = vld [vmem:[%s1924 + $0x9c] sm:$0xff]
        %v1948 = vld [vmem:[%s1924 + $0xa4] sm:$0xf]
        %v1949 = vld [vmem:[%s1924 + $0xa8] sm:$0xff]
        %v1950 = vld [vmem:[%s1924 + $0xb0] sm:$0xff]
        %v1951 = vld [vmem:[%s1924 + $0xb8] sm:$0xff]
        %v1952 = vld [vmem:[%s1924 + $0xc0] sm:$0xf]
        %v1953 = vld [vmem:[%s1924 + $0xc4] sm:$0xff]
        %v1954 = vld [vmem:[%s1924 + $0xcc] sm:$0xff]
        %v1955 = vld [vmem:[%s1924 + $0xd4] sm:$0xff]
        %v1956 = vld [vmem:[%s1924 + $0xdc] sm:$0xf]
        %v1957 = vld [vmem:[%s1924 + $0xe0] sm:$0xff]
        %v1958 = vld [vmem:[%s1924 + $0xe8] sm:$0xff]
        %v1959 = vld [vmem:[%s1924 + $0xf0] sm:$0xff]
        %v1960 = vld [vmem:[%s1924 + $0xf8] sm:$0xf]
        %v1961 = vld [vmem:[%s1924 + $0xfc] sm:$0xff]
        %v1962 = vld [vmem:[%s1924 + $0x104] sm:$0xff]
        %v1963 = vld [vmem:[%s1924 + $0x10c] sm:$0xff]
        %v1964 = vld [vmem:[%s1924 + $0x114] sm:$0xf]
        %v1965 = vld [vmem:[%s1924 + $0x118] sm:$0xff]
        %v1966 = vld [vmem:[%s1924 + $0x120] sm:$0xff]
        %v1967 = vld [vmem:[%s1924 + $0x128] sm:$0xff]
        %v1968 = vld [vmem:[%s1924 + $0x130] sm:$0xf]
        %v1969 = vld [vmem:[%s1924 + $0x134] sm:$0xff]
        %v1970 = vld [vmem:[%s1924 + $0x13c] sm:$0xff]
        %v1971 = vld [vmem:[%s1924 + $0x144] sm:$0xff]
        %v1972 = vld [vmem:[%s1924 + $0x14c] sm:$0xf]
        %v1973 = vld [vmem:[%s1924 + $0x150] sm:$0xff]
        %v1974 = vld [vmem:[%s1924 + $0x158] sm:$0xff]
        %v1975 = vld [vmem:[%s1924 + $0x160] sm:$0xff]
        %v1976 = vld [vmem:[%s1924 + $0x168] sm:$0xf]
        %v1977 = vld [vmem:[%s1924 + $0x16c] sm:$0xff]
        %v1978 = vld [vmem:[%s1924 + $0x174] sm:$0xff]
        %v1979 = vld [vmem:[%s1924 + $0x17c] sm:$0xff]
        %v1980 = vld [vmem:[%s1924 + $0x184] sm:$0xf]
        %v1981 = vld [vmem:[%s1924 + $0x188] sm:$0xff]
        %v1982 = vld [vmem:[%s1924 + $0x190] sm:$0xff]
        %v1983 = vld [vmem:[%s1924 + $0x198] sm:$0xff]
        %v1984 = vld [vmem:[%s1924 + $0x1a0] sm:$0xf]
        %v1985 = vld [vmem:[%s1924 + $0x1a4] sm:$0xff]
        %v1986 = vld [vmem:[%s1924 + $0x1ac] sm:$0xff]
        %v1987 = vld [vmem:[%s1924 + $0x1b4] sm:$0xff]
        %v1988 = vld [vmem:[%s1924 + $0x1bc] sm:$0xf]
        %v2053 = vunpack.c.l.b16 %v1925
        %v2054 = vunpack.c.h.b16 %v1925
        %v2055 = vunpack.c.l.b16 %v1926
        %v2056 = vunpack.c.h.b16 %v1926
        %v2057 = vunpack.c.l.b16 %v1927
        %v2058 = vunpack.c.h.b16 %v1927
        %v2059 = vunpack.c.l.b16 %v1928
        %v2060 = vunpack.c.l.b16 %v1929
        %v2061 = vunpack.c.h.b16 %v1929
        %v2062 = vunpack.c.l.b16 %v1930
        %v2063 = vunpack.c.h.b16 %v1930
        %v2064 = vunpack.c.l.b16 %v1931
        %v2065 = vunpack.c.h.b16 %v1931
        %v2066 = vunpack.c.l.b16 %v1932
        %v2067 = vunpack.c.l.b16 %v1933
        %v2068 = vunpack.c.h.b16 %v1933
        %v2069 = vunpack.c.l.b16 %v1934
        %v2070 = vunpack.c.h.b16 %v1934
        %v2071 = vunpack.c.l.b16 %v1935
        %v2072 = vunpack.c.h.b16 %v1935
        %v2073 = vunpack.c.l.b16 %v1936
        %v2074 = vunpack.c.l.b16 %v1937
        %v2075 = vunpack.c.h.b16 %v1937
        %v2076 = vunpack.c.l.b16 %v1938
        %v2077 = vunpack.c.h.b16 %v1938
        %v2078 = vunpack.c.l.b16 %v1939
        %v2079 = vunpack.c.h.b16 %v1939
        %v2080 = vunpack.c.l.b16 %v1940
        %v2081 = vunpack.c.l.b16 %v1941
        %v2082 = vunpack.c.h.b16 %v1941
        %v2083 = vunpack.c.l.b16 %v1942
        %v2084 = vunpack.c.h.b16 %v1942
        %v2085 = vunpack.c.l.b16 %v1943
        %v2086 = vunpack.c.h.b16 %v1943
        %v2087 = vunpack.c.l.b16 %v1944
        %v2088 = vunpack.c.l.b16 %v1945
        %v2089 = vunpack.c.h.b16 %v1945
        %v2090 = vunpack.c.l.b16 %v1946
        %v2091 = vunpack.c.h.b16 %v1946
        %v2092 = vunpack.c.l.b16 %v1947
        %v2093 = vunpack.c.h.b16 %v1947
        %v2094 = vunpack.c.l.b16 %v1948
        %v2095 = vunpack.c.l.b16 %v1949
        %v2096 = vunpack.c.h.b16 %v1949
        %v2097 = vunpack.c.l.b16 %v1950
        %v2098 = vunpack.c.h.b16 %v1950
        %v2099 = vunpack.c.l.b16 %v1951
        %v2100 = vunpack.c.h.b16 %v1951
        %v2101 = vunpack.c.l.b16 %v1952
        %v2102 = vunpack.c.l.b16 %v1953
        %v2103 = vunpack.c.h.b16 %v1953
        %v2104 = vunpack.c.l.b16 %v1954
        %v2105 = vunpack.c.h.b16 %v1954
        %v2106 = vunpack.c.l.b16 %v1955
        %v2107 = vunpack.c.h.b16 %v1955
        %v2108 = vunpack.c.l.b16 %v1956
        %v2109 = vunpack.c.l.b16 %v1957
        %v2110 = vunpack.c.h.b16 %v1957
        %v2111 = vunpack.c.l.b16 %v1958
        %v2112 = vunpack.c.h.b16 %v1958
        %v2113 = vunpack.c.l.b16 %v1959
        %v2114 = vunpack.c.h.b16 %v1959
        %v2115 = vunpack.c.l.b16 %v1960
        %v2116 = vunpack.c.l.b16 %v1961
        %v2117 = vunpack.c.h.b16 %v1961
        %v2118 = vunpack.c.l.b16 %v1962
        %v2119 = vunpack.c.h.b16 %v1962
        %v2120 = vunpack.c.l.b16 %v1963
        %v2121 = vunpack.c.h.b16 %v1963
        %v2122 = vunpack.c.l.b16 %v1964
        %v2123 = vunpack.c.l.b16 %v1965
        %v2124 = vunpack.c.h.b16 %v1965
        %v2125 = vunpack.c.l.b16 %v1966
        %v2126 = vunpack.c.h.b16 %v1966
        %v2127 = vunpack.c.l.b16 %v1967
        %v2128 = vunpack.c.h.b16 %v1967
        %v2129 = vunpack.c.l.b16 %v1968
        %v2130 = vunpack.c.l.b16 %v1969
        %v2131 = vunpack.c.h.b16 %v1969
        %v2132 = vunpack.c.l.b16 %v1970
        %v2133 = vunpack.c.h.b16 %v1970
        %v2134 = vunpack.c.l.b16 %v1971
        %v2135 = vunpack.c.h.b16 %v1971
        %v2136 = vunpack.c.l.b16 %v1972
        %v2137 = vunpack.c.l.b16 %v1973
        %v2138 = vunpack.c.h.b16 %v1973
        %v2139 = vunpack.c.l.b16 %v1974
        %v2140 = vunpack.c.h.b16 %v1974
        %v2141 = vunpack.c.l.b16 %v1975
        %v2142 = vunpack.c.h.b16 %v1975
        %v2143 = vunpack.c.l.b16 %v1976
        %v2144 = vunpack.c.l.b16 %v1977
        %v2145 = vunpack.c.h.b16 %v1977
        %v2146 = vunpack.c.l.b16 %v1978
        %v2147 = vunpack.c.h.b16 %v1978
        %v2148 = vunpack.c.l.b16 %v1979
        %v2149 = vunpack.c.h.b16 %v1979
        %v2150 = vunpack.c.l.b16 %v1980
        %v2151 = vunpack.c.l.b16 %v1981
        %v2152 = vunpack.c.h.b16 %v1981
        %v2153 = vunpack.c.l.b16 %v1982
        %v2154 = vunpack.c.h.b16 %v1982
        %v2155 = vunpack.c.l.b16 %v1983
        %v2156 = vunpack.c.h.b16 %v1983
        %v2157 = vunpack.c.l.b16 %v1984
        %v2158 = vunpack.c.l.b16 %v1985
        %v2159 = vunpack.c.h.b16 %v1985
        %v2160 = vunpack.c.l.b16 %v1986
        %v2161 = vunpack.c.h.b16 %v1986
        %v2162 = vunpack.c.l.b16 %v1987
        %v2163 = vunpack.c.h.b16 %v1987
        %v2164 = vunpack.c.l.b16 %v1988
        %v2165 = vpack.c.b16 %v2060, %v2053
        %v2166 = vpack.c.b16 %v2061, %v2054
        %v2167 = vpack.c.b16 %v2062, %v2055
        %v2168 = vpack.c.b16 %v2063, %v2056
        %v2169 = vpack.c.b16 %v2064, %v2057
        %v2170 = vpack.c.b16 %v2065, %v2058
        %v2171 = vpack.c.b16 %v2066, %v2059
        %v2172 = vpack.c.b16 %v2074, %v2067
        %v2173 = vpack.c.b16 %v2075, %v2068
        %v2174 = vpack.c.b16 %v2076, %v2069
        %v2175 = vpack.c.b16 %v2077, %v2070
        %v2176 = vpack.c.b16 %v2078, %v2071
        %v2177 = vpack.c.b16 %v2079, %v2072
        %v2178 = vpack.c.b16 %v2080, %v2073
        %v2179 = vpack.c.b16 %v2088, %v2081
        %v2180 = vpack.c.b16 %v2089, %v2082
        %v2181 = vpack.c.b16 %v2090, %v2083
        %v2182 = vpack.c.b16 %v2091, %v2084
        %v2183 = vpack.c.b16 %v2092, %v2085
        %v2184 = vpack.c.b16 %v2093, %v2086
        %v2185 = vpack.c.b16 %v2094, %v2087
        %v2186 = vpack.c.b16 %v2102, %v2095
        %v2187 = vpack.c.b16 %v2103, %v2096
        %v2188 = vpack.c.b16 %v2104, %v2097
        %v2189 = vpack.c.b16 %v2105, %v2098
        %v2190 = vpack.c.b16 %v2106, %v2099
        %v2191 = vpack.c.b16 %v2107, %v2100
        %v2192 = vpack.c.b16 %v2108, %v2101
        %v2193 = vpack.c.b16 %v2116, %v2109
        %v2194 = vpack.c.b16 %v2117, %v2110
        %v2195 = vpack.c.b16 %v2118, %v2111
        %v2196 = vpack.c.b16 %v2119, %v2112
        %v2197 = vpack.c.b16 %v2120, %v2113
        %v2198 = vpack.c.b16 %v2121, %v2114
        %v2199 = vpack.c.b16 %v2122, %v2115
        %v2200 = vpack.c.b16 %v2130, %v2123
        %v2201 = vpack.c.b16 %v2131, %v2124
        %v2202 = vpack.c.b16 %v2132, %v2125
        %v2203 = vpack.c.b16 %v2133, %v2126
        %v2204 = vpack.c.b16 %v2134, %v2127
        %v2205 = vpack.c.b16 %v2135, %v2128
        %v2206 = vpack.c.b16 %v2136, %v2129
        %v2207 = vpack.c.b16 %v2144, %v2137
        %v2208 = vpack.c.b16 %v2145, %v2138
        %v2209 = vpack.c.b16 %v2146, %v2139
        %v2210 = vpack.c.b16 %v2147, %v2140
        %v2211 = vpack.c.b16 %v2148, %v2141
        %v2212 = vpack.c.b16 %v2149, %v2142
        %v2213 = vpack.c.b16 %v2150, %v2143
        %v2214 = vpack.c.b16 %v2158, %v2151
        %v2215 = vpack.c.b16 %v2159, %v2152
        %v2216 = vpack.c.b16 %v2160, %v2153
        %v2217 = vpack.c.b16 %v2161, %v2154
        %v2218 = vpack.c.b16 %v2162, %v2155
        %v2219 = vpack.c.b16 %v2163, %v2156
        %v2220 = vpack.c.b16 %v2164, %v2157
        %2277 = vmatprep.subr.bf16.mxu0 %v2166
        %2278 = vmatpush1.bf16.msra.mxu0 %v2165
        %2279 = vmatprep.subr.bf16.mxu0 %v2173
        %2280 = vmatpush1.bf16.msra.mxu0 %v2172
        %2281 = vmatprep.subr.bf16.mxu0 %v2180
        %2282 = vmatpush1.bf16.msra.mxu0 %v2179
        %2283 = vmatprep.subr.bf16.mxu0 %v2187
        %2284 = vmatpush1.bf16.msra.mxu0 %v2186
        %2285 = vmatprep.subr.bf16.mxu0 %v2194
        %2286 = vmatpush1.bf16.msra.mxu0 %v2193
        %2287 = vmatprep.subr.bf16.mxu0 %v2201
        %2288 = vmatpush1.bf16.msra.mxu0 %v2200
        %2289 = vmatprep.subr.bf16.mxu0 %v2208
        %2290 = vmatpush1.bf16.msra.mxu0 %v2207
        %2291 = vmatprep.subr.bf16.mxu0 %v2215
        %2292 = vmatpush1.bf16.msra.mxu0 %v2214
        %2293 = vmatprep.subr.bf16.mxu0 0
        %2294 = vmatpush1.bf16.msra.mxu0 0
        %2295 = vmatprep.subr.bf16.mxu0 0
        %2296 = vmatpush1.bf16.msra.mxu0 0
        %2297 = vmatprep.subr.bf16.mxu0 0
        %2298 = vmatpush1.bf16.msra.mxu0 0
        %2299 = vmatprep.subr.bf16.mxu0 0
        %2300 = vmatpush1.bf16.msra.mxu0 0
        %2301 = vmatprep.subr.bf16.mxu0 0
        %2302 = vmatpush1.bf16.msra.mxu0 0
        %2303 = vmatprep.subr.bf16.mxu0 0
        %2304 = vmatpush1.bf16.msra.mxu0 0
        %2305 = vmatprep.subr.bf16.mxu0 0
        %2306 = vmatpush1.bf16.msra.mxu0 0
        %2307 = vmatprep.subr.bf16.mxu0 0
        %2308 = vmatpush1.bf16.msra.mxu0 0
        %2309 = vmatprep.mubr.bf16.mxu0 0
        %2310 = vmatmul.mubr.bf16.gmra.mrb[0].mxu0 %v1923
        %v2311 = vpop.f32.mrb[0].mxu0
        %v2312 = vadd.f32 0.0, %v2311
        %v2313 = vpop.f32.mrb[0].mxu0
        %v2314 = vadd.f32 0.0, %v2313
        %v2315 = vpop.f32.mrb[0].mxu0
        %v2316 = vpop.f32.mrb[0].mxu0
        %2317 = vdwg.mxu0
        %2318 = vmatprep.subr.bf16.mxu0 %v2168
        %2319 = vmatpush1.bf16.msra.mxu0 %v2167
        %2320 = vmatprep.subr.bf16.mxu0 %v2175
        %2321 = vmatpush1.bf16.msra.mxu0 %v2174
        %2322 = vmatprep.subr.bf16.mxu0 %v2182
        %2323 = vmatpush1.bf16.msra.mxu0 %v2181
        %2324 = vmatprep.subr.bf16.mxu0 %v2189
        %2325 = vmatpush1.bf16.msra.mxu0 %v2188
        %2326 = vmatprep.subr.bf16.mxu0 %v2196
        %2327 = vmatpush1.bf16.msra.mxu0 %v2195
        %2328 = vmatprep.subr.bf16.mxu0 %v2203
        %2329 = vmatpush1.bf16.msra.mxu0 %v2202
        %2330 = vmatprep.subr.bf16.mxu0 %v2210
        %2331 = vmatpush1.bf16.msra.mxu0 %v2209
        %2332 = vmatprep.subr.bf16.mxu0 %v2217
        %2333 = vmatpush1.bf16.msra.mxu0 %v2216
        %2334 = vmatprep.subr.bf16.mxu0 0
        %2335 = vmatpush1.bf16.msra.mxu0 0
        %2336 = vmatprep.subr.bf16.mxu0 0
        %2337 = vmatpush1.bf16.msra.mxu0 0
        %2338 = vmatprep.subr.bf16.mxu0 0
        %2339 = vmatpush1.bf16.msra.mxu0 0
        %2340 = vmatprep.subr.bf16.mxu0 0
        %2341 = vmatpush1.bf16.msra.mxu0 0
        %2342 = vmatprep.subr.bf16.mxu0 0
        %2343 = vmatpush1.bf16.msra.mxu0 0
        %2344 = vmatprep.subr.bf16.mxu0 0
        %2345 = vmatpush1.bf16.msra.mxu0 0
        %2346 = vmatprep.subr.bf16.mxu0 0
        %2347 = vmatpush1.bf16.msra.mxu0 0
        %2348 = vmatprep.subr.bf16.mxu0 0
        %2349 = vmatpush1.bf16.msra.mxu0 0
        %2350 = vmatprep.mubr.bf16.mxu0 0
        %2351 = vmatmul.mubr.bf16.gmra.mrb[0].mxu0 %v1923
        %v2352 = vpop.f32.mrb[0].mxu0
        %v2353 = vadd.f32 0.0, %v2352
        %v2354 = vpop.f32.mrb[0].mxu0
        %v2355 = vadd.f32 0.0, %v2354
        %v2356 = vpop.f32.mrb[0].mxu0
        %v2357 = vpop.f32.mrb[0].mxu0
        %2358 = vdwg.mxu0
        %2359 = vmatprep.subr.bf16.mxu0 %v2170
        %2360 = vmatpush1.bf16.msra.mxu0 %v2169
        %2361 = vmatprep.subr.bf16.mxu0 %v2177
        %2362 = vmatpush1.bf16.msra.mxu0 %v2176
        %2363 = vmatprep.subr.bf16.mxu0 %v2184
        %2364 = vmatpush1.bf16.msra.mxu0 %v2183
        %2365 = vmatprep.subr.bf16.mxu0 %v2191
        %2366 = vmatpush1.bf16.msra.mxu0 %v2190
        %2367 = vmatprep.subr.bf16.mxu0 %v2198
        %2368 = vmatpush1.bf16.msra.mxu0 %v2197
        %2369 = vmatprep.subr.bf16.mxu0 %v2205
        %2370 = vmatpush1.bf16.msra.mxu0 %v2204
        %2371 = vmatprep.subr.bf16.mxu0 %v2212
        %2372 = vmatpush1.bf16.msra.mxu0 %v2211
        %2373 = vmatprep.subr.bf16.mxu0 %v2219
        %2374 = vmatpush1.bf16.msra.mxu0 %v2218
        %2375 = vmatprep.subr.bf16.mxu0 0
        %2376 = vmatpush1.bf16.msra.mxu0 0
        %2377 = vmatprep.subr.bf16.mxu0 0
        %2378 = vmatpush1.bf16.msra.mxu0 0
        %2379 = vmatprep.subr.bf16.mxu0 0
        %2380 = vmatpush1.bf16.msra.mxu0 0
        %2381 = vmatprep.subr.bf16.mxu0 0
        %2382 = vmatpush1.bf16.msra.mxu0 0
        %2383 = vmatprep.subr.bf16.mxu0 0
        %2384 = vmatpush1.bf16.msra.mxu0 0
        %2385 = vmatprep.subr.bf16.mxu0 0
        %2386 = vmatpush1.bf16.msra.mxu0 0
        %2387 = vmatprep.subr.bf16.mxu0 0
        %2388 = vmatpush1.bf16.msra.mxu0 0
        %2389 = vmatprep.subr.bf16.mxu0 0
        %2390 = vmatpush1.bf16.msra.mxu0 0
        %2391 = vmatprep.mubr.bf16.mxu0 0
        %2392 = vmatmul.mubr.bf16.gmra.mrb[0].mxu0 %v1923
        %v2393 = vpop.f32.mrb[0].mxu0
        %v2394 = vadd.f32 0.0, %v2393
        %v2395 = vpop.f32.mrb[0].mxu0
        %v2396 = vadd.f32 0.0, %v2395
        %v2397 = vpop.f32.mrb[0].mxu0
        %v2398 = vpop.f32.mrb[0].mxu0
        %2399 = vdwg.mxu0
        %2400 = vmatprep.subr.bf16.mxu0 0
        %2401 = vmatpush1.bf16.msra.mxu0 %v2171
        %2402 = vmatprep.subr.bf16.mxu0 0
        %2403 = vmatpush1.bf16.msra.mxu0 %v2178
        %2404 = vmatprep.subr.bf16.mxu0 0
        %2405 = vmatpush1.bf16.msra.mxu0 %v2185
        %2406 = vmatprep.subr.bf16.mxu0 0
        %2407 = vmatpush1.bf16.msra.mxu0 %v2192
        %2408 = vmatprep.subr.bf16.mxu0 0
        %2409 = vmatpush1.bf16.msra.mxu0 %v2199
        %2410 = vmatprep.subr.bf16.mxu0 0
        %2411 = vmatpush1.bf16.msra.mxu0 %v2206
        %2412 = vmatprep.subr.bf16.mxu0 0
        %2413 = vmatpush1.bf16.msra.mxu0 %v2213
        %2414 = vmatprep.subr.bf16.mxu0 0
        %2415 = vmatpush1.bf16.msra.mxu0 %v2220
        %2416 = vmatprep.subr.bf16.mxu0 0
        %2417 = vmatpush1.bf16.msra.mxu0 0
        %2418 = vmatprep.subr.bf16.mxu0 0
        %2419 = vmatpush1.bf16.msra.mxu0 0
        %2420 = vmatprep.subr.bf16.mxu0 0
        %2421 = vmatpush1.bf16.msra.mxu0 0
        %2422 = vmatprep.subr.bf16.mxu0 0
        %2423 = vmatpush1.bf16.msra.mxu0 0
        %2424 = vmatprep.subr.bf16.mxu0 0
        %2425 = vmatpush1.bf16.msra.mxu0 0
        %2426 = vmatprep.subr.bf16.mxu0 0
        %2427 = vmatpush1.bf16.msra.mxu0 0
        %2428 = vmatprep.subr.bf16.mxu0 0
        %2429 = vmatpush1.bf16.msra.mxu0 0
        %2430 = vmatprep.subr.bf16.mxu0 0
        %2431 = vmatpush1.bf16.msra.mxu0 0
        %2432 = vmatprep.mubr.bf16.mxu0 0
        %2433 = vmatmul.mubr.bf16.gmra.mrb[0].mxu0 %v1923
        %v2434 = vpop.f32.mrb[0].mxu0
        %v2435 = vadd.f32 0.0, %v2434
        %v2436 = vpop.f32.mrb[0].mxu0
        %v2437 = vpop.f32.mrb[0].mxu0
        %v2438 = vpop.f32.mrb[0].mxu0
        %2439 = vdwg.mxu0
        %v2440 = vadd.f32 %v1914, %v2312
        %v2441 = vadd.f32 %v1915, %v2314
        %v2442 = vadd.f32 %v1916, %v2353
        %v2443 = vadd.f32 %v1917, %v2355
        %v2444 = vadd.f32 %v1918, %v2394
        %v2445 = vadd.f32 %v1919, %v2396
        %v2446 = vadd.f32 %v1920, %v2435
        %v2447 = vld [vmem:[%s2] sm:$0xff]
        %v2449 = vlaneseq
        %v2450 = vshrl.u32 %v2449, 7
        %v2451 = vsub.s32 0, %v2450
        %v2452 = vrot.slane %v2447, %v2451
        %v2453 = vlaneseq
        %v2454 = vshrl.u32 %v2453, 7
        %v2455 = vsub.s32 1, %v2454
        %v2456 = vrot.slane %v2447, %v2455
        %v2457 = vlaneseq
        %v2458 = vshrl.u32 %v2457, 7
        %v2459 = vsub.s32 2, %v2458
        %v2460 = vrot.slane %v2447, %v2459
        %v2461 = vlaneseq
        %v2462 = vshrl.u32 %v2461, 7
        %v2463 = vsub.s32 3, %v2462
        %v2464 = vrot.slane %v2447, %v2463
        %v2465 = vlaneseq
        %v2466 = vshrl.u32 %v2465, 7
        %v2467 = vsub.s32 4, %v2466
        %v2468 = vrot.slane %v2447, %v2467
        %v2469 = vlaneseq
        %v2470 = vshrl.u32 %v2469, 7
        %v2471 = vsub.s32 5, %v2470
        %v2472 = vrot.slane %v2447, %v2471
        %v2473 = vlaneseq
        %v2474 = vshrl.u32 %v2473, 7
        %v2475 = vsub.s32 6, %v2474
        %v2476 = vrot.slane %v2447, %v2475
        %v2484 = vadd.f32 %v2440, %v2452
        %v2485 = vadd.f32 %v2441, %v2456
        %v2486 = vadd.f32 %v2442, %v2460
        %v2487 = vadd.f32 %v2443, %v2464
        %v2488 = vadd.f32 %v2444, %v2468
        %v2489 = vadd.f32 %v2445, %v2472
        %v2490 = vadd.f32 %v2446, %v2476
        %v2491 = vmax.f32 %v2484, 0.0
        %v2492 = vmax.f32 %v2485, 0.0
        %v2493 = vmax.f32 %v2486, 0.0
        %v2494 = vmax.f32 %v2487, 0.0
        %v2495 = vmax.f32 %v2488, 0.0
        %v2496 = vmax.f32 %v2489, 0.0
        %v2497 = vmax.f32 %v2490, 0.0
        %v2498 = vpack.c.bf16 %v2491, %v2491
        %v2499 = vpack.c.bf16 %v2492, %v2492
        %v2500 = vpack.c.bf16 %v2493, %v2493
        %v2501 = vpack.c.bf16 %v2494, %v2494
        %v2502 = vpack.c.bf16 %v2495, %v2495
        %v2503 = vpack.c.bf16 %v2496, %v2496
        %v2504 = vpack.c.bf16 %v2497, %v2497
        %v2505 = vld [vmem:[#allocation7] sm:$0xff]
        %v2506 = vld [vmem:[#allocation7 + $0x8] sm:$0xff]
        %v2507 = vld [vmem:[#allocation7 + $0x10] sm:$0xff]
        %v2508 = vld [vmem:[#allocation7 + $0x18] sm:$0xff]
        %v2509 = vld [vmem:[#allocation7 + $0x20] sm:$0xff]
        %v2510 = vld [vmem:[#allocation7 + $0x28] sm:$0xff]
        %v2511 = vld [vmem:[#allocation7 + $0x30] sm:$0xff]
        %v2512 = vld [vmem:[#allocation7 + $0x38] sm:$0xff]
        %v2513 = vld [vmem:[#allocation7 + $0x40] sm:$0xff]
        %v2514 = vld [vmem:[#allocation7 + $0x48] sm:$0xff]
        %v2515 = vld [vmem:[#allocation7 + $0x50] sm:$0xff]
        %v2516 = vld [vmem:[#allocation7 + $0x58] sm:$0xff]
        %v2517 = vld [vmem:[#allocation7 + $0x60] sm:$0xff]
        %v2518 = vld [vmem:[#allocation7 + $0x68] sm:$0xff]
        %v2519 = vld [vmem:[#allocation7 + $0x70] sm:$0xff]
        %v2520 = vld [vmem:[#allocation7 + $0x78] sm:$0xff]
        %v2521 = vld [vmem:[#allocation7 + $0x80] sm:$0xff]
        %v2522 = vld [vmem:[#allocation7 + $0x88] sm:$0xff]
        %v2523 = vld [vmem:[#allocation7 + $0x90] sm:$0xff]
        %v2524 = vld [vmem:[#allocation7 + $0x98] sm:$0xff]
        %v2525 = vld [vmem:[#allocation7 + $0xa0] sm:$0xff]
        %v2526 = vld [vmem:[#allocation7 + $0xa8] sm:$0xff]
        %v2527 = vld [vmem:[#allocation7 + $0xb0] sm:$0xff]
        %v2528 = vld [vmem:[#allocation7 + $0xb8] sm:$0xff]
        %v2529 = vld [vmem:[#allocation7 + $0xc0] sm:$0xff]
        %v2530 = vld [vmem:[#allocation7 + $0xc8] sm:$0xff]
        %v2531 = vld [vmem:[#allocation7 + $0xd0] sm:$0xff]
        %v2532 = vld [vmem:[#allocation7 + $0xd8] sm:$0xff]
        %v2533 = vld [vmem:[#allocation7 + $0xe0] sm:$0xff]
        %v2534 = vld [vmem:[#allocation7 + $0xe8] sm:$0xff]
        %v2535 = vld [vmem:[#allocation7 + $0xf0] sm:$0xff]
        %v2536 = vld [vmem:[#allocation7 + $0xf8] sm:$0xff]
        %v2537 = vld [vmem:[#allocation7 + $0x100] sm:$0xff]
        %v2538 = vld [vmem:[#allocation7 + $0x108] sm:$0xff]
        %v2539 = vld [vmem:[#allocation7 + $0x110] sm:$0xff]
        %v2540 = vld [vmem:[#allocation7 + $0x118] sm:$0xff]
        %v2541 = vld [vmem:[#allocation7 + $0x120] sm:$0xff]
        %v2542 = vld [vmem:[#allocation7 + $0x128] sm:$0xff]
        %v2543 = vld [vmem:[#allocation7 + $0x130] sm:$0xff]
        %v2544 = vld [vmem:[#allocation7 + $0x138] sm:$0xff]
        %v2545 = vld [vmem:[#allocation7 + $0x140] sm:$0xff]
        %v2546 = vld [vmem:[#allocation7 + $0x148] sm:$0xff]
        %v2547 = vld [vmem:[#allocation7 + $0x150] sm:$0xff]
        %v2548 = vld [vmem:[#allocation7 + $0x158] sm:$0xff]
        %v2549 = vld [vmem:[#allocation7 + $0x160] sm:$0xff]
        %v2550 = vld [vmem:[#allocation7 + $0x168] sm:$0xff]
        %v2551 = vld [vmem:[#allocation7 + $0x170] sm:$0xff]
        %v2552 = vld [vmem:[#allocation7 + $0x178] sm:$0xff]
        %v2553 = vld [vmem:[#allocation7 + $0x180] sm:$0xff]
        %v2554 = vld [vmem:[#allocation7 + $0x188] sm:$0xff]
        %v2555 = vld [vmem:[#allocation7 + $0x190] sm:$0xff]
        %v2556 = vld [vmem:[#allocation7 + $0x198] sm:$0xff]
        %v2557 = vld [vmem:[#allocation7 + $0x1a0] sm:$0xff]
        %v2558 = vld [vmem:[#allocation7 + $0x1a8] sm:$0xff]
        %v2559 = vld [vmem:[#allocation7 + $0x1b0] sm:$0xff]
        %v2560 = vld [vmem:[#allocation7 + $0x1b8] sm:$0xff]
        %v2561 = vld [vmem:[#allocation7 + $0x1c0] sm:$0xff]
        %v2562 = vld [vmem:[#allocation7 + $0x1c8] sm:$0xff]
        %v2563 = vld [vmem:[#allocation7 + $0x1d0] sm:$0xff]
        %v2564 = vld [vmem:[#allocation7 + $0x1d8] sm:$0xff]
        %v2565 = vld [vmem:[#allocation7 + $0x1e0] sm:$0xff]
        %v2566 = vld [vmem:[#allocation7 + $0x1e8] sm:$0xff]
        %v2567 = vld [vmem:[#allocation7 + $0x1f0] sm:$0xff]
        %v2568 = vld [vmem:[#allocation7 + $0x1f8] sm:$0xff]
        %v2569 = vld [vmem:[#allocation7 + $0x200] sm:$0xff]
        %v2570 = vld [vmem:[#allocation7 + $0x208] sm:$0xff]
        %v2571 = vld [vmem:[#allocation7 + $0x210] sm:$0xff]
        %v2572 = vld [vmem:[#allocation7 + $0x218] sm:$0xff]
        %v2573 = vld [vmem:[#allocation7 + $0x220] sm:$0xff]
        %v2574 = vld [vmem:[#allocation7 + $0x228] sm:$0xff]
        %v2575 = vld [vmem:[#allocation7 + $0x230] sm:$0xff]
        %v2576 = vld [vmem:[#allocation7 + $0x238] sm:$0xff]
        %v2577 = vld [vmem:[#allocation7 + $0x240] sm:$0xff]
        %v2578 = vld [vmem:[#allocation7 + $0x248] sm:$0xff]
        %v2579 = vld [vmem:[#allocation7 + $0x250] sm:$0xff]
        %v2580 = vld [vmem:[#allocation7 + $0x258] sm:$0xff]
        %v2581 = vld [vmem:[#allocation7 + $0x260] sm:$0xff]
        %v2582 = vld [vmem:[#allocation7 + $0x268] sm:$0xff]
        %v2583 = vld [vmem:[#allocation7 + $0x270] sm:$0xff]
        %v2584 = vld [vmem:[#allocation7 + $0x278] sm:$0xff]
        %v2585 = vld [vmem:[#allocation7 + $0x280] sm:$0xff]
        %v2586 = vld [vmem:[#allocation7 + $0x288] sm:$0xff]
        %v2587 = vld [vmem:[#allocation7 + $0x290] sm:$0xff]
        %v2588 = vld [vmem:[#allocation7 + $0x298] sm:$0xff]
        %v2589 = vld [vmem:[#allocation7 + $0x2a0] sm:$0xff]
        %v2590 = vld [vmem:[#allocation7 + $0x2a8] sm:$0xff]
        %v2591 = vld [vmem:[#allocation7 + $0x2b0] sm:$0xff]
        %v2592 = vld [vmem:[#allocation7 + $0x2b8] sm:$0xff]
        %v2593 = vld [vmem:[#allocation7 + $0x2c0] sm:$0xff]
        %v2594 = vld [vmem:[#allocation7 + $0x2c8] sm:$0xff]
        %v2595 = vld [vmem:[#allocation7 + $0x2d0] sm:$0xff]
        %v2596 = vld [vmem:[#allocation7 + $0x2d8] sm:$0xff]
        %v2597 = vld [vmem:[#allocation7 + $0x2e0] sm:$0xff]
        %v2598 = vld [vmem:[#allocation7 + $0x2e8] sm:$0xff]
        %v2599 = vld [vmem:[#allocation7 + $0x2f0] sm:$0xff]
        %v2600 = vld [vmem:[#allocation7 + $0x2f8] sm:$0xff]
        %v2601 = vld [vmem:[#allocation7 + $0x300] sm:$0xff]
        %v2602 = vld [vmem:[#allocation7 + $0x308] sm:$0xff]
        %v2603 = vld [vmem:[#allocation7 + $0x310] sm:$0xff]
        %v2604 = vld [vmem:[#allocation7 + $0x318] sm:$0xff]
        %v2605 = vld [vmem:[#allocation7 + $0x320] sm:$0xff]
        %v2606 = vld [vmem:[#allocation7 + $0x328] sm:$0xff]
        %v2607 = vld [vmem:[#allocation7 + $0x330] sm:$0xff]
        %v2608 = vld [vmem:[#allocation7 + $0x338] sm:$0xff]
        %v2609 = vld [vmem:[#allocation7 + $0x340] sm:$0xff]
        %v2610 = vld [vmem:[#allocation7 + $0x348] sm:$0xff]
        %v2611 = vld [vmem:[#allocation7 + $0x350] sm:$0xff]
        %v2612 = vld [vmem:[#allocation7 + $0x358] sm:$0xff]
        %v2613 = vld [vmem:[#allocation7 + $0x360] sm:$0xff]
        %v2614 = vld [vmem:[#allocation7 + $0x368] sm:$0xff]
        %v2615 = vld [vmem:[#allocation7 + $0x370] sm:$0xff]
        %v2616 = vld [vmem:[#allocation7 + $0x378] sm:$0xff]
        %v2617 = vld [vmem:[%s4] sm:$0x3]
        %v2619 = vlaneseq
        %v2620 = vshrl.u32 %v2619, 7
        %v2621 = vsub.s32 0, %v2620
        %v2622 = vrot.slane %v2617, %v2621
        %v2623 = vlaneseq
        %v2624 = vshrl.u32 %v2623, 7
        %v2625 = vsub.s32 1, %v2624
        %v2626 = vrot.slane %v2617, %v2625
        %v2741 = vunpack.c.l.b16 %v2505
        %v2742 = vunpack.c.h.b16 %v2505
        %v2743 = vunpack.c.l.b16 %v2506
        %v2744 = vunpack.c.h.b16 %v2506
        %v2745 = vunpack.c.l.b16 %v2507
        %v2746 = vunpack.c.h.b16 %v2507
        %v2747 = vunpack.c.l.b16 %v2508
        %v2748 = vunpack.c.h.b16 %v2508
        %v2749 = vunpack.c.l.b16 %v2509
        %v2750 = vunpack.c.h.b16 %v2509
        %v2751 = vunpack.c.l.b16 %v2510
        %v2752 = vunpack.c.h.b16 %v2510
        %v2753 = vunpack.c.l.b16 %v2511
        %v2754 = vunpack.c.h.b16 %v2511
        %v2755 = vunpack.c.l.b16 %v2512
        %v2756 = vunpack.c.h.b16 %v2512
        %v2757 = vunpack.c.l.b16 %v2513
        %v2758 = vunpack.c.h.b16 %v2513
        %v2759 = vunpack.c.l.b16 %v2514
        %v2760 = vunpack.c.h.b16 %v2514
        %v2761 = vunpack.c.l.b16 %v2515
        %v2762 = vunpack.c.h.b16 %v2515
        %v2763 = vunpack.c.l.b16 %v2516
        %v2764 = vunpack.c.h.b16 %v2516
        %v2765 = vunpack.c.l.b16 %v2517
        %v2766 = vunpack.c.h.b16 %v2517
        %v2767 = vunpack.c.l.b16 %v2518
        %v2768 = vunpack.c.h.b16 %v2518
        %v2769 = vunpack.c.l.b16 %v2519
        %v2770 = vunpack.c.h.b16 %v2519
        %v2771 = vunpack.c.l.b16 %v2520
        %v2772 = vunpack.c.h.b16 %v2520
        %v2773 = vunpack.c.l.b16 %v2521
        %v2774 = vunpack.c.h.b16 %v2521
        %v2775 = vunpack.c.l.b16 %v2522
        %v2776 = vunpack.c.h.b16 %v2522
        %v2777 = vunpack.c.l.b16 %v2523
        %v2778 = vunpack.c.h.b16 %v2523
        %v2779 = vunpack.c.l.b16 %v2524
        %v2780 = vunpack.c.h.b16 %v2524
        %v2781 = vunpack.c.l.b16 %v2525
        %v2782 = vunpack.c.h.b16 %v2525
        %v2783 = vunpack.c.l.b16 %v2526
        %v2784 = vunpack.c.h.b16 %v2526
        %v2785 = vunpack.c.l.b16 %v2527
        %v2786 = vunpack.c.h.b16 %v2527
        %v2787 = vunpack.c.l.b16 %v2528
        %v2788 = vunpack.c.h.b16 %v2528
        %v2789 = vunpack.c.l.b16 %v2529
        %v2790 = vunpack.c.h.b16 %v2529
        %v2791 = vunpack.c.l.b16 %v2530
        %v2792 = vunpack.c.h.b16 %v2530
        %v2793 = vunpack.c.l.b16 %v2531
        %v2794 = vunpack.c.h.b16 %v2531
        %v2795 = vunpack.c.l.b16 %v2532
        %v2796 = vunpack.c.h.b16 %v2532
        %v2797 = vunpack.c.l.b16 %v2533
        %v2798 = vunpack.c.h.b16 %v2533
        %v2799 = vunpack.c.l.b16 %v2534
        %v2800 = vunpack.c.h.b16 %v2534
        %v2801 = vunpack.c.l.b16 %v2535
        %v2802 = vunpack.c.h.b16 %v2535
        %v2803 = vunpack.c.l.b16 %v2536
        %v2804 = vunpack.c.h.b16 %v2536
        %v2805 = vunpack.c.l.b16 %v2537
        %v2806 = vunpack.c.h.b16 %v2537
        %v2807 = vunpack.c.l.b16 %v2538
        %v2808 = vunpack.c.h.b16 %v2538
        %v2809 = vunpack.c.l.b16 %v2539
        %v2810 = vunpack.c.h.b16 %v2539
        %v2811 = vunpack.c.l.b16 %v2540
        %v2812 = vunpack.c.h.b16 %v2540
        %v2813 = vunpack.c.l.b16 %v2541
        %v2814 = vunpack.c.h.b16 %v2541
        %v2815 = vunpack.c.l.b16 %v2542
        %v2816 = vunpack.c.h.b16 %v2542
        %v2817 = vunpack.c.l.b16 %v2543
        %v2818 = vunpack.c.h.b16 %v2543
        %v2819 = vunpack.c.l.b16 %v2544
        %v2820 = vunpack.c.h.b16 %v2544
        %v2821 = vunpack.c.l.b16 %v2545
        %v2822 = vunpack.c.h.b16 %v2545
        %v2823 = vunpack.c.l.b16 %v2546
        %v2824 = vunpack.c.h.b16 %v2546
        %v2825 = vunpack.c.l.b16 %v2547
        %v2826 = vunpack.c.h.b16 %v2547
        %v2827 = vunpack.c.l.b16 %v2548
        %v2828 = vunpack.c.h.b16 %v2548
        %v2829 = vunpack.c.l.b16 %v2549
        %v2830 = vunpack.c.h.b16 %v2549
        %v2831 = vunpack.c.l.b16 %v2550
        %v2832 = vunpack.c.h.b16 %v2550
        %v2833 = vunpack.c.l.b16 %v2551
        %v2834 = vunpack.c.h.b16 %v2551
        %v2835 = vunpack.c.l.b16 %v2552
        %v2836 = vunpack.c.h.b16 %v2552
        %v2837 = vunpack.c.l.b16 %v2553
        %v2838 = vunpack.c.h.b16 %v2553
        %v2839 = vunpack.c.l.b16 %v2554
        %v2840 = vunpack.c.h.b16 %v2554
        %v2841 = vunpack.c.l.b16 %v2555
        %v2842 = vunpack.c.h.b16 %v2555
        %v2843 = vunpack.c.l.b16 %v2556
        %v2844 = vunpack.c.h.b16 %v2556
        %v2845 = vunpack.c.l.b16 %v2557
        %v2846 = vunpack.c.h.b16 %v2557
        %v2847 = vunpack.c.l.b16 %v2558
        %v2848 = vunpack.c.h.b16 %v2558
        %v2849 = vunpack.c.l.b16 %v2559
        %v2850 = vunpack.c.h.b16 %v2559
        %v2851 = vunpack.c.l.b16 %v2560
        %v2852 = vunpack.c.h.b16 %v2560
        %v2853 = vunpack.c.l.b16 %v2561
        %v2854 = vunpack.c.h.b16 %v2561
        %v2855 = vunpack.c.l.b16 %v2562
        %v2856 = vunpack.c.h.b16 %v2562
        %v2857 = vunpack.c.l.b16 %v2563
        %v2858 = vunpack.c.h.b16 %v2563
        %v2859 = vunpack.c.l.b16 %v2564
        %v2860 = vunpack.c.h.b16 %v2564
        %v2861 = vunpack.c.l.b16 %v2565
        %v2862 = vunpack.c.h.b16 %v2565
        %v2863 = vunpack.c.l.b16 %v2566
        %v2864 = vunpack.c.h.b16 %v2566
        %v2865 = vunpack.c.l.b16 %v2567
        %v2866 = vunpack.c.h.b16 %v2567
        %v2867 = vunpack.c.l.b16 %v2568
        %v2868 = vunpack.c.h.b16 %v2568
        %v2869 = vunpack.c.l.b16 %v2569
        %v2870 = vunpack.c.h.b16 %v2569
        %v2871 = vunpack.c.l.b16 %v2570
        %v2872 = vunpack.c.h.b16 %v2570
        %v2873 = vunpack.c.l.b16 %v2571
        %v2874 = vunpack.c.h.b16 %v2571
        %v2875 = vunpack.c.l.b16 %v2572
        %v2876 = vunpack.c.h.b16 %v2572
        %v2877 = vunpack.c.l.b16 %v2573
        %v2878 = vunpack.c.h.b16 %v2573
        %v2879 = vunpack.c.l.b16 %v2574
        %v2880 = vunpack.c.h.b16 %v2574
        %v2881 = vunpack.c.l.b16 %v2575
        %v2882 = vunpack.c.h.b16 %v2575
        %v2883 = vunpack.c.l.b16 %v2576
        %v2884 = vunpack.c.h.b16 %v2576
        %v2885 = vunpack.c.l.b16 %v2577
        %v2886 = vunpack.c.h.b16 %v2577
        %v2887 = vunpack.c.l.b16 %v2578
        %v2888 = vunpack.c.h.b16 %v2578
        %v2889 = vunpack.c.l.b16 %v2579
        %v2890 = vunpack.c.h.b16 %v2579
        %v2891 = vunpack.c.l.b16 %v2580
        %v2892 = vunpack.c.h.b16 %v2580
        %v2893 = vunpack.c.l.b16 %v2581
        %v2894 = vunpack.c.h.b16 %v2581
        %v2895 = vunpack.c.l.b16 %v2582
        %v2896 = vunpack.c.h.b16 %v2582
        %v2897 = vunpack.c.l.b16 %v2583
        %v2898 = vunpack.c.h.b16 %v2583
        %v2899 = vunpack.c.l.b16 %v2584
        %v2900 = vunpack.c.h.b16 %v2584
        %v2901 = vunpack.c.l.b16 %v2585
        %v2902 = vunpack.c.h.b16 %v2585
        %v2903 = vunpack.c.l.b16 %v2586
        %v2904 = vunpack.c.h.b16 %v2586
        %v2905 = vunpack.c.l.b16 %v2587
        %v2906 = vunpack.c.h.b16 %v2587
        %v2907 = vunpack.c.l.b16 %v2588
        %v2908 = vunpack.c.h.b16 %v2588
        %v2909 = vunpack.c.l.b16 %v2589
        %v2910 = vunpack.c.h.b16 %v2589
        %v2911 = vunpack.c.l.b16 %v2590
        %v2912 = vunpack.c.h.b16 %v2590
        %v2913 = vunpack.c.l.b16 %v2591
        %v2914 = vunpack.c.h.b16 %v2591
        %v2915 = vunpack.c.l.b16 %v2592
        %v2916 = vunpack.c.h.b16 %v2592
        %v2917 = vunpack.c.l.b16 %v2593
        %v2918 = vunpack.c.h.b16 %v2593
        %v2919 = vunpack.c.l.b16 %v2594
        %v2920 = vunpack.c.h.b16 %v2594
        %v2921 = vunpack.c.l.b16 %v2595
        %v2922 = vunpack.c.h.b16 %v2595
        %v2923 = vunpack.c.l.b16 %v2596
        %v2924 = vunpack.c.h.b16 %v2596
        %v2925 = vunpack.c.l.b16 %v2597
        %v2926 = vunpack.c.h.b16 %v2597
        %v2927 = vunpack.c.l.b16 %v2598
        %v2928 = vunpack.c.h.b16 %v2598
        %v2929 = vunpack.c.l.b16 %v2599
        %v2930 = vunpack.c.h.b16 %v2599
        %v2931 = vunpack.c.l.b16 %v2600
        %v2932 = vunpack.c.h.b16 %v2600
        %v2933 = vunpack.c.l.b16 %v2601
        %v2934 = vunpack.c.h.b16 %v2601
        %v2935 = vunpack.c.l.b16 %v2602
        %v2936 = vunpack.c.h.b16 %v2602
        %v2937 = vunpack.c.l.b16 %v2603
        %v2938 = vunpack.c.h.b16 %v2603
        %v2939 = vunpack.c.l.b16 %v2604
        %v2940 = vunpack.c.h.b16 %v2604
        %v2941 = vunpack.c.l.b16 %v2605
        %v2942 = vunpack.c.h.b16 %v2605
        %v2943 = vunpack.c.l.b16 %v2606
        %v2944 = vunpack.c.h.b16 %v2606
        %v2945 = vunpack.c.l.b16 %v2607
        %v2946 = vunpack.c.h.b16 %v2607
        %v2947 = vunpack.c.l.b16 %v2608
        %v2948 = vunpack.c.h.b16 %v2608
        %v2949 = vunpack.c.l.b16 %v2609
        %v2950 = vunpack.c.h.b16 %v2609
        %v2951 = vunpack.c.l.b16 %v2610
        %v2952 = vunpack.c.h.b16 %v2610
        %v2953 = vunpack.c.l.b16 %v2611
        %v2954 = vunpack.c.h.b16 %v2611
        %v2955 = vunpack.c.l.b16 %v2612
        %v2956 = vunpack.c.h.b16 %v2612
        %v2957 = vunpack.c.l.b16 %v2613
        %v2958 = vunpack.c.h.b16 %v2613
        %v2959 = vunpack.c.l.b16 %v2614
        %v2960 = vunpack.c.h.b16 %v2614
        %v2961 = vunpack.c.l.b16 %v2615
        %v2962 = vunpack.c.h.b16 %v2615
        %v2963 = vunpack.c.l.b16 %v2616
        %v2964 = vunpack.c.h.b16 %v2616
        %v2965 = vpack.c.b16 %v2743, %v2741
        %v2966 = vpack.c.b16 %v2744, %v2742
        %v2967 = vpack.c.b16 %v2747, %v2745
        %v2968 = vpack.c.b16 %v2748, %v2746
        %v2969 = vpack.c.b16 %v2751, %v2749
        %v2970 = vpack.c.b16 %v2752, %v2750
        %v2971 = vpack.c.b16 %v2755, %v2753
        %v2972 = vpack.c.b16 %v2756, %v2754
        %v2973 = vpack.c.b16 %v2759, %v2757
        %v2974 = vpack.c.b16 %v2760, %v2758
        %v2975 = vpack.c.b16 %v2763, %v2761
        %v2976 = vpack.c.b16 %v2764, %v2762
        %v2977 = vpack.c.b16 %v2767, %v2765
        %v2978 = vpack.c.b16 %v2768, %v2766
        %v2979 = vpack.c.b16 %v2771, %v2769
        %v2980 = vpack.c.b16 %v2772, %v2770
        %v2981 = vpack.c.b16 %v2775, %v2773
        %v2982 = vpack.c.b16 %v2776, %v2774
        %v2983 = vpack.c.b16 %v2779, %v2777
        %v2984 = vpack.c.b16 %v2780, %v2778
        %v2985 = vpack.c.b16 %v2783, %v2781
        %v2986 = vpack.c.b16 %v2784, %v2782
        %v2987 = vpack.c.b16 %v2787, %v2785
        %v2988 = vpack.c.b16 %v2788, %v2786
        %v2989 = vpack.c.b16 %v2791, %v2789
        %v2990 = vpack.c.b16 %v2792, %v2790
        %v2991 = vpack.c.b16 %v2795, %v2793
        %v2992 = vpack.c.b16 %v2796, %v2794
        %v2993 = vpack.c.b16 %v2799, %v2797
        %v2994 = vpack.c.b16 %v2800, %v2798
        %v2995 = vpack.c.b16 %v2803, %v2801
        %v2996 = vpack.c.b16 %v2804, %v2802
        %v2997 = vpack.c.b16 %v2807, %v2805
        %v2998 = vpack.c.b16 %v2808, %v2806
        %v2999 = vpack.c.b16 %v2811, %v2809
        %v3000 = vpack.c.b16 %v2812, %v2810
        %v3001 = vpack.c.b16 %v2815, %v2813
        %v3002 = vpack.c.b16 %v2816, %v2814
        %v3003 = vpack.c.b16 %v2819, %v2817
        %v3004 = vpack.c.b16 %v2820, %v2818
        %v3005 = vpack.c.b16 %v2823, %v2821
        %v3006 = vpack.c.b16 %v2824, %v2822
        %v3007 = vpack.c.b16 %v2827, %v2825
        %v3008 = vpack.c.b16 %v2828, %v2826
        %v3009 = vpack.c.b16 %v2831, %v2829
        %v3010 = vpack.c.b16 %v2832, %v2830
        %v3011 = vpack.c.b16 %v2835, %v2833
        %v3012 = vpack.c.b16 %v2836, %v2834
        %v3013 = vpack.c.b16 %v2839, %v2837
        %v3014 = vpack.c.b16 %v2840, %v2838
        %v3015 = vpack.c.b16 %v2843, %v2841
        %v3016 = vpack.c.b16 %v2844, %v2842
        %v3017 = vpack.c.b16 %v2847, %v2845
        %v3018 = vpack.c.b16 %v2848, %v2846
        %v3019 = vpack.c.b16 %v2851, %v2849
        %v3020 = vpack.c.b16 %v2852, %v2850
        %v3021 = vpack.c.b16 %v2855, %v2853
        %v3022 = vpack.c.b16 %v2856, %v2854
        %v3023 = vpack.c.b16 %v2859, %v2857
        %v3024 = vpack.c.b16 %v2860, %v2858
        %v3025 = vpack.c.b16 %v2863, %v2861
        %v3026 = vpack.c.b16 %v2864, %v2862
        %v3027 = vpack.c.b16 %v2867, %v2865
        %v3028 = vpack.c.b16 %v2868, %v2866
        %v3029 = vpack.c.b16 %v2871, %v2869
        %v3030 = vpack.c.b16 %v2872, %v2870
        %v3031 = vpack.c.b16 %v2875, %v2873
        %v3032 = vpack.c.b16 %v2876, %v2874
        %v3033 = vpack.c.b16 %v2879, %v2877
        %v3034 = vpack.c.b16 %v2880, %v2878
        %v3035 = vpack.c.b16 %v2883, %v2881
        %v3036 = vpack.c.b16 %v2884, %v2882
        %v3037 = vpack.c.b16 %v2887, %v2885
        %v3038 = vpack.c.b16 %v2888, %v2886
        %v3039 = vpack.c.b16 %v2891, %v2889
        %v3040 = vpack.c.b16 %v2892, %v2890
        %v3041 = vpack.c.b16 %v2895, %v2893
        %v3042 = vpack.c.b16 %v2896, %v2894
        %v3043 = vpack.c.b16 %v2899, %v2897
        %v3044 = vpack.c.b16 %v2900, %v2898
        %v3045 = vpack.c.b16 %v2903, %v2901
        %v3046 = vpack.c.b16 %v2904, %v2902
        %v3047 = vpack.c.b16 %v2907, %v2905
        %v3048 = vpack.c.b16 %v2908, %v2906
        %v3049 = vpack.c.b16 %v2911, %v2909
        %v3050 = vpack.c.b16 %v2912, %v2910
        %v3051 = vpack.c.b16 %v2915, %v2913
        %v3052 = vpack.c.b16 %v2916, %v2914
        %v3053 = vpack.c.b16 %v2919, %v2917
        %v3054 = vpack.c.b16 %v2920, %v2918
        %v3055 = vpack.c.b16 %v2923, %v2921
        %v3056 = vpack.c.b16 %v2924, %v2922
        %v3057 = vpack.c.b16 %v2927, %v2925
        %v3058 = vpack.c.b16 %v2928, %v2926
        %v3059 = vpack.c.b16 %v2931, %v2929
        %v3060 = vpack.c.b16 %v2932, %v2930
        %v3061 = vpack.c.b16 %v2935, %v2933
        %v3062 = vpack.c.b16 %v2936, %v2934
        %v3063 = vpack.c.b16 %v2939, %v2937
        %v3064 = vpack.c.b16 %v2940, %v2938
        %v3065 = vpack.c.b16 %v2943, %v2941
        %v3066 = vpack.c.b16 %v2944, %v2942
        %v3067 = vpack.c.b16 %v2947, %v2945
        %v3068 = vpack.c.b16 %v2948, %v2946
        %v3069 = vpack.c.b16 %v2951, %v2949
        %v3070 = vpack.c.b16 %v2952, %v2950
        %v3071 = vpack.c.b16 %v2955, %v2953
        %v3072 = vpack.c.b16 %v2956, %v2954
        %v3073 = vpack.c.b16 %v2959, %v2957
        %v3074 = vpack.c.b16 %v2960, %v2958
        %v3075 = vpack.c.b16 %v2963, %v2961
        %v3076 = vpack.c.b16 %v2964, %v2962
        %3189 = vmatprep.subr.bf16.mxu0 %v2966
        %3190 = vmatpush1.bf16.msra.mxu0 %v2965
        %3191 = vmatprep.subr.bf16.mxu0 %v2968
        %3192 = vmatpush1.bf16.msra.mxu0 %v2967
        %3193 = vmatprep.subr.bf16.mxu0 %v2970
        %3194 = vmatpush1.bf16.msra.mxu0 %v2969
        %3195 = vmatprep.subr.bf16.mxu0 %v2972
        %3196 = vmatpush1.bf16.msra.mxu0 %v2971
        %3197 = vmatprep.subr.bf16.mxu0 %v2974
        %3198 = vmatpush1.bf16.msra.mxu0 %v2973
        %3199 = vmatprep.subr.bf16.mxu0 %v2976
        %3200 = vmatpush1.bf16.msra.mxu0 %v2975
        %3201 = vmatprep.subr.bf16.mxu0 %v2978
        %3202 = vmatpush1.bf16.msra.mxu0 %v2977
        %3203 = vmatprep.subr.bf16.mxu0 %v2980
        %3204 = vmatpush1.bf16.msra.mxu0 %v2979
        %3205 = vmatprep.subr.bf16.mxu0 %v2982
        %3206 = vmatpush1.bf16.msra.mxu0 %v2981
        %3207 = vmatprep.subr.bf16.mxu0 %v2984
        %3208 = vmatpush1.bf16.msra.mxu0 %v2983
        %3209 = vmatprep.subr.bf16.mxu0 %v2986
        %3210 = vmatpush1.bf16.msra.mxu0 %v2985
        %3211 = vmatprep.subr.bf16.mxu0 %v2988
        %3212 = vmatpush1.bf16.msra.mxu0 %v2987
        %3213 = vmatprep.subr.bf16.mxu0 %v2990
        %3214 = vmatpush1.bf16.msra.mxu0 %v2989
        %3215 = vmatprep.subr.bf16.mxu0 %v2992
        %3216 = vmatpush1.bf16.msra.mxu0 %v2991
        %3217 = vmatprep.subr.bf16.mxu0 %v2994
        %3218 = vmatpush1.bf16.msra.mxu0 %v2993
        %3219 = vmatprep.subr.bf16.mxu0 %v2996
        %3220 = vmatpush1.bf16.msra.mxu0 %v2995
        %3221 = vmatprep.mubr.bf16.mxu0 %v2499
        %3222 = vmatmul.mubr.bf16.gmra.mrb[0].mxu0 %v2498
        %v3223 = vpop.f32.mrb[0].mxu0
        %v3224 = vadd.f32 %v2622, %v3223
        %v3225 = vpop.f32.mrb[0].mxu0
        %v3226 = vadd.f32 %v2626, %v3225
        %v3227 = vpop.f32.mrb[0].mxu0
        %v3228 = vpop.f32.mrb[0].mxu0
        %3229 = vdwg.mxu0
        %3230 = vmatprep.subr.bf16.mxu0 %v2998
        %3231 = vmatpush1.bf16.msra.mxu0 %v2997
        %3232 = vmatprep.subr.bf16.mxu0 %v3000
        %3233 = vmatpush1.bf16.msra.mxu0 %v2999
        %3234 = vmatprep.subr.bf16.mxu0 %v3002
        %3235 = vmatpush1.bf16.msra.mxu0 %v3001
        %3236 = vmatprep.subr.bf16.mxu0 %v3004
        %3237 = vmatpush1.bf16.msra.mxu0 %v3003
        %3238 = vmatprep.subr.bf16.mxu0 %v3006
        %3239 = vmatpush1.bf16.msra.mxu0 %v3005
        %3240 = vmatprep.subr.bf16.mxu0 %v3008
        %3241 = vmatpush1.bf16.msra.mxu0 %v3007
        %3242 = vmatprep.subr.bf16.mxu0 %v3010
        %3243 = vmatpush1.bf16.msra.mxu0 %v3009
        %3244 = vmatprep.subr.bf16.mxu0 %v3012
        %3245 = vmatpush1.bf16.msra.mxu0 %v3011
        %3246 = vmatprep.subr.bf16.mxu0 %v3014
        %3247 = vmatpush1.bf16.msra.mxu0 %v3013
        %3248 = vmatprep.subr.bf16.mxu0 %v3016
        %3249 = vmatpush1.bf16.msra.mxu0 %v3015
        %3250 = vmatprep.subr.bf16.mxu0 %v3018
        %3251 = vmatpush1.bf16.msra.mxu0 %v3017
        %3252 = vmatprep.subr.bf16.mxu0 %v3020
        %3253 = vmatpush1.bf16.msra.mxu0 %v3019
        %3254 = vmatprep.subr.bf16.mxu0 %v3022
        %3255 = vmatpush1.bf16.msra.mxu0 %v3021
        %3256 = vmatprep.subr.bf16.mxu0 %v3024
        %3257 = vmatpush1.bf16.msra.mxu0 %v3023
        %3258 = vmatprep.subr.bf16.mxu0 %v3026
        %3259 = vmatpush1.bf16.msra.mxu0 %v3025
        %3260 = vmatprep.subr.bf16.mxu0 %v3028
        %3261 = vmatpush1.bf16.msra.mxu0 %v3027
        %3262 = vmatprep.mubr.bf16.mxu0 %v2501
        %3263 = vmatmul.mubr.bf16.gmra.mrb[0].mxu0 %v2500
        %v3264 = vpop.f32.mrb[0].mxu0
        %v3265 = vadd.f32 %v3224, %v3264
        %v3266 = vpop.f32.mrb[0].mxu0
        %v3267 = vadd.f32 %v3226, %v3266
        %v3268 = vpop.f32.mrb[0].mxu0
        %v3269 = vpop.f32.mrb[0].mxu0
        %3270 = vdwg.mxu0
        %3271 = vmatprep.subr.bf16.mxu0 %v3030
        %3272 = vmatpush1.bf16.msra.mxu0 %v3029
        %3273 = vmatprep.subr.bf16.mxu0 %v3032
        %3274 = vmatpush1.bf16.msra.mxu0 %v3031
        %3275 = vmatprep.subr.bf16.mxu0 %v3034
        %3276 = vmatpush1.bf16.msra.mxu0 %v3033
        %3277 = vmatprep.subr.bf16.mxu0 %v3036
        %3278 = vmatpush1.bf16.msra.mxu0 %v3035
        %3279 = vmatprep.subr.bf16.mxu0 %v3038
        %3280 = vmatpush1.bf16.msra.mxu0 %v3037
        %3281 = vmatprep.subr.bf16.mxu0 %v3040
        %3282 = vmatpush1.bf16.msra.mxu0 %v3039
        %3283 = vmatprep.subr.bf16.mxu0 %v3042
        %3284 = vmatpush1.bf16.msra.mxu0 %v3041
        %3285 = vmatprep.subr.bf16.mxu0 %v3044
        %3286 = vmatpush1.bf16.msra.mxu0 %v3043
        %3287 = vmatprep.subr.bf16.mxu0 %v3046
        %3288 = vmatpush1.bf16.msra.mxu0 %v3045
        %3289 = vmatprep.subr.bf16.mxu0 %v3048
        %3290 = vmatpush1.bf16.msra.mxu0 %v3047
        %3291 = vmatprep.subr.bf16.mxu0 %v3050
        %3292 = vmatpush1.bf16.msra.mxu0 %v3049
        %3293 = vmatprep.subr.bf16.mxu0 %v3052
        %3294 = vmatpush1.bf16.msra.mxu0 %v3051
        %3295 = vmatprep.subr.bf16.mxu0 %v3054
        %3296 = vmatpush1.bf16.msra.mxu0 %v3053
        %3297 = vmatprep.subr.bf16.mxu0 %v3056
        %3298 = vmatpush1.bf16.msra.mxu0 %v3055
        %3299 = vmatprep.subr.bf16.mxu0 %v3058
        %3300 = vmatpush1.bf16.msra.mxu0 %v3057
        %3301 = vmatprep.subr.bf16.mxu0 %v3060
        %3302 = vmatpush1.bf16.msra.mxu0 %v3059
        %3303 = vmatprep.mubr.bf16.mxu0 %v2503
        %3304 = vmatmul.mubr.bf16.gmra.mrb[0].mxu0 %v2502
        %v3305 = vpop.f32.mrb[0].mxu0
        %v3306 = vadd.f32 %v3265, %v3305
        %v3307 = vpop.f32.mrb[0].mxu0
        %v3308 = vadd.f32 %v3267, %v3307
        %v3309 = vpop.f32.mrb[0].mxu0
        %v3310 = vpop.f32.mrb[0].mxu0
        %3311 = vdwg.mxu0
        %3312 = vmatprep.subr.bf16.mxu0 %v3062
        %3313 = vmatpush1.bf16.msra.mxu0 %v3061
        %3314 = vmatprep.subr.bf16.mxu0 %v3064
        %3315 = vmatpush1.bf16.msra.mxu0 %v3063
        %3316 = vmatprep.subr.bf16.mxu0 %v3066
        %3317 = vmatpush1.bf16.msra.mxu0 %v3065
        %3318 = vmatprep.subr.bf16.mxu0 %v3068
        %3319 = vmatpush1.bf16.msra.mxu0 %v3067
        %3320 = vmatprep.subr.bf16.mxu0 %v3070
        %3321 = vmatpush1.bf16.msra.mxu0 %v3069
        %3322 = vmatprep.subr.bf16.mxu0 %v3072
        %3323 = vmatpush1.bf16.msra.mxu0 %v3071
        %3324 = vmatprep.subr.bf16.mxu0 %v3074
        %3325 = vmatpush1.bf16.msra.mxu0 %v3073
        %3326 = vmatprep.subr.bf16.mxu0 %v3076
        %3327 = vmatpush1.bf16.msra.mxu0 %v3075
        %3328 = vmatprep.subr.bf16.mxu0 0
        %3329 = vmatpush1.bf16.msra.mxu0 0
        %3330 = vmatprep.subr.bf16.mxu0 0
        %3331 = vmatpush1.bf16.msra.mxu0 0
        %3332 = vmatprep.subr.bf16.mxu0 0
        %3333 = vmatpush1.bf16.msra.mxu0 0
        %3334 = vmatprep.subr.bf16.mxu0 0
        %3335 = vmatpush1.bf16.msra.mxu0 0
        %3336 = vmatprep.subr.bf16.mxu0 0
        %3337 = vmatpush1.bf16.msra.mxu0 0
        %3338 = vmatprep.subr.bf16.mxu0 0
        %3339 = vmatpush1.bf16.msra.mxu0 0
        %3340 = vmatprep.subr.bf16.mxu0 0
        %3341 = vmatpush1.bf16.msra.mxu0 0
        %3342 = vmatprep.subr.bf16.mxu0 0
        %3343 = vmatpush1.bf16.msra.mxu0 0
        %3344 = vmatprep.mubr.bf16.mxu0 0
        %3345 = vmatmul.mubr.bf16.gmra.mrb[0].mxu0 %v2504
        %v3346 = vpop.f32.mrb[0].mxu0
        %v3347 = vadd.f32 %v3306, %v3346
        %v3348 = vpop.f32.mrb[0].mxu0
        %v3349 = vadd.f32 %v3308, %v3348
        %v3350 = vpop.f32.mrb[0].mxu0
        %v3351 = vpop.f32.mrb[0].mxu0
        %3352 = vdwg.mxu0
        %v3353 = vmax.f32 %v3347, 0.0
        %v3354 = vmax.f32 %v3349, 0.0
        %v3355 = vpack.c.bf16 %v3353, %v3353
        %v3356 = vpack.c.bf16 %v3354, %v3354
        %v3357 = vld [vmem:[#allocation8] sm:$0xf]
        %v3358 = vld [vmem:[#allocation8 + $0x4] sm:$0xf]
        %v3359 = vld [vmem:[#allocation8 + $0x8] sm:$0xf]
        %v3360 = vld [vmem:[#allocation8 + $0xc] sm:$0xf]
        %v3361 = vld [vmem:[#allocation8 + $0x10] sm:$0xf]
        %v3362 = vld [vmem:[#allocation8 + $0x14] sm:$0xf]
        %v3363 = vld [vmem:[#allocation8 + $0x18] sm:$0xf]
        %v3364 = vld [vmem:[#allocation8 + $0x1c] sm:$0xf]
        %v3365 = vld [vmem:[#allocation8 + $0x20] sm:$0xf]
        %v3366 = vld [vmem:[#allocation8 + $0x24] sm:$0xf]
        %v3367 = vld [vmem:[#allocation8 + $0x28] sm:$0xf]
        %v3368 = vld [vmem:[#allocation8 + $0x2c] sm:$0xf]
        %v3369 = vld [vmem:[#allocation8 + $0x30] sm:$0xf]
        %v3370 = vld [vmem:[#allocation8 + $0x34] sm:$0xf]
        %v3371 = vld [vmem:[#allocation8 + $0x38] sm:$0xf]
        %v3372 = vld [vmem:[#allocation8 + $0x3c] sm:$0xf]
        %v3373 = vld [vmem:[#allocation8 + $0x40] sm:$0xf]
        %v3374 = vld [vmem:[#allocation8 + $0x44] sm:$0xf]
        %v3375 = vld [vmem:[#allocation8 + $0x48] sm:$0xf]
        %v3376 = vld [vmem:[#allocation8 + $0x4c] sm:$0xf]
        %v3377 = vld [vmem:[#allocation8 + $0x50] sm:$0xf]
        %v3378 = vld [vmem:[#allocation8 + $0x54] sm:$0xf]
        %v3379 = vld [vmem:[#allocation8 + $0x58] sm:$0xf]
        %v3380 = vld [vmem:[#allocation8 + $0x5c] sm:$0xf]
        %v3381 = vld [vmem:[#allocation8 + $0x60] sm:$0xf]
        %v3382 = vld [vmem:[#allocation8 + $0x64] sm:$0xf]
        %v3383 = vld [vmem:[#allocation8 + $0x68] sm:$0xf]
        %v3384 = vld [vmem:[#allocation8 + $0x6c] sm:$0xf]
        %v3385 = vld [vmem:[#allocation8 + $0x70] sm:$0xf]
        %v3386 = vld [vmem:[#allocation8 + $0x74] sm:$0xf]
        %v3387 = vld [vmem:[#allocation8 + $0x78] sm:$0xf]
        %v3388 = vld [vmem:[#allocation8 + $0x7c] sm:$0xf]
        %v3389 = vld [vmem:[%s6] sm:$0x1]
        %v3391 = vlaneseq
        %v3392 = vshrl.u32 %v3391, 7
        %v3393 = vsub.s32 0, %v3392
        %v3394 = vrot.slane %v3389, %v3393
        %v3428 = vunpack.c.l.b16 %v3357
        %v3429 = vunpack.c.l.b16 %v3358
        %v3430 = vunpack.c.l.b16 %v3359
        %v3431 = vunpack.c.l.b16 %v3360
        %v3432 = vunpack.c.l.b16 %v3361
        %v3433 = vunpack.c.l.b16 %v3362
        %v3434 = vunpack.c.l.b16 %v3363
        %v3435 = vunpack.c.l.b16 %v3364
        %v3436 = vunpack.c.l.b16 %v3365
        %v3437 = vunpack.c.l.b16 %v3366
        %v3438 = vunpack.c.l.b16 %v3367
        %v3439 = vunpack.c.l.b16 %v3368
        %v3440 = vunpack.c.l.b16 %v3369
        %v3441 = vunpack.c.l.b16 %v3370
        %v3442 = vunpack.c.l.b16 %v3371
        %v3443 = vunpack.c.l.b16 %v3372
        %v3444 = vunpack.c.l.b16 %v3373
        %v3445 = vunpack.c.l.b16 %v3374
        %v3446 = vunpack.c.l.b16 %v3375
        %v3447 = vunpack.c.l.b16 %v3376
        %v3448 = vunpack.c.l.b16 %v3377
        %v3449 = vunpack.c.l.b16 %v3378
        %v3450 = vunpack.c.l.b16 %v3379
        %v3451 = vunpack.c.l.b16 %v3380
        %v3452 = vunpack.c.l.b16 %v3381
        %v3453 = vunpack.c.l.b16 %v3382
        %v3454 = vunpack.c.l.b16 %v3383
        %v3455 = vunpack.c.l.b16 %v3384
        %v3456 = vunpack.c.l.b16 %v3385
        %v3457 = vunpack.c.l.b16 %v3386
        %v3458 = vunpack.c.l.b16 %v3387
        %v3459 = vunpack.c.l.b16 %v3388
        %v3460 = vpack.c.b16 %v3429, %v3428
        %v3461 = vpack.c.b16 %v3431, %v3430
        %v3462 = vpack.c.b16 %v3433, %v3432
        %v3463 = vpack.c.b16 %v3435, %v3434
        %v3464 = vpack.c.b16 %v3437, %v3436
        %v3465 = vpack.c.b16 %v3439, %v3438
        %v3466 = vpack.c.b16 %v3441, %v3440
        %v3467 = vpack.c.b16 %v3443, %v3442
        %v3468 = vpack.c.b16 %v3445, %v3444
        %v3469 = vpack.c.b16 %v3447, %v3446
        %v3470 = vpack.c.b16 %v3449, %v3448
        %v3471 = vpack.c.b16 %v3451, %v3450
        %v3472 = vpack.c.b16 %v3453, %v3452
        %v3473 = vpack.c.b16 %v3455, %v3454
        %v3474 = vpack.c.b16 %v3457, %v3456
        %v3475 = vpack.c.b16 %v3459, %v3458
        %3492 = vmatprep.subr.bf16.mxu0 0
        %3493 = vmatpush1.bf16.msra.mxu0 %v3460
        %3494 = vmatprep.subr.bf16.mxu0 0
        %3495 = vmatpush1.bf16.msra.mxu0 %v3461
        %3496 = vmatprep.subr.bf16.mxu0 0
        %3497 = vmatpush1.bf16.msra.mxu0 %v3462
        %3498 = vmatprep.subr.bf16.mxu0 0
        %3499 = vmatpush1.bf16.msra.mxu0 %v3463
        %3500 = vmatprep.subr.bf16.mxu0 0
        %3501 = vmatpush1.bf16.msra.mxu0 %v3464
        %3502 = vmatprep.subr.bf16.mxu0 0
        %3503 = vmatpush1.bf16.msra.mxu0 %v3465
        %3504 = vmatprep.subr.bf16.mxu0 0
        %3505 = vmatpush1.bf16.msra.mxu0 %v3466
        %3506 = vmatprep.subr.bf16.mxu0 0
        %3507 = vmatpush1.bf16.msra.mxu0 %v3467
        %3508 = vmatprep.subr.bf16.mxu0 0
        %3509 = vmatpush1.bf16.msra.mxu0 %v3468
        %3510 = vmatprep.subr.bf16.mxu0 0
        %3511 = vmatpush1.bf16.msra.mxu0 %v3469
        %3512 = vmatprep.subr.bf16.mxu0 0
        %3513 = vmatpush1.bf16.msra.mxu0 %v3470
        %3514 = vmatprep.subr.bf16.mxu0 0
        %3515 = vmatpush1.bf16.msra.mxu0 %v3471
        %3516 = vmatprep.subr.bf16.mxu0 0
        %3517 = vmatpush1.bf16.msra.mxu0 %v3472
        %3518 = vmatprep.subr.bf16.mxu0 0
        %3519 = vmatpush1.bf16.msra.mxu0 %v3473
        %3520 = vmatprep.subr.bf16.mxu0 0
        %3521 = vmatpush1.bf16.msra.mxu0 %v3474
        %3522 = vmatprep.subr.bf16.mxu0 0
        %3523 = vmatpush1.bf16.msra.mxu0 %v3475
        %3524 = vmatprep.mubr.bf16.mxu0 %v3356
        %3525 = vmatmul.mubr.bf16.gmra.mrb[0].mxu0 %v3355
        %v3526 = vpop.f32.mrb[0].mxu0
        %v3527 = vadd.f32 %v3394, %v3526
        %v3528 = vpop.f32.mrb[0].mxu0
        %v3529 = vpop.f32.mrb[0].mxu0
        %v3530 = vpop.f32.mrb[0].mxu0
        %3531 = vdwg.mxu0
        %3532 = vst [vmem:[%s357] sm:$0xf] %v3527
        %s3533 = sand.u32 %s202, 1
        %s3534 = scalar_lea.sflag [#allocation4], %s3533
        %s3535 = sand.u32 %s202, 1
        %s3536 = smul.addr %s3535, 4
        %s3537 = scalar_lea.vmem [#allocation10], %s3536
        // Predicated region
        $region65: #{tpu_custom_call.1} parent=47 // pred_check
          %p3538 = pneg %p212
        $region66: #{tpu_custom_call.1} parent=47 // pred_check_branch
          %3540 = sbr.rel (%p3538) target = $region68
        $region67: #{tpu_custom_call.1} parent=47 // pred_region
          %s3542 = ssub.s32 64, 64
          %3543 = vsyncadd %s3534, %s3542
          %s3544 = sadd.s32 %s31, %s30
          %s3545 = smul.addr %s3544, 64
          %s3546 = scalar_lea.hbm %s7, %s3545
          %s3548 = sshll.u32 %s3537, 4
          %s3549 = int_to_ptr.vmem [resolvable:$true] %s3548
          %3551 = dma.vmem_to_hbm [thread:$0]  %s3549, 64, %s3546, %s3534
        $region68: #{tpu_custom_call.1} parent=47 // pred_fallthru
          _
      $region48: #{tpu_custom_call.1} parent=5 // pred_fallthru
        _
      %p3552 = scmp.le.s32.totalorder 2, %s21
      // Predicated region
      $region69: #{tpu_custom_call.1} parent=5 // pred_check
        %p3553 = pneg %p3552
      $region70: #{tpu_custom_call.1} parent=5 // pred_check_branch
        %3555 = sbr.rel (%p3553) target = $region72
      $region71: #{tpu_custom_call.1} parent=5 // pred_region
        %s3556 = ssub.s32 %s21, 2
        // Predicated region
        $region73: #{tpu_custom_call.1} parent=71 // pred_check
          %p3557 = pneg %p218
        $region74: #{tpu_custom_call.1} parent=71 // pred_check_branch
          %3559 = sbr.rel (%p3557) target = $region76
        $region75: #{tpu_custom_call.1} parent=71 // pred_region
          %s3560 = sand.u32 %s203, 1
          %s3561 = scalar_lea.sflag [#allocation4], %s3560
          %s3562 = sand.u32 %s203, 1
          %s3563 = smul.addr %s3562, 4
          %s3564 = scalar_lea.vmem [#allocation10], %s3563
          %3565 = dma.done %s3561, 64
        $region76: #{tpu_custom_call.1} parent=71 // pred_fallthru
          _
      $region72: #{tpu_custom_call.1} parent=5 // pred_fallthru
        _
    $region6: #{tpu_custom_call.1} parent=1 // loop_footer
      %s25 = sadd.s32 1, %s21
    $region7: #{tpu_custom_call.1} parent=1 // loop_footer_branch
      %20 = sbr.rel target = $region3
    $region8: #{tpu_custom_call.1} parent=1 // loop_exit
      _
    %3566 = vsyncpa [#allocation3], 1
    %s3567 = scalar_lea.sflag [#allocation3], 1
    %3568 = vsyncpa %s3567, 1
    %3569 = vsyncpa [#allocation6], 1
    %3570 = vsyncpa [#allocation9], 1
    %3571 = vsyncpa [#allocation4], 1
    %s3572 = scalar_lea.sflag [#allocation4], 1
    %3573 = vsyncpa %s3572, 1

</llo_original>
